<compile_context>
chip_gen: v7x
topology: tpu7x:2x2x1
jax: 0.10.0
libtpu: 0.0.40
codegen_flags: <defaults>
</compile_context>

<pallas_src>
import functools

import jax
import jax.numpy as jnp
from jax.experimental import pallas as pl
from jax.experimental.pallas import tpu as pltpu

# ---- small, module-consistent hyperparameters -------------------------------
VOCAB_SIZE = 65      # len(chars) for a tiny-shakespeare-like corpus
N_EMBD     = 64      # scaled-down n_embd (=384 in the original)
N_HEAD     = 4       # scaled-down n_head (=6)
N_LAYER    = 2       # scaled-down n_layer (=6)
BLOCK_SIZE = 16      # scaled-down block_size (=256)
HEAD_SIZE  = N_EMBD // N_HEAD
LN_EPS     = 1e-5    # nn.LayerNorm default
VOCAB_PAD  = 128     # lane-dense logits store (sliced back to VOCAB_SIZE outside)
NEG_INF    = -1e30   # finite "masked" value (avoids NaN propagation)


def _layernorm(x, g, b):
    mu = jnp.mean(x, axis=-1, keepdims=True)
    var = jnp.mean((x - mu) ** 2, axis=-1, keepdims=True)
    return (x - mu) * jax.lax.rsqrt(var + LN_EPS) * g + b


# ---- fully fused GPT forward kernel (all layers + ln_f + lm_head) ------------
def gpt_fused_kernel(x_ref,
                     ln1_g, ln1_b, wqkv, wp, bp,
                     ln2_g, ln2_b, w1, b1, w2, b2,
                     lnf_g, lnf_b, w_head, b_head,
                     o_ref, *, n_layer, n_head, head_size, batch, seq):
    xf = x_ref[...]                           # (B*T, C) f32, batch folded into M
    BT, C = xf.shape
    B, T, H, hs = batch, seq, n_head, head_size

    # 2-D additive causal mask bias, built once, shared by all layers/heads
    row = jax.lax.broadcasted_iota(jnp.int32, (T, T), 0)
    col = jax.lax.broadcasted_iota(jnp.int32, (T, T), 1)
    mask_bias = jnp.where(col <= row, 0.0, NEG_INF).astype(jnp.float32)  # (T, T)

    def split_heads(a):
        # (B*T, C) -> (B*H, T, hs) via static row/lane slices (no big broadcast)
        return jnp.stack(
            [a[b * T:(b + 1) * T, h * hs:(h + 1) * hs]
             for b in range(B) for h in range(H)], axis=0)

    for li in range(n_layer):
        # ---- self-attention branch on ln1(x) ----
        h1 = _layernorm(xf, ln1_g[li], ln1_b[li])                  # (BT, C) f32

        # one flat bf16 QKV matmul for all heads: (BT, C) @ (C, 3C)
        qkv = jnp.dot(h1.astype(jnp.bfloat16), wqkv[li],
                      preferred_element_type=jnp.float32)          # (BT, 3C) f32
        qkv16 = qkv.astype(jnp.bfloat16)
        q = qkv16[:, :C]                 # 64-lane aligned slices
        k = qkv16[:, C:2 * C]            # (1/sqrt(hs) pre-folded into W_q)
        v = qkv16[:, 2 * C:]

        qh = split_heads(q)                                        # (B*H, T, hs)
        kh = split_heads(k)
        vh = split_heads(v)

        s = jnp.einsum('gqd,gkd->gqk', qh, kh,
                       preferred_element_type=jnp.float32)         # (B*H, T, T)
        s = s + mask_bias[None, :, :]
        s = s - jnp.max(s, axis=-1, keepdims=True)
        e = jnp.exp(s)
        p = e * pl.reciprocal(jnp.sum(e, axis=-1, keepdims=True), approx=True)

        att = jnp.einsum('gqk,gkd->gqd', p.astype(jnp.bfloat16), vh,
                         preferred_element_type=jnp.float32)       # (B*H, T, hs)

        # repack (B*H, T, hs) -> (B*T, C): heads along lanes, batches along rows
        att_flat = jnp.concatenate(
            [jnp.concatenate([att[b * H + h] for h in range(H)], axis=-1)
             for b in range(B)], axis=0)                           # (BT, C) f32

        # one flat (C, C) output projection
        sa = jnp.dot(att_flat.astype(jnp.bfloat16), wp[li],
                     preferred_element_type=jnp.float32) + bp[li]
        xf = xf + sa

        # ---- feed-forward branch on ln2(x) ----
        h2 = _layernorm(xf, ln2_g[li], ln2_b[li])
        ff = jnp.maximum(
            jnp.dot(h2.astype(jnp.bfloat16), w1[li],
                    preferred_element_type=jnp.float32) + b1[li], 0.0)
        ff = jnp.dot(ff.astype(jnp.bfloat16), w2[li],
                     preferred_element_type=jnp.float32) + b2[li]
        xf = xf + ff

    # ---- final LayerNorm + lm_head (lane-padded to VOCAB_PAD = 128) ----
    hf = _layernorm(xf, lnf_g[...], lnf_b[...])
    o_ref[...] = (jnp.dot(hf.astype(jnp.bfloat16), w_head[...],
                          preferred_element_type=jnp.float32) + b_head[...])


WEIGHT_NAMES = ("ln1_g", "ln1_b", "wqkv", "wp", "bp",
                "ln2_g", "ln2_b", "w1", "b1", "w2", "b2",
                "lnf_g", "lnf_b", "w_head", "b_head")


def gpt_forward(params, idx):
    """Full forward (targets=None path): returns (logits, None)."""
    B, T = idx.shape
    C = N_EMBD

    # embedding lookup is plain-JAX glue; fold batch into the row dim
    tok_emb = jnp.take(params["tok_emb"], idx, axis=0)        # (B, T, C)
    pos_emb = params["pos_emb"][:T]                           # (T, C)
    x = (tok_emb + pos_emb[None, :, :]).astype(jnp.float32).reshape(B * T, C)

    weights = [params[name] for name in WEIGHT_NAMES]

    def const_spec(a):
        nd = a.ndim
        return pl.BlockSpec(a.shape, lambda i: (0,) * nd)    # VMEM-resident weights

    kern = functools.partial(gpt_fused_kernel, n_layer=N_LAYER, n_head=N_HEAD,
                             head_size=HEAD_SIZE, batch=B, seq=T)
    logits_pad = pl.pallas_call(
        kern,
        out_shape=jax.ShapeDtypeStruct((B * T, VOCAB_PAD), jnp.float32),
        grid=(1,),
        in_specs=[pl.BlockSpec((B * T, C), lambda i: (0, 0))]
                 + [const_spec(w) for w in weights],
        out_specs=pl.BlockSpec((B * T, VOCAB_PAD), lambda i: (0, 0)),
        compiler_params=pltpu.CompilerParams(
            dimension_semantics=("arbitrary",)),
    )(x, *weights)

    logits = logits_pad.reshape(B, T, VOCAB_PAD)[:, :, :VOCAB_SIZE]
    return logits, None


# ---- parameter initialization (matches _init_weights semantics) --------------
def init_params(key):
    def normal(k, shape):
        return 0.02 * jax.random.normal(k, shape, dtype=jnp.float32)

    keys = jax.random.split(key, 3 + N_LAYER)
    scale = float(HEAD_SIZE) ** -0.5

    # token / position embeddings + lm_head (padded to VOCAB_PAD lanes)
    w_head = normal(keys[2], (N_EMBD, VOCAB_SIZE))
    w_head = jnp.pad(w_head, ((0, 0), (0, VOCAB_PAD - VOCAB_SIZE)))
    params = {
        "tok_emb": normal(keys[0], (VOCAB_SIZE, N_EMBD)),
        "pos_emb": normal(keys[1], (BLOCK_SIZE, N_EMBD)),
        "lnf_g": jnp.ones((1, N_EMBD), jnp.float32),
        "lnf_b": jnp.zeros((1, N_EMBD), jnp.float32),
        "w_head": w_head.astype(jnp.bfloat16),
        "b_head": jnp.zeros((1, VOCAB_PAD), jnp.float32),
    }

    wqkv_l, wp_l, bp_l = [], [], []
    ln1g_l, ln1b_l, ln2g_l, ln2b_l = [], [], [], []
    w1_l, b1_l, w2_l, b2_l = [], [], [], []
    for li in range(N_LAYER):
        ks = jax.random.split(keys[3 + li], 6)
        # flat head-major q/k/v weights (C, C) each, stored [in, out];
        # fold 1/sqrt(head_size) into W_q so no in-kernel scale is needed
        wq = normal(ks[0], (N_EMBD, N_EMBD)) * scale
        wk = normal(ks[1], (N_EMBD, N_EMBD))
        wv = normal(ks[2], (N_EMBD, N_EMBD))
        wqkv_l.append(jnp.concatenate([wq, wk, wv], axis=-1))     # (C, 3C)
        wp_l.append(normal(ks[3], (N_EMBD, N_EMBD)))              # (H*hs, C)
        bp_l.append(jnp.zeros((1, N_EMBD), jnp.float32))
        ln1g_l.append(jnp.ones((1, N_EMBD), jnp.float32))
        ln1b_l.append(jnp.zeros((1, N_EMBD), jnp.float32))
        ln2g_l.append(jnp.ones((1, N_EMBD), jnp.float32))
        ln2b_l.append(jnp.zeros((1, N_EMBD), jnp.float32))
        w1_l.append(normal(ks[4], (N_EMBD, 4 * N_EMBD)))
        b1_l.append(jnp.zeros((1, 4 * N_EMBD), jnp.float32))
        w2_l.append(normal(ks[5], (4 * N_EMBD, N_EMBD)))
        b2_l.append(jnp.zeros((1, N_EMBD), jnp.float32))

    params.update({
        "ln1_g": jnp.stack(ln1g_l), "ln1_b": jnp.stack(ln1b_l),
        "wqkv": jnp.stack(wqkv_l).astype(jnp.bfloat16),
        "wp": jnp.stack(wp_l).astype(jnp.bfloat16),
        "bp": jnp.stack(bp_l),
        "ln2_g": jnp.stack(ln2g_l), "ln2_b": jnp.stack(ln2b_l),
        "w1": jnp.stack(w1_l).astype(jnp.bfloat16),
        "b1": jnp.stack(b1_l),
        "w2": jnp.stack(w2_l).astype(jnp.bfloat16),
        "b2": jnp.stack(b2_l),
    })
    return params


if __name__ == "__main__":
    key = jax.random.PRNGKey(0)
    pkey, ikey = jax.random.split(key)
    params = init_params(pkey)

    B, T = 2, BLOCK_SIZE
    idx = jax.random.randint(ikey, (B, T), 0, VOCAB_SIZE, dtype=jnp.int32)

    logits, loss = gpt_forward(params, idx)
    logits = jax.block_until_ready(logits)
    assert logits.shape == (B, T, VOCAB_SIZE)
    assert loss is None
    print("KERNEL_OK")
</pallas_src>

<mosaic_0001>
module attributes {stable_mosaic.version = 11 : i64} {
  func.func @gpt_fused_kernel(%arg0: i32, %arg1: memref<32x64xf32, #tpu.memory_space<vmem>>, %arg2: memref<2x1x64xf32, #tpu.memory_space<vmem>>, %arg3: memref<2x1x64xf32, #tpu.memory_space<vmem>>, %arg4: memref<2x64x192xbf16, #tpu.memory_space<vmem>>, %arg5: memref<2x64x64xbf16, #tpu.memory_space<vmem>>, %arg6: memref<2x1x64xf32, #tpu.memory_space<vmem>>, %arg7: memref<2x1x64xf32, #tpu.memory_space<vmem>>, %arg8: memref<2x1x64xf32, #tpu.memory_space<vmem>>, %arg9: memref<2x64x256xbf16, #tpu.memory_space<vmem>>, %arg10: memref<2x1x256xf32, #tpu.memory_space<vmem>>, %arg11: memref<2x256x64xbf16, #tpu.memory_space<vmem>>, %arg12: memref<2x1x64xf32, #tpu.memory_space<vmem>>, %arg13: memref<1x64xf32, #tpu.memory_space<vmem>>, %arg14: memref<1x64xf32, #tpu.memory_space<vmem>>, %arg15: memref<64x128xbf16, #tpu.memory_space<vmem>>, %arg16: memref<1x128xf32, #tpu.memory_space<vmem>>, %arg17: memref<32x128xf32, #tpu.memory_space<vmem>>) attributes {dimension_semantics = [#tpu.dimension_semantics<arbitrary>], iteration_bounds = array<i64: 1>, scalar_prefetch = 0 : i64, scratch_operands = 0 : i64, tpu.core_type = #tpu.core_type<tc>, window_params = [{pipeline_mode = #tpu.pipeline_mode<synchronous>, transform_indices = @transform_0, window_bounds = array<i64: 32, 64>}, {pipeline_mode = #tpu.pipeline_mode<synchronous>, transform_indices = @transform_1, window_bounds = array<i64: 2, 1, 64>}, {pipeline_mode = #tpu.pipeline_mode<synchronous>, transform_indices = @transform_2, window_bounds = array<i64: 2, 1, 64>}, {pipeline_mode = #tpu.pipeline_mode<synchronous>, transform_indices = @transform_3, window_bounds = array<i64: 2, 64, 192>}, {pipeline_mode = #tpu.pipeline_mode<synchronous>, transform_indices = @transform_4, window_bounds = array<i64: 2, 64, 64>}, {pipeline_mode = #tpu.pipeline_mode<synchronous>, transform_indices = @transform_5, window_bounds = array<i64: 2, 1, 64>}, {pipeline_mode = #tpu.pipeline_mode<synchronous>, transform_indices = @transform_6, window_bounds = array<i64: 2, 1, 64>}, {pipeline_mode = #tpu.pipeline_mode<synchronous>, transform_indices = @transform_7, window_bounds = array<i64: 2, 1, 64>}, {pipeline_mode = #tpu.pipeline_mode<synchronous>, transform_indices = @transform_8, window_bounds = array<i64: 2, 64, 256>}, {pipeline_mode = #tpu.pipeline_mode<synchronous>, transform_indices = @transform_9, window_bounds = array<i64: 2, 1, 256>}, {pipeline_mode = #tpu.pipeline_mode<synchronous>, transform_indices = @transform_10, window_bounds = array<i64: 2, 256, 64>}, {pipeline_mode = #tpu.pipeline_mode<synchronous>, transform_indices = @transform_11, window_bounds = array<i64: 2, 1, 64>}, {pipeline_mode = #tpu.pipeline_mode<synchronous>, transform_indices = @transform_12, window_bounds = array<i64: 1, 64>}, {pipeline_mode = #tpu.pipeline_mode<synchronous>, transform_indices = @transform_13, window_bounds = array<i64: 1, 64>}, {pipeline_mode = #tpu.pipeline_mode<synchronous>, transform_indices = @transform_14, window_bounds = array<i64: 64, 128>}, {pipeline_mode = #tpu.pipeline_mode<synchronous>, transform_indices = @transform_15, window_bounds = array<i64: 1, 128>}, {pipeline_mode = #tpu.pipeline_mode<synchronous>, transform_indices = @transform_16, window_bounds = array<i64: 32, 128>}]} {
    %c0 = arith.constant 0 : index
    %c0_0 = arith.constant 0 : index
    %0 = vector.load %arg1[%c0, %c0_0] : memref<32x64xf32, #tpu.memory_space<vmem>>, vector<32x64xf32>
    %1 = tpu.iota {dimensions = array<i32: 0>} : vector<16x16xi32>
    %2 = tpu.iota {dimensions = array<i32: 1>} : vector<16x16xi32>
    %3 = arith.cmpi sle, %2, %1 : vector<16x16xi32>
    %cst = arith.constant 0.000000e+00 : f32
    %cst_1 = arith.constant -1.000000e+30 : f32
    %4 = vector.broadcast %cst : f32 to vector<16x16xf32>
    %5 = vector.broadcast %cst_1 : f32 to vector<16x16xf32>
    %6 = arith.select %3, %4, %5 : vector<16x16xi1>, vector<16x16xf32>
    %c0_2 = arith.constant 0 : index
    %c0_3 = arith.constant 0 : index
    %c0_4 = arith.constant 0 : index
    %7 = vector.load %arg2[%c0_2, %c0_3, %c0_4] : memref<2x1x64xf32, #tpu.memory_space<vmem>>, vector<1x1x64xf32>
    %8 = vector.shape_cast %7 : vector<1x1x64xf32> to vector<1x64xf32>
    %c0_5 = arith.constant 0 : index
    %c0_6 = arith.constant 0 : index
    %c0_7 = arith.constant 0 : index
    %9 = vector.load %arg3[%c0_5, %c0_6, %c0_7] : memref<2x1x64xf32, #tpu.memory_space<vmem>>, vector<1x1x64xf32>
    %10 = vector.shape_cast %9 : vector<1x1x64xf32> to vector<1x64xf32>
    %cst_8 = arith.constant dense<0.000000e+00> : vector<32xf32>
    %11 = vector.multi_reduction <add>, %0, %cst_8 [1] : vector<32x64xf32> to vector<32xf32>
    %12 = vector.shape_cast %11 : vector<32xf32> to vector<32x1xf32>
    %cst_9 = arith.constant 6.400000e+01 : f32
    %13 = vector.broadcast %cst_9 : f32 to vector<32x1xf32>
    %14 = arith.divf %12, %13 : vector<32x1xf32>
    %15 = vector.broadcast %14 : vector<32x1xf32> to vector<32x64xf32>
    %16 = arith.subf %0, %15 : vector<32x64xf32>
    %17 = arith.mulf %16, %16 : vector<32x64xf32>
    %cst_10 = arith.constant dense<0.000000e+00> : vector<32xf32>
    %18 = vector.multi_reduction <add>, %17, %cst_10 [1] : vector<32x64xf32> to vector<32xf32>
    %19 = vector.shape_cast %18 : vector<32xf32> to vector<32x1xf32>
    %cst_11 = arith.constant 6.400000e+01 : f32
    %20 = vector.broadcast %cst_11 : f32 to vector<32x1xf32>
    %21 = arith.divf %19, %20 : vector<32x1xf32>
    %22 = vector.broadcast %14 : vector<32x1xf32> to vector<32x64xf32>
    %23 = arith.subf %0, %22 : vector<32x64xf32>
    %cst_12 = arith.constant 9.99999974E-6 : f32
    %24 = vector.broadcast %cst_12 : f32 to vector<32x1xf32>
    %25 = arith.addf %21, %24 : vector<32x1xf32>
    %26 = math.rsqrt %25 : vector<32x1xf32>
    %27 = vector.broadcast %26 : vector<32x1xf32> to vector<32x64xf32>
    %28 = arith.mulf %23, %27 : vector<32x64xf32>
    %29 = vector.broadcast %8 : vector<1x64xf32> to vector<32x64xf32>
    %30 = arith.mulf %28, %29 : vector<32x64xf32>
    %31 = vector.broadcast %10 : vector<1x64xf32> to vector<32x64xf32>
    %32 = arith.addf %30, %31 : vector<32x64xf32>
    %33 = arith.truncf %32 : vector<32x64xf32> to vector<32x64xbf16>
    %c0_13 = arith.constant 0 : index
    %c0_14 = arith.constant 0 : index
    %c0_15 = arith.constant 0 : index
    %34 = vector.load %arg4[%c0_13, %c0_14, %c0_15] : memref<2x64x192xbf16, #tpu.memory_space<vmem>>, vector<1x64x192xbf16>
    %35 = vector.shape_cast %34 : vector<1x64x192xbf16> to vector<64x192xbf16>
    %cst_16 = arith.constant dense<0.000000e+00> : vector<32x192xf32>
    %36 = tpu.matmul %33, %35, %cst_16 {dimension_numbers = #tpu.dot_dimension_numbers<[1], [0], [0], [1], [0, 0, 1, 1], [], []>} : vector<32x64xbf16>, vector<64x192xbf16>, vector<32x192xf32> -> vector<32x192xf32>
    %37 = arith.truncf %36 : vector<32x192xf32> to vector<32x192xbf16>
    %38 = vector.extract_strided_slice %37 {offsets = [0, 0], sizes = [32, 64], strides = [1, 1]} : vector<32x192xbf16> to vector<32x64xbf16>
    %39 = vector.extract_strided_slice %37 {offsets = [0, 64], sizes = [32, 64], strides = [1, 1]} : vector<32x192xbf16> to vector<32x64xbf16>
    %40 = vector.extract_strided_slice %37 {offsets = [0, 128], sizes = [32, 64], strides = [1, 1]} : vector<32x192xbf16> to vector<32x64xbf16>
    %41 = vector.extract_strided_slice %38 {offsets = [0, 0], sizes = [16, 16], strides = [1, 1]} : vector<32x64xbf16> to vector<16x16xbf16>
    %42 = vector.extract_strided_slice %38 {offsets = [0, 16], sizes = [16, 16], strides = [1, 1]} : vector<32x64xbf16> to vector<16x16xbf16>
    %43 = vector.extract_strided_slice %38 {offsets = [0, 32], sizes = [16, 16], strides = [1, 1]} : vector<32x64xbf16> to vector<16x16xbf16>
    %44 = vector.extract_strided_slice %38 {offsets = [0, 48], sizes = [16, 16], strides = [1, 1]} : vector<32x64xbf16> to vector<16x16xbf16>
    %45 = vector.extract_strided_slice %38 {offsets = [16, 0], sizes = [16, 16], strides = [1, 1]} : vector<32x64xbf16> to vector<16x16xbf16>
    %46 = vector.extract_strided_slice %38 {offsets = [16, 16], sizes = [16, 16], strides = [1, 1]} : vector<32x64xbf16> to vector<16x16xbf16>
    %47 = vector.extract_strided_slice %38 {offsets = [16, 32], sizes = [16, 16], strides = [1, 1]} : vector<32x64xbf16> to vector<16x16xbf16>
    %48 = vector.extract_strided_slice %38 {offsets = [16, 48], sizes = [16, 16], strides = [1, 1]} : vector<32x64xbf16> to vector<16x16xbf16>
    %49 = vector.shape_cast %41 : vector<16x16xbf16> to vector<1x16x16xbf16>
    %50 = vector.shape_cast %42 : vector<16x16xbf16> to vector<1x16x16xbf16>
    %51 = vector.shape_cast %43 : vector<16x16xbf16> to vector<1x16x16xbf16>
    %52 = vector.shape_cast %44 : vector<16x16xbf16> to vector<1x16x16xbf16>
    %53 = vector.shape_cast %45 : vector<16x16xbf16> to vector<1x16x16xbf16>
    %54 = vector.shape_cast %46 : vector<16x16xbf16> to vector<1x16x16xbf16>
    %55 = vector.shape_cast %47 : vector<16x16xbf16> to vector<1x16x16xbf16>
    %56 = vector.shape_cast %48 : vector<16x16xbf16> to vector<1x16x16xbf16>
    %57 = tpu.concatenate %49, %50, %51, %52, %53, %54, %55, %56 in 0 : vector<1x16x16xbf16>, vector<1x16x16xbf16>, vector<1x16x16xbf16>, vector<1x16x16xbf16>, vector<1x16x16xbf16>, vector<1x16x16xbf16>, vector<1x16x16xbf16>, vector<1x16x16xbf16> -> vector<8x16x16xbf16>
    %58 = vector.extract_strided_slice %39 {offsets = [0, 0], sizes = [16, 16], strides = [1, 1]} : vector<32x64xbf16> to vector<16x16xbf16>
    %59 = vector.extract_strided_slice %39 {offsets = [0, 16], sizes = [16, 16], strides = [1, 1]} : vector<32x64xbf16> to vector<16x16xbf16>
    %60 = vector.extract_strided_slice %39 {offsets = [0, 32], sizes = [16, 16], strides = [1, 1]} : vector<32x64xbf16> to vector<16x16xbf16>
    %61 = vector.extract_strided_slice %39 {offsets = [0, 48], sizes = [16, 16], strides = [1, 1]} : vector<32x64xbf16> to vector<16x16xbf16>
    %62 = vector.extract_strided_slice %39 {offsets = [16, 0], sizes = [16, 16], strides = [1, 1]} : vector<32x64xbf16> to vector<16x16xbf16>
    %63 = vector.extract_strided_slice %39 {offsets = [16, 16], sizes = [16, 16], strides = [1, 1]} : vector<32x64xbf16> to vector<16x16xbf16>
    %64 = vector.extract_strided_slice %39 {offsets = [16, 32], sizes = [16, 16], strides = [1, 1]} : vector<32x64xbf16> to vector<16x16xbf16>
    %65 = vector.extract_strided_slice %39 {offsets = [16, 48], sizes = [16, 16], strides = [1, 1]} : vector<32x64xbf16> to vector<16x16xbf16>
    %66 = vector.shape_cast %58 : vector<16x16xbf16> to vector<1x16x16xbf16>
    %67 = vector.shape_cast %59 : vector<16x16xbf16> to vector<1x16x16xbf16>
    %68 = vector.shape_cast %60 : vector<16x16xbf16> to vector<1x16x16xbf16>
    %69 = vector.shape_cast %61 : vector<16x16xbf16> to vector<1x16x16xbf16>
    %70 = vector.shape_cast %62 : vector<16x16xbf16> to vector<1x16x16xbf16>
    %71 = vector.shape_cast %63 : vector<16x16xbf16> to vector<1x16x16xbf16>
    %72 = vector.shape_cast %64 : vector<16x16xbf16> to vector<1x16x16xbf16>
    %73 = vector.shape_cast %65 : vector<16x16xbf16> to vector<1x16x16xbf16>
    %74 = tpu.concatenate %66, %67, %68, %69, %70, %71, %72, %73 in 0 : vector<1x16x16xbf16>, vector<1x16x16xbf16>, vector<1x16x16xbf16>, vector<1x16x16xbf16>, vector<1x16x16xbf16>, vector<1x16x16xbf16>, vector<1x16x16xbf16>, vector<1x16x16xbf16> -> vector<8x16x16xbf16>
    %75 = vector.extract_strided_slice %40 {offsets = [0, 0], sizes = [16, 16], strides = [1, 1]} : vector<32x64xbf16> to vector<16x16xbf16>
    %76 = vector.extract_strided_slice %40 {offsets = [0, 16], sizes = [16, 16], strides = [1, 1]} : vector<32x64xbf16> to vector<16x16xbf16>
    %77 = vector.extract_strided_slice %40 {offsets = [0, 32], sizes = [16, 16], strides = [1, 1]} : vector<32x64xbf16> to vector<16x16xbf16>
    %78 = vector.extract_strided_slice %40 {offsets = [0, 48], sizes = [16, 16], strides = [1, 1]} : vector<32x64xbf16> to vector<16x16xbf16>
    %79 = vector.extract_strided_slice %40 {offsets = [16, 0], sizes = [16, 16], strides = [1, 1]} : vector<32x64xbf16> to vector<16x16xbf16>
    %80 = vector.extract_strided_slice %40 {offsets = [16, 16], sizes = [16, 16], strides = [1, 1]} : vector<32x64xbf16> to vector<16x16xbf16>
    %81 = vector.extract_strided_slice %40 {offsets = [16, 32], sizes = [16, 16], strides = [1, 1]} : vector<32x64xbf16> to vector<16x16xbf16>
    %82 = vector.extract_strided_slice %40 {offsets = [16, 48], sizes = [16, 16], strides = [1, 1]} : vector<32x64xbf16> to vector<16x16xbf16>
    %83 = vector.shape_cast %75 : vector<16x16xbf16> to vector<1x16x16xbf16>
    %84 = vector.shape_cast %76 : vector<16x16xbf16> to vector<1x16x16xbf16>
    %85 = vector.shape_cast %77 : vector<16x16xbf16> to vector<1x16x16xbf16>
    %86 = vector.shape_cast %78 : vector<16x16xbf16> to vector<1x16x16xbf16>
    %87 = vector.shape_cast %79 : vector<16x16xbf16> to vector<1x16x16xbf16>
    %88 = vector.shape_cast %80 : vector<16x16xbf16> to vector<1x16x16xbf16>
    %89 = vector.shape_cast %81 : vector<16x16xbf16> to vector<1x16x16xbf16>
    %90 = vector.shape_cast %82 : vector<16x16xbf16> to vector<1x16x16xbf16>
    %91 = tpu.concatenate %83, %84, %85, %86, %87, %88, %89, %90 in 0 : vector<1x16x16xbf16>, vector<1x16x16xbf16>, vector<1x16x16xbf16>, vector<1x16x16xbf16>, vector<1x16x16xbf16>, vector<1x16x16xbf16>, vector<1x16x16xbf16>, vector<1x16x16xbf16> -> vector<8x16x16xbf16>
    "tpu.trace_start"() <{level = 10 : i32, message = "gqd,gkd->gqk"}> : () -> ()
    %cst_17 = arith.constant dense<0.000000e+00> : vector<8x16x16xf32>
    %92 = tpu.matmul %57, %74, %cst_17 {dimension_numbers = #tpu.dot_dimension_numbers<[2], [2], [1], [1], [0, 0, 0, 1, 1, 1], [0], [0]>} : vector<8x16x16xbf16>, vector<8x16x16xbf16>, vector<8x16x16xf32> -> vector<8x16x16xf32>
    "tpu.trace_stop"() : () -> ()
    %93 = vector.shape_cast %6 : vector<16x16xf32> to vector<1x16x16xf32>
    %94 = vector.broadcast %93 : vector<1x16x16xf32> to vector<8x16x16xf32>
    %95 = arith.addf %92, %94 : vector<8x16x16xf32>
    %cst_18 = arith.constant dense<0xFF800000> : vector<8x16xf32>
    %96 = vector.multi_reduction <maximumf>, %95, %cst_18 [2] : vector<8x16x16xf32> to vector<8x16xf32>
    %97 = vector.shape_cast %96 : vector<8x16xf32> to vector<8x16x1xf32>
    %98 = vector.broadcast %97 : vector<8x16x1xf32> to vector<8x16x16xf32>
    %99 = arith.subf %95, %98 : vector<8x16x16xf32>
    %100 = math.exp %99 : vector<8x16x16xf32>
    %cst_19 = arith.constant dense<0.000000e+00> : vector<8x16xf32>
    %101 = vector.multi_reduction <add>, %100, %cst_19 [2] : vector<8x16x16xf32> to vector<8x16xf32>
    %102 = vector.shape_cast %101 : vector<8x16xf32> to vector<8x16x1xf32>
    %103 = tpu.reciprocal %102 {approx = true} : vector<8x16x1xf32> -> vector<8x16x1xf32>
    %104 = vector.broadcast %103 : vector<8x16x1xf32> to vector<8x16x16xf32>
    %105 = arith.mulf %100, %104 : vector<8x16x16xf32>
    %106 = arith.truncf %105 : vector<8x16x16xf32> to vector<8x16x16xbf16>
    "tpu.trace_start"() <{level = 10 : i32, message = "gqk,gkd->gqd"}> : () -> ()
    %cst_20 = arith.constant dense<0.000000e+00> : vector<8x16x16xf32>
    %107 = tpu.matmul %106, %91, %cst_20 {dimension_numbers = #tpu.dot_dimension_numbers<[2], [1], [1], [2], [0, 0, 0, 1, 1, 2], [0], [0]>} : vector<8x16x16xbf16>, vector<8x16x16xbf16>, vector<8x16x16xf32> -> vector<8x16x16xf32>
    "tpu.trace_stop"() : () -> ()
    %108 = vector.extract_strided_slice %107 {offsets = [0, 0, 0], sizes = [1, 16, 16], strides = [1, 1, 1]} : vector<8x16x16xf32> to vector<1x16x16xf32>
    %109 = vector.shape_cast %108 : vector<1x16x16xf32> to vector<16x16xf32>
    %110 = vector.extract_strided_slice %107 {offsets = [1, 0, 0], sizes = [1, 16, 16], strides = [1, 1, 1]} : vector<8x16x16xf32> to vector<1x16x16xf32>
    %111 = vector.shape_cast %110 : vector<1x16x16xf32> to vector<16x16xf32>
    %112 = vector.extract_strided_slice %107 {offsets = [2, 0, 0], sizes = [1, 16, 16], strides = [1, 1, 1]} : vector<8x16x16xf32> to vector<1x16x16xf32>
    %113 = vector.shape_cast %112 : vector<1x16x16xf32> to vector<16x16xf32>
    %114 = vector.extract_strided_slice %107 {offsets = [3, 0, 0], sizes = [1, 16, 16], strides = [1, 1, 1]} : vector<8x16x16xf32> to vector<1x16x16xf32>
    %115 = vector.shape_cast %114 : vector<1x16x16xf32> to vector<16x16xf32>
    %116 = tpu.concatenate %109, %111, %113, %115 in 1 : vector<16x16xf32>, vector<16x16xf32>, vector<16x16xf32>, vector<16x16xf32> -> vector<16x64xf32>
    %117 = vector.extract_strided_slice %107 {offsets = [4, 0, 0], sizes = [1, 16, 16], strides = [1, 1, 1]} : vector<8x16x16xf32> to vector<1x16x16xf32>
    %118 = vector.shape_cast %117 : vector<1x16x16xf32> to vector<16x16xf32>
    %119 = vector.extract_strided_slice %107 {offsets = [5, 0, 0], sizes = [1, 16, 16], strides = [1, 1, 1]} : vector<8x16x16xf32> to vector<1x16x16xf32>
    %120 = vector.shape_cast %119 : vector<1x16x16xf32> to vector<16x16xf32>
    %121 = vector.extract_strided_slice %107 {offsets = [6, 0, 0], sizes = [1, 16, 16], strides = [1, 1, 1]} : vector<8x16x16xf32> to vector<1x16x16xf32>
    %122 = vector.shape_cast %121 : vector<1x16x16xf32> to vector<16x16xf32>
    %123 = vector.extract_strided_slice %107 {offsets = [7, 0, 0], sizes = [1, 16, 16], strides = [1, 1, 1]} : vector<8x16x16xf32> to vector<1x16x16xf32>
    %124 = vector.shape_cast %123 : vector<1x16x16xf32> to vector<16x16xf32>
    %125 = tpu.concatenate %118, %120, %122, %124 in 1 : vector<16x16xf32>, vector<16x16xf32>, vector<16x16xf32>, vector<16x16xf32> -> vector<16x64xf32>
    %126 = tpu.concatenate %116, %125 in 0 : vector<16x64xf32>, vector<16x64xf32> -> vector<32x64xf32>
    %127 = arith.truncf %126 : vector<32x64xf32> to vector<32x64xbf16>
    %c0_21 = arith.constant 0 : index
    %c0_22 = arith.constant 0 : index
    %c0_23 = arith.constant 0 : index
    %128 = vector.load %arg5[%c0_21, %c0_22, %c0_23] : memref<2x64x64xbf16, #tpu.memory_space<vmem>>, vector<1x64x64xbf16>
    %129 = vector.shape_cast %128 : vector<1x64x64xbf16> to vector<64x64xbf16>
    %cst_24 = arith.constant dense<0.000000e+00> : vector<32x64xf32>
    %130 = tpu.matmul %127, %129, %cst_24 {dimension_numbers = #tpu.dot_dimension_numbers<[1], [0], [0], [1], [0, 0, 1, 1], [], []>} : vector<32x64xbf16>, vector<64x64xbf16>, vector<32x64xf32> -> vector<32x64xf32>
    %c0_25 = arith.constant 0 : index
    %c0_26 = arith.constant 0 : index
    %c0_27 = arith.constant 0 : index
    %131 = vector.load %arg6[%c0_25, %c0_26, %c0_27] : memref<2x1x64xf32, #tpu.memory_space<vmem>>, vector<1x1x64xf32>
    %132 = vector.shape_cast %131 : vector<1x1x64xf32> to vector<1x64xf32>
    %133 = vector.broadcast %132 : vector<1x64xf32> to vector<32x64xf32>
    %134 = arith.addf %130, %133 : vector<32x64xf32>
    %135 = arith.addf %0, %134 : vector<32x64xf32>
    %c0_28 = arith.constant 0 : index
    %c0_29 = arith.constant 0 : index
    %c0_30 = arith.constant 0 : index
    %136 = vector.load %arg7[%c0_28, %c0_29, %c0_30] : memref<2x1x64xf32, #tpu.memory_space<vmem>>, vector<1x1x64xf32>
    %137 = vector.shape_cast %136 : vector<1x1x64xf32> to vector<1x64xf32>
    %c0_31 = arith.constant 0 : index
    %c0_32 = arith.constant 0 : index
    %c0_33 = arith.constant 0 : index
    %138 = vector.load %arg8[%c0_31, %c0_32, %c0_33] : memref<2x1x64xf32, #tpu.memory_space<vmem>>, vector<1x1x64xf32>
    %139 = vector.shape_cast %138 : vector<1x1x64xf32> to vector<1x64xf32>
    %cst_34 = arith.constant dense<0.000000e+00> : vector<32xf32>
    %140 = vector.multi_reduction <add>, %135, %cst_34 [1] : vector<32x64xf32> to vector<32xf32>
    %141 = vector.shape_cast %140 : vector<32xf32> to vector<32x1xf32>
    %cst_35 = arith.constant 6.400000e+01 : f32
    %142 = vector.broadcast %cst_35 : f32 to vector<32x1xf32>
    %143 = arith.divf %141, %142 : vector<32x1xf32>
    %144 = vector.broadcast %143 : vector<32x1xf32> to vector<32x64xf32>
    %145 = arith.subf %135, %144 : vector<32x64xf32>
    %146 = arith.mulf %145, %145 : vector<32x64xf32>
    %cst_36 = arith.constant dense<0.000000e+00> : vector<32xf32>
    %147 = vector.multi_reduction <add>, %146, %cst_36 [1] : vector<32x64xf32> to vector<32xf32>
    %148 = vector.shape_cast %147 : vector<32xf32> to vector<32x1xf32>
    %cst_37 = arith.constant 6.400000e+01 : f32
    %149 = vector.broadcast %cst_37 : f32 to vector<32x1xf32>
    %150 = arith.divf %148, %149 : vector<32x1xf32>
    %151 = vector.broadcast %143 : vector<32x1xf32> to vector<32x64xf32>
    %152 = arith.subf %135, %151 : vector<32x64xf32>
    %cst_38 = arith.constant 9.99999974E-6 : f32
    %153 = vector.broadcast %cst_38 : f32 to vector<32x1xf32>
    %154 = arith.addf %150, %153 : vector<32x1xf32>
    %155 = math.rsqrt %154 : vector<32x1xf32>
    %156 = vector.broadcast %155 : vector<32x1xf32> to vector<32x64xf32>
    %157 = arith.mulf %152, %156 : vector<32x64xf32>
    %158 = vector.broadcast %137 : vector<1x64xf32> to vector<32x64xf32>
    %159 = arith.mulf %157, %158 : vector<32x64xf32>
    %160 = vector.broadcast %139 : vector<1x64xf32> to vector<32x64xf32>
    %161 = arith.addf %159, %160 : vector<32x64xf32>
    %162 = arith.truncf %161 : vector<32x64xf32> to vector<32x64xbf16>
    %c0_39 = arith.constant 0 : index
    %c0_40 = arith.constant 0 : index
    %c0_41 = arith.constant 0 : index
    %163 = vector.load %arg9[%c0_39, %c0_40, %c0_41] : memref<2x64x256xbf16, #tpu.memory_space<vmem>>, vector<1x64x256xbf16>
    %164 = vector.shape_cast %163 : vector<1x64x256xbf16> to vector<64x256xbf16>
    %cst_42 = arith.constant dense<0.000000e+00> : vector<32x256xf32>
    %165 = tpu.matmul %162, %164, %cst_42 {dimension_numbers = #tpu.dot_dimension_numbers<[1], [0], [0], [1], [0, 0, 1, 1], [], []>} : vector<32x64xbf16>, vector<64x256xbf16>, vector<32x256xf32> -> vector<32x256xf32>
    %c0_43 = arith.constant 0 : index
    %c0_44 = arith.constant 0 : index
    %c0_45 = arith.constant 0 : index
    %166 = vector.load %arg10[%c0_43, %c0_44, %c0_45] : memref<2x1x256xf32, #tpu.memory_space<vmem>>, vector<1x1x256xf32>
    %167 = vector.shape_cast %166 : vector<1x1x256xf32> to vector<1x256xf32>
    %168 = vector.broadcast %167 : vector<1x256xf32> to vector<32x256xf32>
    %169 = arith.addf %165, %168 : vector<32x256xf32>
    %cst_46 = arith.constant 0.000000e+00 : f32
    %170 = vector.broadcast %cst_46 : f32 to vector<32x256xf32>
    %171 = arith.maximumf %169, %170 : vector<32x256xf32>
    %172 = arith.truncf %171 : vector<32x256xf32> to vector<32x256xbf16>
    %c0_47 = arith.constant 0 : index
    %c0_48 = arith.constant 0 : index
    %c0_49 = arith.constant 0 : index
    %173 = vector.load %arg11[%c0_47, %c0_48, %c0_49] : memref<2x256x64xbf16, #tpu.memory_space<vmem>>, vector<1x256x64xbf16>
    %174 = vector.shape_cast %173 : vector<1x256x64xbf16> to vector<256x64xbf16>
    %cst_50 = arith.constant dense<0.000000e+00> : vector<32x64xf32>
    %175 = tpu.matmul %172, %174, %cst_50 {dimension_numbers = #tpu.dot_dimension_numbers<[1], [0], [0], [1], [0, 0, 1, 1], [], []>} : vector<32x256xbf16>, vector<256x64xbf16>, vector<32x64xf32> -> vector<32x64xf32>
    %c0_51 = arith.constant 0 : index
    %c0_52 = arith.constant 0 : index
    %c0_53 = arith.constant 0 : index
    %176 = vector.load %arg12[%c0_51, %c0_52, %c0_53] : memref<2x1x64xf32, #tpu.memory_space<vmem>>, vector<1x1x64xf32>
    %177 = vector.shape_cast %176 : vector<1x1x64xf32> to vector<1x64xf32>
    %178 = vector.broadcast %177 : vector<1x64xf32> to vector<32x64xf32>
    %179 = arith.addf %175, %178 : vector<32x64xf32>
    %180 = arith.addf %135, %179 : vector<32x64xf32>
    %c1 = arith.constant 1 : index
    %c0_54 = arith.constant 0 : index
    %c0_55 = arith.constant 0 : index
    %181 = vector.load %arg2[%c1, %c0_54, %c0_55] : memref<2x1x64xf32, #tpu.memory_space<vmem>>, vector<1x1x64xf32>
    %182 = vector.shape_cast %181 : vector<1x1x64xf32> to vector<1x64xf32>
    %c1_56 = arith.constant 1 : index
    %c0_57 = arith.constant 0 : index
    %c0_58 = arith.constant 0 : index
    %183 = vector.load %arg3[%c1_56, %c0_57, %c0_58] : memref<2x1x64xf32, #tpu.memory_space<vmem>>, vector<1x1x64xf32>
    %184 = vector.shape_cast %183 : vector<1x1x64xf32> to vector<1x64xf32>
    %cst_59 = arith.constant dense<0.000000e+00> : vector<32xf32>
    %185 = vector.multi_reduction <add>, %180, %cst_59 [1] : vector<32x64xf32> to vector<32xf32>
    %186 = vector.shape_cast %185 : vector<32xf32> to vector<32x1xf32>
    %cst_60 = arith.constant 6.400000e+01 : f32
    %187 = vector.broadcast %cst_60 : f32 to vector<32x1xf32>
    %188 = arith.divf %186, %187 : vector<32x1xf32>
    %189 = vector.broadcast %188 : vector<32x1xf32> to vector<32x64xf32>
    %190 = arith.subf %180, %189 : vector<32x64xf32>
    %191 = arith.mulf %190, %190 : vector<32x64xf32>
    %cst_61 = arith.constant dense<0.000000e+00> : vector<32xf32>
    %192 = vector.multi_reduction <add>, %191, %cst_61 [1] : vector<32x64xf32> to vector<32xf32>
    %193 = vector.shape_cast %192 : vector<32xf32> to vector<32x1xf32>
    %cst_62 = arith.constant 6.400000e+01 : f32
    %194 = vector.broadcast %cst_62 : f32 to vector<32x1xf32>
    %195 = arith.divf %193, %194 : vector<32x1xf32>
    %196 = vector.broadcast %188 : vector<32x1xf32> to vector<32x64xf32>
    %197 = arith.subf %180, %196 : vector<32x64xf32>
    %cst_63 = arith.constant 9.99999974E-6 : f32
    %198 = vector.broadcast %cst_63 : f32 to vector<32x1xf32>
    %199 = arith.addf %195, %198 : vector<32x1xf32>
    %200 = math.rsqrt %199 : vector<32x1xf32>
    %201 = vector.broadcast %200 : vector<32x1xf32> to vector<32x64xf32>
    %202 = arith.mulf %197, %201 : vector<32x64xf32>
    %203 = vector.broadcast %182 : vector<1x64xf32> to vector<32x64xf32>
    %204 = arith.mulf %202, %203 : vector<32x64xf32>
    %205 = vector.broadcast %184 : vector<1x64xf32> to vector<32x64xf32>
    %206 = arith.addf %204, %205 : vector<32x64xf32>
    %207 = arith.truncf %206 : vector<32x64xf32> to vector<32x64xbf16>
    %c1_64 = arith.constant 1 : index
    %c0_65 = arith.constant 0 : index
    %c0_66 = arith.constant 0 : index
    %208 = vector.load %arg4[%c1_64, %c0_65, %c0_66] : memref<2x64x192xbf16, #tpu.memory_space<vmem>>, vector<1x64x192xbf16>
    %209 = vector.shape_cast %208 : vector<1x64x192xbf16> to vector<64x192xbf16>
    %cst_67 = arith.constant dense<0.000000e+00> : vector<32x192xf32>
    %210 = tpu.matmul %207, %209, %cst_67 {dimension_numbers = #tpu.dot_dimension_numbers<[1], [0], [0], [1], [0, 0, 1, 1], [], []>} : vector<32x64xbf16>, vector<64x192xbf16>, vector<32x192xf32> -> vector<32x192xf32>
    %211 = arith.truncf %210 : vector<32x192xf32> to vector<32x192xbf16>
    %212 = vector.extract_strided_slice %211 {offsets = [0, 0], sizes = [32, 64], strides = [1, 1]} : vector<32x192xbf16> to vector<32x64xbf16>
    %213 = vector.extract_strided_slice %211 {offsets = [0, 64], sizes = [32, 64], strides = [1, 1]} : vector<32x192xbf16> to vector<32x64xbf16>
    %214 = vector.extract_strided_slice %211 {offsets = [0, 128], sizes = [32, 64], strides = [1, 1]} : vector<32x192xbf16> to vector<32x64xbf16>
    %215 = vector.extract_strided_slice %212 {offsets = [0, 0], sizes = [16, 16], strides = [1, 1]} : vector<32x64xbf16> to vector<16x16xbf16>
    %216 = vector.extract_strided_slice %212 {offsets = [0, 16], sizes = [16, 16], strides = [1, 1]} : vector<32x64xbf16> to vector<16x16xbf16>
    %217 = vector.extract_strided_slice %212 {offsets = [0, 32], sizes = [16, 16], strides = [1, 1]} : vector<32x64xbf16> to vector<16x16xbf16>
    %218 = vector.extract_strided_slice %212 {offsets = [0, 48], sizes = [16, 16], strides = [1, 1]} : vector<32x64xbf16> to vector<16x16xbf16>
    %219 = vector.extract_strided_slice %212 {offsets = [16, 0], sizes = [16, 16], strides = [1, 1]} : vector<32x64xbf16> to vector<16x16xbf16>
    %220 = vector.extract_strided_slice %212 {offsets = [16, 16], sizes = [16, 16], strides = [1, 1]} : vector<32x64xbf16> to vector<16x16xbf16>
    %221 = vector.extract_strided_slice %212 {offsets = [16, 32], sizes = [16, 16], strides = [1, 1]} : vector<32x64xbf16> to vector<16x16xbf16>
    %222 = vector.extract_strided_slice %212 {offsets = [16, 48], sizes = [16, 16], strides = [1, 1]} : vector<32x64xbf16> to vector<16x16xbf16>
    %223 = vector.shape_cast %215 : vector<16x16xbf16> to vector<1x16x16xbf16>
    %224 = vector.shape_cast %216 : vector<16x16xbf16> to vector<1x16x16xbf16>
    %225 = vector.shape_cast %217 : vector<16x16xbf16> to vector<1x16x16xbf16>
    %226 = vector.shape_cast %218 : vector<16x16xbf16> to vector<1x16x16xbf16>
    %227 = vector.shape_cast %219 : vector<16x16xbf16> to vector<1x16x16xbf16>
    %228 = vector.shape_cast %220 : vector<16x16xbf16> to vector<1x16x16xbf16>
    %229 = vector.shape_cast %221 : vector<16x16xbf16> to vector<1x16x16xbf16>
    %230 = vector.shape_cast %222 : vector<16x16xbf16> to vector<1x16x16xbf16>
    %231 = tpu.concatenate %223, %224, %225, %226, %227, %228, %229, %230 in 0 : vector<1x16x16xbf16>, vector<1x16x16xbf16>, vector<1x16x16xbf16>, vector<1x16x16xbf16>, vector<1x16x16xbf16>, vector<1x16x16xbf16>, vector<1x16x16xbf16>, vector<1x16x16xbf16> -> vector<8x16x16xbf16>
    %232 = vector.extract_strided_slice %213 {offsets = [0, 0], sizes = [16, 16], strides = [1, 1]} : vector<32x64xbf16> to vector<16x16xbf16>
    %233 = vector.extract_strided_slice %213 {offsets = [0, 16], sizes = [16, 16], strides = [1, 1]} : vector<32x64xbf16> to vector<16x16xbf16>
    %234 = vector.extract_strided_slice %213 {offsets = [0, 32], sizes = [16, 16], strides = [1, 1]} : vector<32x64xbf16> to vector<16x16xbf16>
    %235 = vector.extract_strided_slice %213 {offsets = [0, 48], sizes = [16, 16], strides = [1, 1]} : vector<32x64xbf16> to vector<16x16xbf16>
    %236 = vector.extract_strided_slice %213 {offsets = [16, 0], sizes = [16, 16], strides = [1, 1]} : vector<32x64xbf16> to vector<16x16xbf16>
    %237 = vector.extract_strided_slice %213 {offsets = [16, 16], sizes = [16, 16], strides = [1, 1]} : vector<32x64xbf16> to vector<16x16xbf16>
    %238 = vector.extract_strided_slice %213 {offsets = [16, 32], sizes = [16, 16], strides = [1, 1]} : vector<32x64xbf16> to vector<16x16xbf16>
    %239 = vector.extract_strided_slice %213 {offsets = [16, 48], sizes = [16, 16], strides = [1, 1]} : vector<32x64xbf16> to vector<16x16xbf16>
    %240 = vector.shape_cast %232 : vector<16x16xbf16> to vector<1x16x16xbf16>
    %241 = vector.shape_cast %233 : vector<16x16xbf16> to vector<1x16x16xbf16>
    %242 = vector.shape_cast %234 : vector<16x16xbf16> to vector<1x16x16xbf16>
    %243 = vector.shape_cast %235 : vector<16x16xbf16> to vector<1x16x16xbf16>
    %244 = vector.shape_cast %236 : vector<16x16xbf16> to vector<1x16x16xbf16>
    %245 = vector.shape_cast %237 : vector<16x16xbf16> to vector<1x16x16xbf16>
    %246 = vector.shape_cast %238 : vector<16x16xbf16> to vector<1x16x16xbf16>
    %247 = vector.shape_cast %239 : vector<16x16xbf16> to vector<1x16x16xbf16>
    %248 = tpu.concatenate %240, %241, %242, %243, %244, %245, %246, %247 in 0 : vector<1x16x16xbf16>, vector<1x16x16xbf16>, vector<1x16x16xbf16>, vector<1x16x16xbf16>, vector<1x16x16xbf16>, vector<1x16x16xbf16>, vector<1x16x16xbf16>, vector<1x16x16xbf16> -> vector<8x16x16xbf16>
    %249 = vector.extract_strided_slice %214 {offsets = [0, 0], sizes = [16, 16], strides = [1, 1]} : vector<32x64xbf16> to vector<16x16xbf16>
    %250 = vector.extract_strided_slice %214 {offsets = [0, 16], sizes = [16, 16], strides = [1, 1]} : vector<32x64xbf16> to vector<16x16xbf16>
    %251 = vector.extract_strided_slice %214 {offsets = [0, 32], sizes = [16, 16], strides = [1, 1]} : vector<32x64xbf16> to vector<16x16xbf16>
    %252 = vector.extract_strided_slice %214 {offsets = [0, 48], sizes = [16, 16], strides = [1, 1]} : vector<32x64xbf16> to vector<16x16xbf16>
    %253 = vector.extract_strided_slice %214 {offsets = [16, 0], sizes = [16, 16], strides = [1, 1]} : vector<32x64xbf16> to vector<16x16xbf16>
    %254 = vector.extract_strided_slice %214 {offsets = [16, 16], sizes = [16, 16], strides = [1, 1]} : vector<32x64xbf16> to vector<16x16xbf16>
    %255 = vector.extract_strided_slice %214 {offsets = [16, 32], sizes = [16, 16], strides = [1, 1]} : vector<32x64xbf16> to vector<16x16xbf16>
    %256 = vector.extract_strided_slice %214 {offsets = [16, 48], sizes = [16, 16], strides = [1, 1]} : vector<32x64xbf16> to vector<16x16xbf16>
    %257 = vector.shape_cast %249 : vector<16x16xbf16> to vector<1x16x16xbf16>
    %258 = vector.shape_cast %250 : vector<16x16xbf16> to vector<1x16x16xbf16>
    %259 = vector.shape_cast %251 : vector<16x16xbf16> to vector<1x16x16xbf16>
    %260 = vector.shape_cast %252 : vector<16x16xbf16> to vector<1x16x16xbf16>
    %261 = vector.shape_cast %253 : vector<16x16xbf16> to vector<1x16x16xbf16>
    %262 = vector.shape_cast %254 : vector<16x16xbf16> to vector<1x16x16xbf16>
    %263 = vector.shape_cast %255 : vector<16x16xbf16> to vector<1x16x16xbf16>
    %264 = vector.shape_cast %256 : vector<16x16xbf16> to vector<1x16x16xbf16>
    %265 = tpu.concatenate %257, %258, %259, %260, %261, %262, %263, %264 in 0 : vector<1x16x16xbf16>, vector<1x16x16xbf16>, vector<1x16x16xbf16>, vector<1x16x16xbf16>, vector<1x16x16xbf16>, vector<1x16x16xbf16>, vector<1x16x16xbf16>, vector<1x16x16xbf16> -> vector<8x16x16xbf16>
    "tpu.trace_start"() <{level = 10 : i32, message = "gqd,gkd->gqk"}> : () -> ()
    %cst_68 = arith.constant dense<0.000000e+00> : vector<8x16x16xf32>
    %266 = tpu.matmul %231, %248, %cst_68 {dimension_numbers = #tpu.dot_dimension_numbers<[2], [2], [1], [1], [0, 0, 0, 1, 1, 1], [0], [0]>} : vector<8x16x16xbf16>, vector<8x16x16xbf16>, vector<8x16x16xf32> -> vector<8x16x16xf32>
    "tpu.trace_stop"() : () -> ()
    %267 = vector.shape_cast %6 : vector<16x16xf32> to vector<1x16x16xf32>
    %268 = vector.broadcast %267 : vector<1x16x16xf32> to vector<8x16x16xf32>
    %269 = arith.addf %266, %268 : vector<8x16x16xf32>
    %cst_69 = arith.constant dense<0xFF800000> : vector<8x16xf32>
    %270 = vector.multi_reduction <maximumf>, %269, %cst_69 [2] : vector<8x16x16xf32> to vector<8x16xf32>
    %271 = vector.shape_cast %270 : vector<8x16xf32> to vector<8x16x1xf32>
    %272 = vector.broadcast %271 : vector<8x16x1xf32> to vector<8x16x16xf32>
    %273 = arith.subf %269, %272 : vector<8x16x16xf32>
    %274 = math.exp %273 : vector<8x16x16xf32>
    %cst_70 = arith.constant dense<0.000000e+00> : vector<8x16xf32>
    %275 = vector.multi_reduction <add>, %274, %cst_70 [2] : vector<8x16x16xf32> to vector<8x16xf32>
    %276 = vector.shape_cast %275 : vector<8x16xf32> to vector<8x16x1xf32>
    %277 = tpu.reciprocal %276 {approx = true} : vector<8x16x1xf32> -> vector<8x16x1xf32>
    %278 = vector.broadcast %277 : vector<8x16x1xf32> to vector<8x16x16xf32>
    %279 = arith.mulf %274, %278 : vector<8x16x16xf32>
    %280 = arith.truncf %279 : vector<8x16x16xf32> to vector<8x16x16xbf16>
    "tpu.trace_start"() <{level = 10 : i32, message = "gqk,gkd->gqd"}> : () -> ()
    %cst_71 = arith.constant dense<0.000000e+00> : vector<8x16x16xf32>
    %281 = tpu.matmul %280, %265, %cst_71 {dimension_numbers = #tpu.dot_dimension_numbers<[2], [1], [1], [2], [0, 0, 0, 1, 1, 2], [0], [0]>} : vector<8x16x16xbf16>, vector<8x16x16xbf16>, vector<8x16x16xf32> -> vector<8x16x16xf32>
    "tpu.trace_stop"() : () -> ()
    %282 = vector.extract_strided_slice %281 {offsets = [0, 0, 0], sizes = [1, 16, 16], strides = [1, 1, 1]} : vector<8x16x16xf32> to vector<1x16x16xf32>
    %283 = vector.shape_cast %282 : vector<1x16x16xf32> to vector<16x16xf32>
    %284 = vector.extract_strided_slice %281 {offsets = [1, 0, 0], sizes = [1, 16, 16], strides = [1, 1, 1]} : vector<8x16x16xf32> to vector<1x16x16xf32>
    %285 = vector.shape_cast %284 : vector<1x16x16xf32> to vector<16x16xf32>
    %286 = vector.extract_strided_slice %281 {offsets = [2, 0, 0], sizes = [1, 16, 16], strides = [1, 1, 1]} : vector<8x16x16xf32> to vector<1x16x16xf32>
    %287 = vector.shape_cast %286 : vector<1x16x16xf32> to vector<16x16xf32>
    %288 = vector.extract_strided_slice %281 {offsets = [3, 0, 0], sizes = [1, 16, 16], strides = [1, 1, 1]} : vector<8x16x16xf32> to vector<1x16x16xf32>
    %289 = vector.shape_cast %288 : vector<1x16x16xf32> to vector<16x16xf32>
    %290 = tpu.concatenate %283, %285, %287, %289 in 1 : vector<16x16xf32>, vector<16x16xf32>, vector<16x16xf32>, vector<16x16xf32> -> vector<16x64xf32>
    %291 = vector.extract_strided_slice %281 {offsets = [4, 0, 0], sizes = [1, 16, 16], strides = [1, 1, 1]} : vector<8x16x16xf32> to vector<1x16x16xf32>
    %292 = vector.shape_cast %291 : vector<1x16x16xf32> to vector<16x16xf32>
    %293 = vector.extract_strided_slice %281 {offsets = [5, 0, 0], sizes = [1, 16, 16], strides = [1, 1, 1]} : vector<8x16x16xf32> to vector<1x16x16xf32>
    %294 = vector.shape_cast %293 : vector<1x16x16xf32> to vector<16x16xf32>
    %295 = vector.extract_strided_slice %281 {offsets = [6, 0, 0], sizes = [1, 16, 16], strides = [1, 1, 1]} : vector<8x16x16xf32> to vector<1x16x16xf32>
    %296 = vector.shape_cast %295 : vector<1x16x16xf32> to vector<16x16xf32>
    %297 = vector.extract_strided_slice %281 {offsets = [7, 0, 0], sizes = [1, 16, 16], strides = [1, 1, 1]} : vector<8x16x16xf32> to vector<1x16x16xf32>
    %298 = vector.shape_cast %297 : vector<1x16x16xf32> to vector<16x16xf32>
    %299 = tpu.concatenate %292, %294, %296, %298 in 1 : vector<16x16xf32>, vector<16x16xf32>, vector<16x16xf32>, vector<16x16xf32> -> vector<16x64xf32>
    %300 = tpu.concatenate %290, %299 in 0 : vector<16x64xf32>, vector<16x64xf32> -> vector<32x64xf32>
    %301 = arith.truncf %300 : vector<32x64xf32> to vector<32x64xbf16>
    %c1_72 = arith.constant 1 : index
    %c0_73 = arith.constant 0 : index
    %c0_74 = arith.constant 0 : index
    %302 = vector.load %arg5[%c1_72, %c0_73, %c0_74] : memref<2x64x64xbf16, #tpu.memory_space<vmem>>, vector<1x64x64xbf16>
    %303 = vector.shape_cast %302 : vector<1x64x64xbf16> to vector<64x64xbf16>
    %cst_75 = arith.constant dense<0.000000e+00> : vector<32x64xf32>
    %304 = tpu.matmul %301, %303, %cst_75 {dimension_numbers = #tpu.dot_dimension_numbers<[1], [0], [0], [1], [0, 0, 1, 1], [], []>} : vector<32x64xbf16>, vector<64x64xbf16>, vector<32x64xf32> -> vector<32x64xf32>
    %c1_76 = arith.constant 1 : index
    %c0_77 = arith.constant 0 : index
    %c0_78 = arith.constant 0 : index
    %305 = vector.load %arg6[%c1_76, %c0_77, %c0_78] : memref<2x1x64xf32, #tpu.memory_space<vmem>>, vector<1x1x64xf32>
    %306 = vector.shape_cast %305 : vector<1x1x64xf32> to vector<1x64xf32>
    %307 = vector.broadcast %306 : vector<1x64xf32> to vector<32x64xf32>
    %308 = arith.addf %304, %307 : vector<32x64xf32>
    %309 = arith.addf %180, %308 : vector<32x64xf32>
    %c1_79 = arith.constant 1 : index
    %c0_80 = arith.constant 0 : index
    %c0_81 = arith.constant 0 : index
    %310 = vector.load %arg7[%c1_79, %c0_80, %c0_81] : memref<2x1x64xf32, #tpu.memory_space<vmem>>, vector<1x1x64xf32>
    %311 = vector.shape_cast %310 : vector<1x1x64xf32> to vector<1x64xf32>
    %c1_82 = arith.constant 1 : index
    %c0_83 = arith.constant 0 : index
    %c0_84 = arith.constant 0 : index
    %312 = vector.load %arg8[%c1_82, %c0_83, %c0_84] : memref<2x1x64xf32, #tpu.memory_space<vmem>>, vector<1x1x64xf32>
    %313 = vector.shape_cast %312 : vector<1x1x64xf32> to vector<1x64xf32>
    %cst_85 = arith.constant dense<0.000000e+00> : vector<32xf32>
    %314 = vector.multi_reduction <add>, %309, %cst_85 [1] : vector<32x64xf32> to vector<32xf32>
    %315 = vector.shape_cast %314 : vector<32xf32> to vector<32x1xf32>
    %cst_86 = arith.constant 6.400000e+01 : f32
    %316 = vector.broadcast %cst_86 : f32 to vector<32x1xf32>
    %317 = arith.divf %315, %316 : vector<32x1xf32>
    %318 = vector.broadcast %317 : vector<32x1xf32> to vector<32x64xf32>
    %319 = arith.subf %309, %318 : vector<32x64xf32>
    %320 = arith.mulf %319, %319 : vector<32x64xf32>
    %cst_87 = arith.constant dense<0.000000e+00> : vector<32xf32>
    %321 = vector.multi_reduction <add>, %320, %cst_87 [1] : vector<32x64xf32> to vector<32xf32>
    %322 = vector.shape_cast %321 : vector<32xf32> to vector<32x1xf32>
    %cst_88 = arith.constant 6.400000e+01 : f32
    %323 = vector.broadcast %cst_88 : f32 to vector<32x1xf32>
    %324 = arith.divf %322, %323 : vector<32x1xf32>
    %325 = vector.broadcast %317 : vector<32x1xf32> to vector<32x64xf32>
    %326 = arith.subf %309, %325 : vector<32x64xf32>
    %cst_89 = arith.constant 9.99999974E-6 : f32
    %327 = vector.broadcast %cst_89 : f32 to vector<32x1xf32>
    %328 = arith.addf %324, %327 : vector<32x1xf32>
    %329 = math.rsqrt %328 : vector<32x1xf32>
    %330 = vector.broadcast %329 : vector<32x1xf32> to vector<32x64xf32>
    %331 = arith.mulf %326, %330 : vector<32x64xf32>
    %332 = vector.broadcast %311 : vector<1x64xf32> to vector<32x64xf32>
    %333 = arith.mulf %331, %332 : vector<32x64xf32>
    %334 = vector.broadcast %313 : vector<1x64xf32> to vector<32x64xf32>
    %335 = arith.addf %333, %334 : vector<32x64xf32>
    %336 = arith.truncf %335 : vector<32x64xf32> to vector<32x64xbf16>
    %c1_90 = arith.constant 1 : index
    %c0_91 = arith.constant 0 : index
    %c0_92 = arith.constant 0 : index
    %337 = vector.load %arg9[%c1_90, %c0_91, %c0_92] : memref<2x64x256xbf16, #tpu.memory_space<vmem>>, vector<1x64x256xbf16>
    %338 = vector.shape_cast %337 : vector<1x64x256xbf16> to vector<64x256xbf16>
    %cst_93 = arith.constant dense<0.000000e+00> : vector<32x256xf32>
    %339 = tpu.matmul %336, %338, %cst_93 {dimension_numbers = #tpu.dot_dimension_numbers<[1], [0], [0], [1], [0, 0, 1, 1], [], []>} : vector<32x64xbf16>, vector<64x256xbf16>, vector<32x256xf32> -> vector<32x256xf32>
    %c1_94 = arith.constant 1 : index
    %c0_95 = arith.constant 0 : index
    %c0_96 = arith.constant 0 : index
    %340 = vector.load %arg10[%c1_94, %c0_95, %c0_96] : memref<2x1x256xf32, #tpu.memory_space<vmem>>, vector<1x1x256xf32>
    %341 = vector.shape_cast %340 : vector<1x1x256xf32> to vector<1x256xf32>
    %342 = vector.broadcast %341 : vector<1x256xf32> to vector<32x256xf32>
    %343 = arith.addf %339, %342 : vector<32x256xf32>
    %cst_97 = arith.constant 0.000000e+00 : f32
    %344 = vector.broadcast %cst_97 : f32 to vector<32x256xf32>
    %345 = arith.maximumf %343, %344 : vector<32x256xf32>
    %346 = arith.truncf %345 : vector<32x256xf32> to vector<32x256xbf16>
    %c1_98 = arith.constant 1 : index
    %c0_99 = arith.constant 0 : index
    %c0_100 = arith.constant 0 : index
    %347 = vector.load %arg11[%c1_98, %c0_99, %c0_100] : memref<2x256x64xbf16, #tpu.memory_space<vmem>>, vector<1x256x64xbf16>
    %348 = vector.shape_cast %347 : vector<1x256x64xbf16> to vector<256x64xbf16>
    %cst_101 = arith.constant dense<0.000000e+00> : vector<32x64xf32>
    %349 = tpu.matmul %346, %348, %cst_101 {dimension_numbers = #tpu.dot_dimension_numbers<[1], [0], [0], [1], [0, 0, 1, 1], [], []>} : vector<32x256xbf16>, vector<256x64xbf16>, vector<32x64xf32> -> vector<32x64xf32>
    %c1_102 = arith.constant 1 : index
    %c0_103 = arith.constant 0 : index
    %c0_104 = arith.constant 0 : index
    %350 = vector.load %arg12[%c1_102, %c0_103, %c0_104] : memref<2x1x64xf32, #tpu.memory_space<vmem>>, vector<1x1x64xf32>
    %351 = vector.shape_cast %350 : vector<1x1x64xf32> to vector<1x64xf32>
    %352 = vector.broadcast %351 : vector<1x64xf32> to vector<32x64xf32>
    %353 = arith.addf %349, %352 : vector<32x64xf32>
    %354 = arith.addf %309, %353 : vector<32x64xf32>
    %c0_105 = arith.constant 0 : index
    %c0_106 = arith.constant 0 : index
    %355 = vector.load %arg13[%c0_105, %c0_106] : memref<1x64xf32, #tpu.memory_space<vmem>>, vector<1x64xf32>
    %c0_107 = arith.constant 0 : index
    %c0_108 = arith.constant 0 : index
    %356 = vector.load %arg14[%c0_107, %c0_108] : memref<1x64xf32, #tpu.memory_space<vmem>>, vector<1x64xf32>
    %cst_109 = arith.constant dense<0.000000e+00> : vector<32xf32>
    %357 = vector.multi_reduction <add>, %354, %cst_109 [1] : vector<32x64xf32> to vector<32xf32>
    %358 = vector.shape_cast %357 : vector<32xf32> to vector<32x1xf32>
    %cst_110 = arith.constant 6.400000e+01 : f32
    %359 = vector.broadcast %cst_110 : f32 to vector<32x1xf32>
    %360 = arith.divf %358, %359 : vector<32x1xf32>
    %361 = vector.broadcast %360 : vector<32x1xf32> to vector<32x64xf32>
    %362 = arith.subf %354, %361 : vector<32x64xf32>
    %363 = arith.mulf %362, %362 : vector<32x64xf32>
    %cst_111 = arith.constant dense<0.000000e+00> : vector<32xf32>
    %364 = vector.multi_reduction <add>, %363, %cst_111 [1] : vector<32x64xf32> to vector<32xf32>
    %365 = vector.shape_cast %364 : vector<32xf32> to vector<32x1xf32>
    %cst_112 = arith.constant 6.400000e+01 : f32
    %366 = vector.broadcast %cst_112 : f32 to vector<32x1xf32>
    %367 = arith.divf %365, %366 : vector<32x1xf32>
    %368 = vector.broadcast %360 : vector<32x1xf32> to vector<32x64xf32>
    %369 = arith.subf %354, %368 : vector<32x64xf32>
    %cst_113 = arith.constant 9.99999974E-6 : f32
    %370 = vector.broadcast %cst_113 : f32 to vector<32x1xf32>
    %371 = arith.addf %367, %370 : vector<32x1xf32>
    %372 = math.rsqrt %371 : vector<32x1xf32>
    %373 = vector.broadcast %372 : vector<32x1xf32> to vector<32x64xf32>
    %374 = arith.mulf %369, %373 : vector<32x64xf32>
    %375 = vector.broadcast %355 : vector<1x64xf32> to vector<32x64xf32>
    %376 = arith.mulf %374, %375 : vector<32x64xf32>
    %377 = vector.broadcast %356 : vector<1x64xf32> to vector<32x64xf32>
    %378 = arith.addf %376, %377 : vector<32x64xf32>
    %379 = arith.truncf %378 : vector<32x64xf32> to vector<32x64xbf16>
    %c0_114 = arith.constant 0 : index
    %c0_115 = arith.constant 0 : index
    %380 = vector.load %arg15[%c0_114, %c0_115] : memref<64x128xbf16, #tpu.memory_space<vmem>>, vector<64x128xbf16>
    %cst_116 = arith.constant dense<0.000000e+00> : vector<32x128xf32>
    %381 = tpu.matmul %379, %380, %cst_116 {dimension_numbers = #tpu.dot_dimension_numbers<[1], [0], [0], [1], [0, 0, 1, 1], [], []>} : vector<32x64xbf16>, vector<64x128xbf16>, vector<32x128xf32> -> vector<32x128xf32>
    %c0_117 = arith.constant 0 : index
    %c0_118 = arith.constant 0 : index
    %382 = vector.load %arg16[%c0_117, %c0_118] : memref<1x128xf32, #tpu.memory_space<vmem>>, vector<1x128xf32>
    %383 = vector.broadcast %382 : vector<1x128xf32> to vector<32x128xf32>
    %384 = arith.addf %381, %383 : vector<32x128xf32>
    %c0_119 = arith.constant 0 : index
    %c0_120 = arith.constant 0 : index
    %385 = vector.load %arg17[%c0_119, %c0_120] : memref<32x128xf32, #tpu.memory_space<vmem>>, vector<32x128xf32>
    tpu.vector_store %arg17[%c0_119, %c0_120], %384 {strides = array<i32>} : memref<32x128xf32, #tpu.memory_space<vmem>>, vector<32x128xf32>,
    return
  }
  func.func @transform_0(%arg0: i32) -> (i32, i32) {
    %c0_i32 = arith.constant 0 : i32
    %c0_i32_0 = arith.constant 0 : i32
    %c0_i32_1 = arith.constant 0 : i32
    return %c0_i32, %c0_i32_0 : i32, i32
  }
  func.func @transform_1(%arg0: i32) -> (i32, i32, i32) {
    %c0_i32 = arith.constant 0 : i32
    %c0_i32_0 = arith.constant 0 : i32
    %c0_i32_1 = arith.constant 0 : i32
    %c0_i32_2 = arith.constant 0 : i32
    return %c0_i32, %c0_i32_0, %c0_i32_1 : i32, i32, i32
  }
  func.func @transform_2(%arg0: i32) -> (i32, i32, i32) {
    %c0_i32 = arith.constant 0 : i32
    %c0_i32_0 = arith.constant 0 : i32
    %c0_i32_1 = arith.constant 0 : i32
    %c0_i32_2 = arith.constant 0 : i32
    return %c0_i32, %c0_i32_0, %c0_i32_1 : i32, i32, i32
  }
  func.func @transform_3(%arg0: i32) -> (i32, i32, i32) {
    %c0_i32 = arith.constant 0 : i32
    %c0_i32_0 = arith.constant 0 : i32
    %c0_i32_1 = arith.constant 0 : i32
    %c0_i32_2 = arith.constant 0 : i32
    return %c0_i32, %c0_i32_0, %c0_i32_1 : i32, i32, i32
  }
  func.func @transform_4(%arg0: i32) -> (i32, i32, i32) {
    %c0_i32 = arith.constant 0 : i32
    %c0_i32_0 = arith.constant 0 : i32
    %c0_i32_1 = arith.constant 0 : i32
    %c0_i32_2 = arith.constant 0 : i32
    return %c0_i32, %c0_i32_0, %c0_i32_1 : i32, i32, i32
  }
  func.func @transform_5(%arg0: i32) -> (i32, i32, i32) {
    %c0_i32 = arith.constant 0 : i32
    %c0_i32_0 = arith.constant 0 : i32
    %c0_i32_1 = arith.constant 0 : i32
    %c0_i32_2 = arith.constant 0 : i32
    return %c0_i32, %c0_i32_0, %c0_i32_1 : i32, i32, i32
  }
  func.func @transform_6(%arg0: i32) -> (i32, i32, i32) {
    %c0_i32 = arith.constant 0 : i32
    %c0_i32_0 = arith.constant 0 : i32
    %c0_i32_1 = arith.constant 0 : i32
    %c0_i32_2 = arith.constant 0 : i32
    return %c0_i32, %c0_i32_0, %c0_i32_1 : i32, i32, i32
  }
  func.func @transform_7(%arg0: i32) -> (i32, i32, i32) {
    %c0_i32 = arith.constant 0 : i32
    %c0_i32_0 = arith.constant 0 : i32
    %c0_i32_1 = arith.constant 0 : i32
    %c0_i32_2 = arith.constant 0 : i32
    return %c0_i32, %c0_i32_0, %c0_i32_1 : i32, i32, i32
  }
  func.func @transform_8(%arg0: i32) -> (i32, i32, i32) {
    %c0_i32 = arith.constant 0 : i32
    %c0_i32_0 = arith.constant 0 : i32
    %c0_i32_1 = arith.constant 0 : i32
    %c0_i32_2 = arith.constant 0 : i32
    return %c0_i32, %c0_i32_0, %c0_i32_1 : i32, i32, i32
  }
  func.func @transform_9(%arg0: i32) -> (i32, i32, i32) {
    %c0_i32 = arith.constant 0 : i32
    %c0_i32_0 = arith.constant 0 : i32
    %c0_i32_1 = arith.constant 0 : i32
    %c0_i32_2 = arith.constant 0 : i32
    return %c0_i32, %c0_i32_0, %c0_i32_1 : i32, i32, i32
  }
  func.func @transform_10(%arg0: i32) -> (i32, i32, i32) {
    %c0_i32 = arith.constant 0 : i32
    %c0_i32_0 = arith.constant 0 : i32
    %c0_i32_1 = arith.constant 0 : i32
    %c0_i32_2 = arith.constant 0 : i32
    return %c0_i32, %c0_i32_0, %c0_i32_1 : i32, i32, i32
  }
  func.func @transform_11(%arg0: i32) -> (i32, i32, i32) {
    %c0_i32 = arith.constant 0 : i32
    %c0_i32_0 = arith.constant 0 : i32
    %c0_i32_1 = arith.constant 0 : i32
    %c0_i32_2 = arith.constant 0 : i32
    return %c0_i32, %c0_i32_0, %c0_i32_1 : i32, i32, i32
  }
  func.func @transform_12(%arg0: i32) -> (i32, i32) {
    %c0_i32 = arith.constant 0 : i32
    %c0_i32_0 = arith.constant 0 : i32
    %c0_i32_1 = arith.constant 0 : i32
    return %c0_i32, %c0_i32_0 : i32, i32
  }
  func.func @transform_13(%arg0: i32) -> (i32, i32) {
    %c0_i32 = arith.constant 0 : i32
    %c0_i32_0 = arith.constant 0 : i32
    %c0_i32_1 = arith.constant 0 : i32
    return %c0_i32, %c0_i32_0 : i32, i32
  }
  func.func @transform_14(%arg0: i32) -> (i32, i32) {
    %c0_i32 = arith.constant 0 : i32
    %c0_i32_0 = arith.constant 0 : i32
    %c0_i32_1 = arith.constant 0 : i32
    return %c0_i32, %c0_i32_0 : i32, i32
  }
  func.func @transform_15(%arg0: i32) -> (i32, i32) {
    %c0_i32 = arith.constant 0 : i32
    %c0_i32_0 = arith.constant 0 : i32
    %c0_i32_1 = arith.constant 0 : i32
    return %c0_i32, %c0_i32_0 : i32, i32
  }
  func.func @transform_16(%arg0: i32) -> (i32, i32) {
    %c0_i32 = arith.constant 0 : i32
    %c0_i32_0 = arith.constant 0 : i32
    %c0_i32_1 = arith.constant 0 : i32
    return %c0_i32, %c0_i32_0 : i32, i32
  }
}

</mosaic_0001>

<llo_original>
// kernel: tpu_custom_call.1
$region0: #{tpu_custom_call.1}
  #allocation0 [shape = 'u32[]', space=smem, size = 0x4, offset = 0x4, fixed_abs, tag = 'smem constant byte address 0x4 - core index']
  #allocation1 [shape = 'u32[144,128]{1,0:T(1,128)}', space=vmem, size = 0x12000, scoped, tag = 'internal scratch']
  %s0 = inlined_call_operand.vmem [shape: f32[32,64], index: 0, kind: input, shape index: {}]
  %s1 = inlined_call_operand.hbm [shape: f32[2,1,64], index: 1, kind: input, shape index: {}]
  %s2 = inlined_call_operand.vmem [shape: f32[2,1,64], index: 2, kind: input, shape index: {}]
  %s3 = inlined_call_operand.vmem [shape: bf16[2,64,192], index: 3, kind: input, shape index: {}]
  %s4 = inlined_call_operand.vmem [shape: bf16[2,64,64], index: 4, kind: input, shape index: {}]
  %s5 = inlined_call_operand.vmem [shape: f32[2,1,64], index: 5, kind: input, shape index: {}]
  %s6 = inlined_call_operand.vmem [shape: f32[2,1,64], index: 6, kind: input, shape index: {}]
  %s7 = inlined_call_operand.vmem [shape: f32[2,1,64], index: 7, kind: input, shape index: {}]
  %s8 = inlined_call_operand.vmem [shape: bf16[2,64,256], index: 8, kind: input, shape index: {}]
  %s9 = inlined_call_operand.vmem [shape: f32[2,1,256], index: 9, kind: input, shape index: {}]
  %s10 = inlined_call_operand.vmem [shape: bf16[2,256,64], index: 10, kind: input, shape index: {}]
  %s11 = inlined_call_operand.vmem [shape: f32[2,1,64], index: 11, kind: input, shape index: {}]
  %s12 = inlined_call_operand.vmem [shape: f32[1,64], index: 12, kind: input, shape index: {}]
  %s13 = inlined_call_operand.vmem [shape: f32[1,64], index: 13, kind: input, shape index: {}]
  %s14 = inlined_call_operand.vmem [shape: bf16[64,128], index: 14, kind: input, shape index: {}]
  %s15 = inlined_call_operand.vmem [shape: f32[1,128], index: 15, kind: input, shape index: {}]
  %s16 = inlined_call_operand.hbm [shape: f32[32,128], index: 16, kind: output, shape index: {}]
  %s17 = sld [smem:[#allocation0]]
  $region78: #{tpu_custom_call.1} parent=0
    _
  %s19 = ssub.s32 1, %s17
  %s20 = scalar_select 0, %s19, %s17
  $region1: #{tpu_custom_call.1} parent=0
    #allocation2 [shape = 'u8[1024]{0}', space=vmem, size = 0x400, scoped, tag = 'input window, operand 1, single buffered']
    #allocation3 [shape = 's32[1]{0}', space=sflag, size = 0x4, scoped, tag = 'scoped memory for tpu_custom_call.1']
    #allocation4 [shape = 's32[1]{0}', space=sflag, size = 0x4, scoped, tag = 'scoped memory for tpu_custom_call.1']
    #allocation5 [shape = 'u8[16384]{0}', space=vmem, size = 0x4000, scoped, tag = 'output window, operand 0, single buffered']
    %21 = vsyncpa [#allocation3], 0
    %22 = vsyncpa [#allocation4], 0
    // Predicated region
    $region2: #{tpu_custom_call.1} parent=1 // pred_check
      _
    $region3: #{tpu_custom_call.1} parent=1 // pred_check_branch
      %24 = sbr.rel (0) target = $region5
    $region4: #{tpu_custom_call.1} parent=1 // pred_region
      _
    $region5: #{tpu_custom_call.1} parent=1 // pred_fallthru
      _
    // Predicated region
    $region6: #{tpu_custom_call.1} parent=1 // pred_check
      _
    $region7: #{tpu_custom_call.1} parent=1 // pred_check_branch
      %26 = sbr.rel (0) target = $region9
    $region8: #{tpu_custom_call.1} parent=1 // pred_region
      %s28 = ssub.s32 32, 32
      %29 = vsyncadd [#allocation3], %s28
      %s30 = sshll.u32 [#allocation2], 4
      %s31 = int_to_ptr.vmem [resolvable:$true] %s30
      %36 = dma.hbm_to_vmem [thread:$0]  %s1, 32, %s31, [#allocation3], 16, 16, 1
    $region9: #{tpu_custom_call.1} parent=1 // pred_fallthru
      _
    // Predicated region
    $region10: #{tpu_custom_call.1} parent=1 // pred_check
      _
    $region11: #{tpu_custom_call.1} parent=1 // pred_check_branch
      %38 = sbr.rel (0) target = $region13
    $region12: #{tpu_custom_call.1} parent=1 // pred_region
      _
    $region13: #{tpu_custom_call.1} parent=1 // pred_fallthru
      _
    // Predicated region
    $region14: #{tpu_custom_call.1} parent=1 // pred_check
      _
    $region15: #{tpu_custom_call.1} parent=1 // pred_check_branch
      %40 = sbr.rel (0) target = $region17
    $region16: #{tpu_custom_call.1} parent=1 // pred_region
      _
    $region17: #{tpu_custom_call.1} parent=1 // pred_fallthru
      _
    // Predicated region
    $region18: #{tpu_custom_call.1} parent=1 // pred_check
      _
    $region19: #{tpu_custom_call.1} parent=1 // pred_check_branch
      %42 = sbr.rel (0) target = $region21
    $region20: #{tpu_custom_call.1} parent=1 // pred_region
      _
    $region21: #{tpu_custom_call.1} parent=1 // pred_fallthru
      _
    // Predicated region
    $region22: #{tpu_custom_call.1} parent=1 // pred_check
      _
    $region23: #{tpu_custom_call.1} parent=1 // pred_check_branch
      %44 = sbr.rel (0) target = $region25
    $region24: #{tpu_custom_call.1} parent=1 // pred_region
      _
    $region25: #{tpu_custom_call.1} parent=1 // pred_fallthru
      _
    // Predicated region
    $region26: #{tpu_custom_call.1} parent=1 // pred_check
      _
    $region27: #{tpu_custom_call.1} parent=1 // pred_check_branch
      %46 = sbr.rel (0) target = $region29
    $region28: #{tpu_custom_call.1} parent=1 // pred_region
      _
    $region29: #{tpu_custom_call.1} parent=1 // pred_fallthru
      _
    // Predicated region
    $region30: #{tpu_custom_call.1} parent=1 // pred_check
      _
    $region31: #{tpu_custom_call.1} parent=1 // pred_check_branch
      %48 = sbr.rel (0) target = $region33
    $region32: #{tpu_custom_call.1} parent=1 // pred_region
      _
    $region33: #{tpu_custom_call.1} parent=1 // pred_fallthru
      _
    // Predicated region
    $region34: #{tpu_custom_call.1} parent=1 // pred_check
      _
    $region35: #{tpu_custom_call.1} parent=1 // pred_check_branch
      %50 = sbr.rel (0) target = $region37
    $region36: #{tpu_custom_call.1} parent=1 // pred_region
      _
    $region37: #{tpu_custom_call.1} parent=1 // pred_fallthru
      _
    // Predicated region
    $region38: #{tpu_custom_call.1} parent=1 // pred_check
      _
    $region39: #{tpu_custom_call.1} parent=1 // pred_check_branch
      %52 = sbr.rel (0) target = $region41
    $region40: #{tpu_custom_call.1} parent=1 // pred_region
      _
    $region41: #{tpu_custom_call.1} parent=1 // pred_fallthru
      _
    // Predicated region
    $region42: #{tpu_custom_call.1} parent=1 // pred_check
      _
    $region43: #{tpu_custom_call.1} parent=1 // pred_check_branch
      %54 = sbr.rel (0) target = $region45
    $region44: #{tpu_custom_call.1} parent=1 // pred_region
      _
    $region45: #{tpu_custom_call.1} parent=1 // pred_fallthru
      _
    // Predicated region
    $region46: #{tpu_custom_call.1} parent=1 // pred_check
      _
    $region47: #{tpu_custom_call.1} parent=1 // pred_check_branch
      %56 = sbr.rel (0) target = $region49
    $region48: #{tpu_custom_call.1} parent=1 // pred_region
      _
    $region49: #{tpu_custom_call.1} parent=1 // pred_fallthru
      _
    // Predicated region
    $region50: #{tpu_custom_call.1} parent=1 // pred_check
      _
    $region51: #{tpu_custom_call.1} parent=1 // pred_check_branch
      %58 = sbr.rel (0) target = $region53
    $region52: #{tpu_custom_call.1} parent=1 // pred_region
      _
    $region53: #{tpu_custom_call.1} parent=1 // pred_fallthru
      _
    // Predicated region
    $region54: #{tpu_custom_call.1} parent=1 // pred_check
      _
    $region55: #{tpu_custom_call.1} parent=1 // pred_check_branch
      %60 = sbr.rel (0) target = $region57
    $region56: #{tpu_custom_call.1} parent=1 // pred_region
      _
    $region57: #{tpu_custom_call.1} parent=1 // pred_fallthru
      _
    // Predicated region
    $region58: #{tpu_custom_call.1} parent=1 // pred_check
      _
    $region59: #{tpu_custom_call.1} parent=1 // pred_check_branch
      %62 = sbr.rel (0) target = $region61
    $region60: #{tpu_custom_call.1} parent=1 // pred_region
      _
    $region61: #{tpu_custom_call.1} parent=1 // pred_fallthru
      _
    // Predicated region
    $region62: #{tpu_custom_call.1} parent=1 // pred_check
      _
    $region63: #{tpu_custom_call.1} parent=1 // pred_check_branch
      %64 = sbr.rel (0) target = $region65
    $region64: #{tpu_custom_call.1} parent=1 // pred_region
      _
    $region65: #{tpu_custom_call.1} parent=1 // pred_fallthru
      _
    // Predicated region
    $region66: #{tpu_custom_call.1} parent=1 // pred_check
      _
    $region67: #{tpu_custom_call.1} parent=1 // pred_check_branch
      %66 = sbr.rel (0) target = $region69
    $region68: #{tpu_custom_call.1} parent=1 // pred_region
      %67 = dma.done [#allocation3], 32
    $region69: #{tpu_custom_call.1} parent=1 // pred_fallthru
      _
    %v69 = vld [vmem:[%s0] sm:$0xff]
    %v70 = vld [vmem:[%s0 + $0x8] sm:$0xff]
    %v71 = vld [vmem:[%s0 + $0x10] sm:$0xff]
    %v72 = vld [vmem:[%s0 + $0x18] sm:$0xff]
    %v73 = vlaneseq
    %v74 = vshrl.u32 %v73, 7
    %v75 = vadd.s32 %v74, 8
    %v76 = vlaneseq
    %v77 = vand.u32 %v76, 127
    %vm78 = vcmp.le.s32.totalorder %v77, %v74
    %vm79 = vcmp.le.s32.totalorder %v77, %v75
    %v80 = vsel %vm78, 0.0, -1e+30
    %v81 = vsel %vm79, 0.0, -1e+30
    %v82 = vld [vmem:[#allocation2] sm:$0x1]
    %v83 = vld [vmem:[%s2] sm:$0x1]
    %vm84 = vcmask 523264
    %v85 = vsel %vm84, %v69, 0.0
    %86 = vadd.xlane.f32.xlu0 %v85
    %v87 = vpop.xlane.xlu0 %86
    %v88 = vsel %vm84, %v70, 0.0
    %89 = vadd.xlane.f32.xlu0 %v88
    %v90 = vpop.xlane.xlu0 %89
    %v91 = vsel %vm84, %v71, 0.0
    %92 = vadd.xlane.f32.xlu0 %v91
    %v93 = vpop.xlane.xlu0 %92
    %v94 = vsel %vm84, %v72, 0.0
    %95 = vadd.xlane.f32.xlu0 %v94
    %v96 = vpop.xlane.xlu0 %95
    %v97 = vrcp.pop 64.0
    %v98 = vmul.f32 %v87, %v97
    %v99 = vmul.f32 %v90, %v97
    %v100 = vmul.f32 %v93, %v97
    %v101 = vmul.f32 %v96, %v97
    %v102 = vsub.f32 %v69, %v98
    %v103 = vsub.f32 %v70, %v99
    %v104 = vsub.f32 %v71, %v100
    %v105 = vsub.f32 %v72, %v101
    %v106 = vmul.f32 %v102, %v102
    %v107 = vmul.f32 %v103, %v103
    %v108 = vmul.f32 %v104, %v104
    %v109 = vmul.f32 %v105, %v105
    %v110 = vsel %vm84, %v106, 0.0
    %111 = vadd.xlane.f32.xlu0 %v110
    %v112 = vpop.xlane.xlu0 %111
    %v113 = vsel %vm84, %v107, 0.0
    %114 = vadd.xlane.f32.xlu0 %v113
    %v115 = vpop.xlane.xlu0 %114
    %v116 = vsel %vm84, %v108, 0.0
    %117 = vadd.xlane.f32.xlu0 %v116
    %v118 = vpop.xlane.xlu0 %117
    %v119 = vsel %vm84, %v109, 0.0
    %120 = vadd.xlane.f32.xlu0 %v119
    %v121 = vpop.xlane.xlu0 %120
    %v122 = vmul.f32 %v112, %v97
    %v123 = vmul.f32 %v115, %v97
    %v124 = vmul.f32 %v118, %v97
    %v125 = vmul.f32 %v121, %v97
    %v126 = vadd.f32 %v122, 1e-05
    %v127 = vadd.f32 %v123, 1e-05
    %v128 = vadd.f32 %v124, 1e-05
    %v129 = vadd.f32 %v125, 1e-05
    %v130 = vrsqrt.pop %v126
    %v131 = vrsqrt.pop %v127
    %v132 = vrsqrt.pop %v128
    %v133 = vrsqrt.pop %v129
    %v134 = vmul.f32 %v102, %v130
    %v135 = vmul.f32 %v103, %v131
    %v136 = vmul.f32 %v104, %v132
    %v137 = vmul.f32 %v105, %v133
    %v139 = vlaneseq
    %v140 = vshrl.u32 %v139, 7
    %v141 = vsub.s32 0, %v140
    %v142 = vrot.slane %v82, %v141
    %v144 = vmul.f32 %v134, %v142
    %v145 = vmul.f32 %v135, %v142
    %v146 = vmul.f32 %v136, %v142
    %v147 = vmul.f32 %v137, %v142
    %v149 = vlaneseq
    %v150 = vshrl.u32 %v149, 7
    %v151 = vsub.s32 0, %v150
    %v152 = vrot.slane %v83, %v151
    %v154 = vadd.f32 %v144, %v152
    %v155 = vadd.f32 %v145, %v152
    %v156 = vadd.f32 %v146, %v152
    %v157 = vadd.f32 %v147, %v152
    %v158 = vpack.c.bf16 %v155, %v154
    %v159 = vpack.c.bf16 %v157, %v156
    %v160 = vld [vmem:[%s3] sm:$0xff]
    %v161 = vld [vmem:[%s3 + $0x8] sm:$0xff]
    %v162 = vld [vmem:[%s3 + $0x10] sm:$0xff]
    %v163 = vld [vmem:[%s3 + $0x18] sm:$0xff]
    %v164 = vld [vmem:[%s3 + $0x20] sm:$0xff]
    %v165 = vld [vmem:[%s3 + $0x28] sm:$0xff]
    %v166 = vld [vmem:[%s3 + $0x30] sm:$0xff]
    %v167 = vld [vmem:[%s3 + $0x38] sm:$0xff]
    %v176 = vunpack.c.l.b16 %v160
    %v177 = vunpack.c.h.b16 %v160
    %v178 = vunpack.c.l.b16 %v161
    %v179 = vunpack.c.h.b16 %v161
    %v180 = vunpack.c.l.b16 %v162
    %v181 = vunpack.c.h.b16 %v162
    %v182 = vunpack.c.l.b16 %v163
    %v183 = vunpack.c.h.b16 %v163
    %v184 = vunpack.c.l.b16 %v164
    %v185 = vunpack.c.h.b16 %v164
    %v186 = vunpack.c.l.b16 %v165
    %v187 = vunpack.c.h.b16 %v165
    %v188 = vunpack.c.l.b16 %v166
    %v189 = vunpack.c.h.b16 %v166
    %v190 = vunpack.c.l.b16 %v167
    %v191 = vunpack.c.h.b16 %v167
    %v192 = vpack.c.b16 %v178, %v176
    %v193 = vpack.c.b16 %v179, %v177
    %v194 = vpack.c.b16 %v182, %v180
    %v195 = vpack.c.b16 %v183, %v181
    %v196 = vpack.c.b16 %v186, %v184
    %v197 = vpack.c.b16 %v187, %v185
    %v198 = vpack.c.b16 %v190, %v188
    %v199 = vpack.c.b16 %v191, %v189
    %v209 = vsel %vm84, %v158, 0
    %v212 = vsel %vm84, %v159, 0
    %214 = vmatprep.subr.bf16.mxu0 %v193
    %215 = vmatpush1.bf16.msra.mxu0 %v192
    %216 = vmatprep.subr.bf16.mxu0 %v195
    %217 = vmatpush1.bf16.msra.mxu0 %v194
    %218 = vmatprep.subr.bf16.mxu0 %v197
    %219 = vmatpush1.bf16.msra.mxu0 %v196
    %220 = vmatprep.subr.bf16.mxu0 %v199
    %221 = vmatpush1.bf16.msra.mxu0 %v198
    %222 = vmatprep.subr.bf16.mxu0 0
    %223 = vmatpush1.bf16.msra.mxu0 0
    %224 = vmatprep.subr.bf16.mxu0 0
    %225 = vmatpush1.bf16.msra.mxu0 0
    %226 = vmatprep.subr.bf16.mxu0 0
    %227 = vmatpush1.bf16.msra.mxu0 0
    %228 = vmatprep.subr.bf16.mxu0 0
    %229 = vmatpush1.bf16.msra.mxu0 0
    %230 = vmatprep.subr.bf16.mxu0 0
    %231 = vmatpush1.bf16.msra.mxu0 0
    %232 = vmatprep.subr.bf16.mxu0 0
    %233 = vmatpush1.bf16.msra.mxu0 0
    %234 = vmatprep.subr.bf16.mxu0 0
    %235 = vmatpush1.bf16.msra.mxu0 0
    %236 = vmatprep.subr.bf16.mxu0 0
    %237 = vmatpush1.bf16.msra.mxu0 0
    %238 = vmatprep.subr.bf16.mxu0 0
    %239 = vmatpush1.bf16.msra.mxu0 0
    %240 = vmatprep.subr.bf16.mxu0 0
    %241 = vmatpush1.bf16.msra.mxu0 0
    %242 = vmatprep.subr.bf16.mxu0 0
    %243 = vmatpush1.bf16.msra.mxu0 0
    %244 = vmatprep.subr.bf16.mxu0 0
    %245 = vmatpush1.bf16.msra.mxu0 0
    %246 = vmatprep.mubr.bf16.mxu0 0
    %247 = vmatmul.mubr.bf16.gmra.mrb[0].mxu0 %v209
    %v248 = vpop.f32.mrb[0].mxu0
    %v249 = vadd.f32 0.0, %v248
    %v250 = vpop.f32.mrb[0].mxu0
    %v251 = vadd.f32 0.0, %v250
    %v252 = vpop.f32.mrb[0].mxu0
    %v253 = vadd.f32 0.0, %v252
    %v254 = vpop.f32.mrb[0].mxu0
    %v255 = vadd.f32 0.0, %v254
    %256 = vmatprep.mubr.bf16.mxu0 0
    %257 = vmatmul.mubr.bf16.gmra.mrb[0].mxu0 %v212
    %v258 = vpop.f32.mrb[0].mxu0
    %v259 = vadd.f32 0.0, %v258
    %v260 = vpop.f32.mrb[0].mxu0
    %v261 = vadd.f32 0.0, %v260
    %v262 = vpop.f32.mrb[0].mxu0
    %v263 = vadd.f32 0.0, %v262
    %v264 = vpop.f32.mrb[0].mxu0
    %v265 = vadd.f32 0.0, %v264
    %266 = vdwg.mxu0
    %v267 = vpack.c.bf16 %v253, %v249
    %v268 = vpack.c.bf16 %v255, %v251
    %v269 = vpack.c.bf16 %v263, %v259
    %v270 = vpack.c.bf16 %v265, %v261
    %272 = vrot.lane.b32.xlu0 %v267, 112
    %v273 = vpop.permute.xlu0 %272
    %274 = vrot.lane.b32.xlu0 %v267, 96
    %v275 = vpop.permute.xlu0 %274
    %276 = vrot.lane.b32.xlu0 %v267, 80
    %v277 = vpop.permute.xlu0 %276
    %279 = vrot.lane.b32.xlu0 %v269, 112
    %v280 = vpop.permute.xlu0 %279
    %281 = vrot.lane.b32.xlu0 %v269, 96
    %v282 = vpop.permute.xlu0 %281
    %283 = vrot.lane.b32.xlu0 %v269, 80
    %v284 = vpop.permute.xlu0 %283
    %286 = vrot.lane.b32.xlu0 %v268, 112
    %v287 = vpop.permute.xlu0 %286
    %289 = vrot.lane.b32.xlu0 %v268, 96
    %v290 = vpop.permute.xlu0 %289
    %292 = vrot.lane.b32.xlu0 %v268, 80
    %v293 = vpop.permute.xlu0 %292
    %296 = vrot.lane.b32.xlu0 %v270, 112
    %v297 = vpop.permute.xlu0 %296
    %299 = vrot.lane.b32.xlu0 %v270, 96
    %v300 = vpop.permute.xlu0 %299
    %302 = vrot.lane.b32.xlu0 %v270, 80
    %v303 = vpop.permute.xlu0 %302
    %305 = vrot.lane.b32.xlu0 %v267, 64
    %v306 = vpop.permute.xlu0 %305
    %vm307 = vcmask 130048
    %v309 = vsel %vm307, %v267, 0
    %v312 = vsel %vm307, %v306, 0
    %314 = vmatprep.subr.bf16.mxu0 0
    %315 = vmatpush1.bf16.xpose.msra.mxu0 %v312
    %316 = vmatprep.subr.bf16.mxu0 0
    %317 = vmatpush1.bf16.xpose.msra.mxu0 0
    %318 = vmatprep.subr.bf16.mxu0 0
    %319 = vmatpush1.bf16.xpose.msra.mxu0 0
    %320 = vmatprep.subr.bf16.mxu0 0
    %321 = vmatpush1.bf16.xpose.msra.mxu0 0
    %322 = vmatprep.subr.bf16.mxu0 0
    %323 = vmatpush1.bf16.xpose.msra.mxu0 0
    %324 = vmatprep.subr.bf16.mxu0 0
    %325 = vmatpush1.bf16.xpose.msra.mxu0 0
    %326 = vmatprep.subr.bf16.mxu0 0
    %327 = vmatpush1.bf16.xpose.msra.mxu0 0
    %328 = vmatprep.subr.bf16.mxu0 0
    %329 = vmatpush1.bf16.xpose.msra.mxu0 0
    %330 = vmatprep.subr.bf16.mxu0 0
    %331 = vmatpush1.bf16.xpose.msra.mxu0 0
    %332 = vmatprep.subr.bf16.mxu0 0
    %333 = vmatpush1.bf16.xpose.msra.mxu0 0
    %334 = vmatprep.subr.bf16.mxu0 0
    %335 = vmatpush1.bf16.xpose.msra.mxu0 0
    %336 = vmatprep.subr.bf16.mxu0 0
    %337 = vmatpush1.bf16.xpose.msra.mxu0 0
    %338 = vmatprep.subr.bf16.mxu0 0
    %339 = vmatpush1.bf16.xpose.msra.mxu0 0
    %340 = vmatprep.subr.bf16.mxu0 0
    %341 = vmatpush1.bf16.xpose.msra.mxu0 0
    %342 = vmatprep.subr.bf16.mxu0 0
    %343 = vmatpush1.bf16.xpose.msra.mxu0 0
    %344 = vmatprep.subr.bf16.mxu0 0
    %345 = vmatpush1.bf16.xpose.msra.mxu0 0
    %346 = vmatprep.mubr.bf16.mxu0 0
    %347 = vmatmul.mubr.bf16.gmra.mrb[0].mxu0 %v309
    %v348 = vpop.f32.mrb[0].mxu0
    %v349 = vadd.f32 %v80, %v348
    %v350 = vpop.f32.mrb[0].mxu0
    %v351 = vpop.f32.mrb[0].mxu0
    %v352 = vadd.f32 %v81, %v351
    %v353 = vpop.f32.mrb[0].mxu0
    %354 = vdwg.mxu0
    %355 = vrot.lane.b32.xlu0 %v273, 64
    %v356 = vpop.permute.xlu0 %355
    %v358 = vsel %vm307, %v273, 0
    %v361 = vsel %vm307, %v356, 0
    %363 = vmatprep.subr.bf16.mxu0 0
    %364 = vmatpush1.bf16.xpose.msra.mxu0 %v361
    %365 = vmatprep.subr.bf16.mxu0 0
    %366 = vmatpush1.bf16.xpose.msra.mxu0 0
    %367 = vmatprep.subr.bf16.mxu0 0
    %368 = vmatpush1.bf16.xpose.msra.mxu0 0
    %369 = vmatprep.subr.bf16.mxu0 0
    %370 = vmatpush1.bf16.xpose.msra.mxu0 0
    %371 = vmatprep.subr.bf16.mxu0 0
    %372 = vmatpush1.bf16.xpose.msra.mxu0 0
    %373 = vmatprep.subr.bf16.mxu0 0
    %374 = vmatpush1.bf16.xpose.msra.mxu0 0
    %375 = vmatprep.subr.bf16.mxu0 0
    %376 = vmatpush1.bf16.xpose.msra.mxu0 0
    %377 = vmatprep.subr.bf16.mxu0 0
    %378 = vmatpush1.bf16.xpose.msra.mxu0 0
    %379 = vmatprep.subr.bf16.mxu0 0
    %380 = vmatpush1.bf16.xpose.msra.mxu0 0
    %381 = vmatprep.subr.bf16.mxu0 0
    %382 = vmatpush1.bf16.xpose.msra.mxu0 0
    %383 = vmatprep.subr.bf16.mxu0 0
    %384 = vmatpush1.bf16.xpose.msra.mxu0 0
    %385 = vmatprep.subr.bf16.mxu0 0
    %386 = vmatpush1.bf16.xpose.msra.mxu0 0
    %387 = vmatprep.subr.bf16.mxu0 0
    %388 = vmatpush1.bf16.xpose.msra.mxu0 0
    %389 = vmatprep.subr.bf16.mxu0 0
    %390 = vmatpush1.bf16.xpose.msra.mxu0 0
    %391 = vmatprep.subr.bf16.mxu0 0
    %392 = vmatpush1.bf16.xpose.msra.mxu0 0
    %393 = vmatprep.subr.bf16.mxu0 0
    %394 = vmatpush1.bf16.xpose.msra.mxu0 0
    %395 = vmatprep.mubr.bf16.mxu0 0
    %396 = vmatmul.mubr.bf16.gmra.mrb[0].mxu0 %v358
    %v397 = vpop.f32.mrb[0].mxu0
    %v398 = vadd.f32 %v80, %v397
    %v399 = vpop.f32.mrb[0].mxu0
    %v400 = vpop.f32.mrb[0].mxu0
    %v401 = vadd.f32 %v81, %v400
    %v402 = vpop.f32.mrb[0].mxu0
    %403 = vdwg.mxu0
    %404 = vrot.lane.b32.xlu0 %v275, 64
    %v405 = vpop.permute.xlu0 %404
    %v407 = vsel %vm307, %v275, 0
    %v410 = vsel %vm307, %v405, 0
    %412 = vmatprep.subr.bf16.mxu0 0
    %413 = vmatpush1.bf16.xpose.msra.mxu0 %v410
    %414 = vmatprep.subr.bf16.mxu0 0
    %415 = vmatpush1.bf16.xpose.msra.mxu0 0
    %416 = vmatprep.subr.bf16.mxu0 0
    %417 = vmatpush1.bf16.xpose.msra.mxu0 0
    %418 = vmatprep.subr.bf16.mxu0 0
    %419 = vmatpush1.bf16.xpose.msra.mxu0 0
    %420 = vmatprep.subr.bf16.mxu0 0
    %421 = vmatpush1.bf16.xpose.msra.mxu0 0
    %422 = vmatprep.subr.bf16.mxu0 0
    %423 = vmatpush1.bf16.xpose.msra.mxu0 0
    %424 = vmatprep.subr.bf16.mxu0 0
    %425 = vmatpush1.bf16.xpose.msra.mxu0 0
    %426 = vmatprep.subr.bf16.mxu0 0
    %427 = vmatpush1.bf16.xpose.msra.mxu0 0
    %428 = vmatprep.subr.bf16.mxu0 0
    %429 = vmatpush1.bf16.xpose.msra.mxu0 0
    %430 = vmatprep.subr.bf16.mxu0 0
    %431 = vmatpush1.bf16.xpose.msra.mxu0 0
    %432 = vmatprep.subr.bf16.mxu0 0
    %433 = vmatpush1.bf16.xpose.msra.mxu0 0
    %434 = vmatprep.subr.bf16.mxu0 0
    %435 = vmatpush1.bf16.xpose.msra.mxu0 0
    %436 = vmatprep.subr.bf16.mxu0 0
    %437 = vmatpush1.bf16.xpose.msra.mxu0 0
    %438 = vmatprep.subr.bf16.mxu0 0
    %439 = vmatpush1.bf16.xpose.msra.mxu0 0
    %440 = vmatprep.subr.bf16.mxu0 0
    %441 = vmatpush1.bf16.xpose.msra.mxu0 0
    %442 = vmatprep.subr.bf16.mxu0 0
    %443 = vmatpush1.bf16.xpose.msra.mxu0 0
    %444 = vmatprep.mubr.bf16.mxu0 0
    %445 = vmatmul.mubr.bf16.gmra.mrb[0].mxu0 %v407
    %v446 = vpop.f32.mrb[0].mxu0
    %v447 = vadd.f32 %v80, %v446
    %v448 = vpop.f32.mrb[0].mxu0
    %v449 = vpop.f32.mrb[0].mxu0
    %v450 = vadd.f32 %v81, %v449
    %v451 = vpop.f32.mrb[0].mxu0
    %452 = vdwg.mxu0
    %453 = vrot.lane.b32.xlu0 %v277, 64
    %v454 = vpop.permute.xlu0 %453
    %v456 = vsel %vm307, %v277, 0
    %v459 = vsel %vm307, %v454, 0
    %461 = vmatprep.subr.bf16.mxu0 0
    %462 = vmatpush1.bf16.xpose.msra.mxu0 %v459
    %463 = vmatprep.subr.bf16.mxu0 0
    %464 = vmatpush1.bf16.xpose.msra.mxu0 0
    %465 = vmatprep.subr.bf16.mxu0 0
    %466 = vmatpush1.bf16.xpose.msra.mxu0 0
    %467 = vmatprep.subr.bf16.mxu0 0
    %468 = vmatpush1.bf16.xpose.msra.mxu0 0
    %469 = vmatprep.subr.bf16.mxu0 0
    %470 = vmatpush1.bf16.xpose.msra.mxu0 0
    %471 = vmatprep.subr.bf16.mxu0 0
    %472 = vmatpush1.bf16.xpose.msra.mxu0 0
    %473 = vmatprep.subr.bf16.mxu0 0
    %474 = vmatpush1.bf16.xpose.msra.mxu0 0
    %475 = vmatprep.subr.bf16.mxu0 0
    %476 = vmatpush1.bf16.xpose.msra.mxu0 0
    %477 = vmatprep.subr.bf16.mxu0 0
    %478 = vmatpush1.bf16.xpose.msra.mxu0 0
    %479 = vmatprep.subr.bf16.mxu0 0
    %480 = vmatpush1.bf16.xpose.msra.mxu0 0
    %481 = vmatprep.subr.bf16.mxu0 0
    %482 = vmatpush1.bf16.xpose.msra.mxu0 0
    %483 = vmatprep.subr.bf16.mxu0 0
    %484 = vmatpush1.bf16.xpose.msra.mxu0 0
    %485 = vmatprep.subr.bf16.mxu0 0
    %486 = vmatpush1.bf16.xpose.msra.mxu0 0
    %487 = vmatprep.subr.bf16.mxu0 0
    %488 = vmatpush1.bf16.xpose.msra.mxu0 0
    %489 = vmatprep.subr.bf16.mxu0 0
    %490 = vmatpush1.bf16.xpose.msra.mxu0 0
    %491 = vmatprep.subr.bf16.mxu0 0
    %492 = vmatpush1.bf16.xpose.msra.mxu0 0
    %493 = vmatprep.mubr.bf16.mxu0 0
    %494 = vmatmul.mubr.bf16.gmra.mrb[0].mxu0 %v456
    %v495 = vpop.f32.mrb[0].mxu0
    %v496 = vadd.f32 %v80, %v495
    %v497 = vpop.f32.mrb[0].mxu0
    %v498 = vpop.f32.mrb[0].mxu0
    %v499 = vadd.f32 %v81, %v498
    %v500 = vpop.f32.mrb[0].mxu0
    %501 = vdwg.mxu0
    %502 = vrot.lane.b32.xlu0 %v269, 64
    %v503 = vpop.permute.xlu0 %502
    %v505 = vsel %vm307, %v269, 0
    %v508 = vsel %vm307, %v503, 0
    %510 = vmatprep.subr.bf16.mxu0 0
    %511 = vmatpush1.bf16.xpose.msra.mxu0 %v508
    %512 = vmatprep.subr.bf16.mxu0 0
    %513 = vmatpush1.bf16.xpose.msra.mxu0 0
    %514 = vmatprep.subr.bf16.mxu0 0
    %515 = vmatpush1.bf16.xpose.msra.mxu0 0
    %516 = vmatprep.subr.bf16.mxu0 0
    %517 = vmatpush1.bf16.xpose.msra.mxu0 0
    %518 = vmatprep.subr.bf16.mxu0 0
    %519 = vmatpush1.bf16.xpose.msra.mxu0 0
    %520 = vmatprep.subr.bf16.mxu0 0
    %521 = vmatpush1.bf16.xpose.msra.mxu0 0
    %522 = vmatprep.subr.bf16.mxu0 0
    %523 = vmatpush1.bf16.xpose.msra.mxu0 0
    %524 = vmatprep.subr.bf16.mxu0 0
    %525 = vmatpush1.bf16.xpose.msra.mxu0 0
    %526 = vmatprep.subr.bf16.mxu0 0
    %527 = vmatpush1.bf16.xpose.msra.mxu0 0
    %528 = vmatprep.subr.bf16.mxu0 0
    %529 = vmatpush1.bf16.xpose.msra.mxu0 0
    %530 = vmatprep.subr.bf16.mxu0 0
    %531 = vmatpush1.bf16.xpose.msra.mxu0 0
    %532 = vmatprep.subr.bf16.mxu0 0
    %533 = vmatpush1.bf16.xpose.msra.mxu0 0
    %534 = vmatprep.subr.bf16.mxu0 0
    %535 = vmatpush1.bf16.xpose.msra.mxu0 0
    %536 = vmatprep.subr.bf16.mxu0 0
    %537 = vmatpush1.bf16.xpose.msra.mxu0 0
    %538 = vmatprep.subr.bf16.mxu0 0
    %539 = vmatpush1.bf16.xpose.msra.mxu0 0
    %540 = vmatprep.subr.bf16.mxu0 0
    %541 = vmatpush1.bf16.xpose.msra.mxu0 0
    %542 = vmatprep.mubr.bf16.mxu0 0
    %543 = vmatmul.mubr.bf16.gmra.mrb[0].mxu0 %v505
    %v544 = vpop.f32.mrb[0].mxu0
    %v545 = vadd.f32 %v80, %v544
    %v546 = vpop.f32.mrb[0].mxu0
    %v547 = vpop.f32.mrb[0].mxu0
    %v548 = vadd.f32 %v81, %v547
    %v549 = vpop.f32.mrb[0].mxu0
    %550 = vdwg.mxu0
    %551 = vrot.lane.b32.xlu0 %v280, 64
    %v552 = vpop.permute.xlu0 %551
    %v554 = vsel %vm307, %v280, 0
    %v557 = vsel %vm307, %v552, 0
    %559 = vmatprep.subr.bf16.mxu0 0
    %560 = vmatpush1.bf16.xpose.msra.mxu0 %v557
    %561 = vmatprep.subr.bf16.mxu0 0
    %562 = vmatpush1.bf16.xpose.msra.mxu0 0
    %563 = vmatprep.subr.bf16.mxu0 0
    %564 = vmatpush1.bf16.xpose.msra.mxu0 0
    %565 = vmatprep.subr.bf16.mxu0 0
    %566 = vmatpush1.bf16.xpose.msra.mxu0 0
    %567 = vmatprep.subr.bf16.mxu0 0
    %568 = vmatpush1.bf16.xpose.msra.mxu0 0
    %569 = vmatprep.subr.bf16.mxu0 0
    %570 = vmatpush1.bf16.xpose.msra.mxu0 0
    %571 = vmatprep.subr.bf16.mxu0 0
    %572 = vmatpush1.bf16.xpose.msra.mxu0 0
    %573 = vmatprep.subr.bf16.mxu0 0
    %574 = vmatpush1.bf16.xpose.msra.mxu0 0
    %575 = vmatprep.subr.bf16.mxu0 0
    %576 = vmatpush1.bf16.xpose.msra.mxu0 0
    %577 = vmatprep.subr.bf16.mxu0 0
    %578 = vmatpush1.bf16.xpose.msra.mxu0 0
    %579 = vmatprep.subr.bf16.mxu0 0
    %580 = vmatpush1.bf16.xpose.msra.mxu0 0
    %581 = vmatprep.subr.bf16.mxu0 0
    %582 = vmatpush1.bf16.xpose.msra.mxu0 0
    %583 = vmatprep.subr.bf16.mxu0 0
    %584 = vmatpush1.bf16.xpose.msra.mxu0 0
    %585 = vmatprep.subr.bf16.mxu0 0
    %586 = vmatpush1.bf16.xpose.msra.mxu0 0
    %587 = vmatprep.subr.bf16.mxu0 0
    %588 = vmatpush1.bf16.xpose.msra.mxu0 0
    %589 = vmatprep.subr.bf16.mxu0 0
    %590 = vmatpush1.bf16.xpose.msra.mxu0 0
    %591 = vmatprep.mubr.bf16.mxu0 0
    %592 = vmatmul.mubr.bf16.gmra.mrb[0].mxu0 %v554
    %v593 = vpop.f32.mrb[0].mxu0
    %v594 = vadd.f32 %v80, %v593
    %v595 = vpop.f32.mrb[0].mxu0
    %v596 = vpop.f32.mrb[0].mxu0
    %v597 = vadd.f32 %v81, %v596
    %v598 = vpop.f32.mrb[0].mxu0
    %599 = vdwg.mxu0
    %600 = vrot.lane.b32.xlu0 %v282, 64
    %v601 = vpop.permute.xlu0 %600
    %v603 = vsel %vm307, %v282, 0
    %v606 = vsel %vm307, %v601, 0
    %608 = vmatprep.subr.bf16.mxu0 0
    %609 = vmatpush1.bf16.xpose.msra.mxu0 %v606
    %610 = vmatprep.subr.bf16.mxu0 0
    %611 = vmatpush1.bf16.xpose.msra.mxu0 0
    %612 = vmatprep.subr.bf16.mxu0 0
    %613 = vmatpush1.bf16.xpose.msra.mxu0 0
    %614 = vmatprep.subr.bf16.mxu0 0
    %615 = vmatpush1.bf16.xpose.msra.mxu0 0
    %616 = vmatprep.subr.bf16.mxu0 0
    %617 = vmatpush1.bf16.xpose.msra.mxu0 0
    %618 = vmatprep.subr.bf16.mxu0 0
    %619 = vmatpush1.bf16.xpose.msra.mxu0 0
    %620 = vmatprep.subr.bf16.mxu0 0
    %621 = vmatpush1.bf16.xpose.msra.mxu0 0
    %622 = vmatprep.subr.bf16.mxu0 0
    %623 = vmatpush1.bf16.xpose.msra.mxu0 0
    %624 = vmatprep.subr.bf16.mxu0 0
    %625 = vmatpush1.bf16.xpose.msra.mxu0 0
    %626 = vmatprep.subr.bf16.mxu0 0
    %627 = vmatpush1.bf16.xpose.msra.mxu0 0
    %628 = vmatprep.subr.bf16.mxu0 0
    %629 = vmatpush1.bf16.xpose.msra.mxu0 0
    %630 = vmatprep.subr.bf16.mxu0 0
    %631 = vmatpush1.bf16.xpose.msra.mxu0 0
    %632 = vmatprep.subr.bf16.mxu0 0
    %633 = vmatpush1.bf16.xpose.msra.mxu0 0
    %634 = vmatprep.subr.bf16.mxu0 0
    %635 = vmatpush1.bf16.xpose.msra.mxu0 0
    %636 = vmatprep.subr.bf16.mxu0 0
    %637 = vmatpush1.bf16.xpose.msra.mxu0 0
    %638 = vmatprep.subr.bf16.mxu0 0
    %639 = vmatpush1.bf16.xpose.msra.mxu0 0
    %640 = vmatprep.mubr.bf16.mxu0 0
    %641 = vmatmul.mubr.bf16.gmra.mrb[0].mxu0 %v603
    %v642 = vpop.f32.mrb[0].mxu0
    %v643 = vadd.f32 %v80, %v642
    %v644 = vpop.f32.mrb[0].mxu0
    %v645 = vpop.f32.mrb[0].mxu0
    %v646 = vadd.f32 %v81, %v645
    %v647 = vpop.f32.mrb[0].mxu0
    %648 = vdwg.mxu0
    %649 = vrot.lane.b32.xlu0 %v284, 64
    %v650 = vpop.permute.xlu0 %649
    %v652 = vsel %vm307, %v284, 0
    %v655 = vsel %vm307, %v650, 0
    %657 = vmatprep.subr.bf16.mxu0 0
    %658 = vmatpush1.bf16.xpose.msra.mxu0 %v655
    %659 = vmatprep.subr.bf16.mxu0 0
    %660 = vmatpush1.bf16.xpose.msra.mxu0 0
    %661 = vmatprep.subr.bf16.mxu0 0
    %662 = vmatpush1.bf16.xpose.msra.mxu0 0
    %663 = vmatprep.subr.bf16.mxu0 0
    %664 = vmatpush1.bf16.xpose.msra.mxu0 0
    %665 = vmatprep.subr.bf16.mxu0 0
    %666 = vmatpush1.bf16.xpose.msra.mxu0 0
    %667 = vmatprep.subr.bf16.mxu0 0
    %668 = vmatpush1.bf16.xpose.msra.mxu0 0
    %669 = vmatprep.subr.bf16.mxu0 0
    %670 = vmatpush1.bf16.xpose.msra.mxu0 0
    %671 = vmatprep.subr.bf16.mxu0 0
    %672 = vmatpush1.bf16.xpose.msra.mxu0 0
    %673 = vmatprep.subr.bf16.mxu0 0
    %674 = vmatpush1.bf16.xpose.msra.mxu0 0
    %675 = vmatprep.subr.bf16.mxu0 0
    %676 = vmatpush1.bf16.xpose.msra.mxu0 0
    %677 = vmatprep.subr.bf16.mxu0 0
    %678 = vmatpush1.bf16.xpose.msra.mxu0 0
    %679 = vmatprep.subr.bf16.mxu0 0
    %680 = vmatpush1.bf16.xpose.msra.mxu0 0
    %681 = vmatprep.subr.bf16.mxu0 0
    %682 = vmatpush1.bf16.xpose.msra.mxu0 0
    %683 = vmatprep.subr.bf16.mxu0 0
    %684 = vmatpush1.bf16.xpose.msra.mxu0 0
    %685 = vmatprep.subr.bf16.mxu0 0
    %686 = vmatpush1.bf16.xpose.msra.mxu0 0
    %687 = vmatprep.subr.bf16.mxu0 0
    %688 = vmatpush1.bf16.xpose.msra.mxu0 0
    %689 = vmatprep.mubr.bf16.mxu0 0
    %690 = vmatmul.mubr.bf16.gmra.mrb[0].mxu0 %v652
    %v691 = vpop.f32.mrb[0].mxu0
    %v692 = vadd.f32 %v80, %v691
    %v693 = vpop.f32.mrb[0].mxu0
    %v694 = vpop.f32.mrb[0].mxu0
    %v695 = vadd.f32 %v81, %v694
    %v696 = vpop.f32.mrb[0].mxu0
    %697 = vdwg.mxu0
    %v698 = vsel %vm307, %v349, -inf
    %699 = vmax.xlane.f32.xlu0 %v698
    %v700 = vpop.xlane.xlu0 %699
    %v701 = vsel %vm307, %v352, -inf
    %702 = vmax.xlane.f32.xlu0 %v701
    %v703 = vpop.xlane.xlu0 %702
    %v704 = vsel %vm307, %v398, -inf
    %705 = vmax.xlane.f32.xlu0 %v704
    %v706 = vpop.xlane.xlu0 %705
    %v707 = vsel %vm307, %v401, -inf
    %708 = vmax.xlane.f32.xlu0 %v707
    %v709 = vpop.xlane.xlu0 %708
    %v710 = vsel %vm307, %v447, -inf
    %711 = vmax.xlane.f32.xlu0 %v710
    %v712 = vpop.xlane.xlu0 %711
    %v713 = vsel %vm307, %v450, -inf
    %714 = vmax.xlane.f32.xlu0 %v713
    %v715 = vpop.xlane.xlu0 %714
    %v716 = vsel %vm307, %v496, -inf
    %717 = vmax.xlane.f32.xlu0 %v716
    %v718 = vpop.xlane.xlu0 %717
    %v719 = vsel %vm307, %v499, -inf
    %720 = vmax.xlane.f32.xlu0 %v719
    %v721 = vpop.xlane.xlu0 %720
    %v722 = vsel %vm307, %v545, -inf
    %723 = vmax.xlane.f32.xlu0 %v722
    %v724 = vpop.xlane.xlu0 %723
    %v725 = vsel %vm307, %v548, -inf
    %726 = vmax.xlane.f32.xlu0 %v725
    %v727 = vpop.xlane.xlu0 %726
    %v728 = vsel %vm307, %v594, -inf
    %729 = vmax.xlane.f32.xlu0 %v728
    %v730 = vpop.xlane.xlu0 %729
    %v731 = vsel %vm307, %v597, -inf
    %732 = vmax.xlane.f32.xlu0 %v731
    %v733 = vpop.xlane.xlu0 %732
    %v734 = vsel %vm307, %v643, -inf
    %735 = vmax.xlane.f32.xlu0 %v734
    %v736 = vpop.xlane.xlu0 %735
    %v737 = vsel %vm307, %v646, -inf
    %738 = vmax.xlane.f32.xlu0 %v737
    %v739 = vpop.xlane.xlu0 %738
    %v740 = vsel %vm307, %v692, -inf
    %741 = vmax.xlane.f32.xlu0 %v740
    %v742 = vpop.xlane.xlu0 %741
    %v743 = vsel %vm307, %v695, -inf
    %744 = vmax.xlane.f32.xlu0 %v743
    %v745 = vpop.xlane.xlu0 %744
    %v746 = vsub.f32 %v349, %v700
    %v747 = vsub.f32 %v352, %v703
    %v748 = vsub.f32 %v398, %v706
    %v749 = vsub.f32 %v401, %v709
    %v750 = vsub.f32 %v447, %v712
    %v751 = vsub.f32 %v450, %v715
    %v752 = vsub.f32 %v496, %v718
    %v753 = vsub.f32 %v499, %v721
    %v754 = vsub.f32 %v545, %v724
    %v755 = vsub.f32 %v548, %v727
    %v756 = vsub.f32 %v594, %v730
    %v757 = vsub.f32 %v597, %v733
    %v758 = vsub.f32 %v643, %v736
    %v759 = vsub.f32 %v646, %v739
    %v760 = vsub.f32 %v692, %v742
    %v761 = vsub.f32 %v695, %v745
    %v762 = vmul.f32 %v746, 1.442695
    %v763 = vpow.pop %v762
    %v764 = vmul.f32 %v747, 1.442695
    %v765 = vpow.pop %v764
    %v766 = vmul.f32 %v748, 1.442695
    %v767 = vpow.pop %v766
    %v768 = vmul.f32 %v749, 1.442695
    %v769 = vpow.pop %v768
    %v770 = vmul.f32 %v750, 1.442695
    %v771 = vpow.pop %v770
    %v772 = vmul.f32 %v751, 1.442695
    %v773 = vpow.pop %v772
    %v774 = vmul.f32 %v752, 1.442695
    %v775 = vpow.pop %v774
    %v776 = vmul.f32 %v753, 1.442695
    %v777 = vpow.pop %v776
    %v778 = vmul.f32 %v754, 1.442695
    %v779 = vpow.pop %v778
    %v780 = vmul.f32 %v755, 1.442695
    %v781 = vpow.pop %v780
    %v782 = vmul.f32 %v756, 1.442695
    %v783 = vpow.pop %v782
    %v784 = vmul.f32 %v757, 1.442695
    %v785 = vpow.pop %v784
    %v786 = vmul.f32 %v758, 1.442695
    %v787 = vpow.pop %v786
    %v788 = vmul.f32 %v759, 1.442695
    %v789 = vpow.pop %v788
    %v790 = vmul.f32 %v760, 1.442695
    %v791 = vpow.pop %v790
    %v792 = vmul.f32 %v761, 1.442695
    %v793 = vpow.pop %v792
    %v794 = vsel %vm307, %v763, 0.0
    %795 = vadd.xlane.f32.xlu0 %v794
    %v796 = vpop.xlane.xlu0 %795
    %v797 = vsel %vm307, %v765, 0.0
    %798 = vadd.xlane.f32.xlu0 %v797
    %v799 = vpop.xlane.xlu0 %798
    %v800 = vsel %vm307, %v767, 0.0
    %801 = vadd.xlane.f32.xlu0 %v800
    %v802 = vpop.xlane.xlu0 %801
    %v803 = vsel %vm307, %v769, 0.0
    %804 = vadd.xlane.f32.xlu0 %v803
    %v805 = vpop.xlane.xlu0 %804
    %v806 = vsel %vm307, %v771, 0.0
    %807 = vadd.xlane.f32.xlu0 %v806
    %v808 = vpop.xlane.xlu0 %807
    %v809 = vsel %vm307, %v773, 0.0
    %810 = vadd.xlane.f32.xlu0 %v809
    %v811 = vpop.xlane.xlu0 %810
    %v812 = vsel %vm307, %v775, 0.0
    %813 = vadd.xlane.f32.xlu0 %v812
    %v814 = vpop.xlane.xlu0 %813
    %v815 = vsel %vm307, %v777, 0.0
    %816 = vadd.xlane.f32.xlu0 %v815
    %v817 = vpop.xlane.xlu0 %816
    %v818 = vsel %vm307, %v779, 0.0
    %819 = vadd.xlane.f32.xlu0 %v818
    %v820 = vpop.xlane.xlu0 %819
    %v821 = vsel %vm307, %v781, 0.0
    %822 = vadd.xlane.f32.xlu0 %v821
    %v823 = vpop.xlane.xlu0 %822
    %v824 = vsel %vm307, %v783, 0.0
    %825 = vadd.xlane.f32.xlu0 %v824
    %v826 = vpop.xlane.xlu0 %825
    %v827 = vsel %vm307, %v785, 0.0
    %828 = vadd.xlane.f32.xlu0 %v827
    %v829 = vpop.xlane.xlu0 %828
    %v830 = vsel %vm307, %v787, 0.0
    %831 = vadd.xlane.f32.xlu0 %v830
    %v832 = vpop.xlane.xlu0 %831
    %v833 = vsel %vm307, %v789, 0.0
    %834 = vadd.xlane.f32.xlu0 %v833
    %v835 = vpop.xlane.xlu0 %834
    %v836 = vsel %vm307, %v791, 0.0
    %837 = vadd.xlane.f32.xlu0 %v836
    %v838 = vpop.xlane.xlu0 %837
    %v839 = vsel %vm307, %v793, 0.0
    %840 = vadd.xlane.f32.xlu0 %v839
    %v841 = vpop.xlane.xlu0 %840
    %v842 = vrcp.pop %v796
    %v843 = vrcp.pop %v799
    %v844 = vrcp.pop %v802
    %v845 = vrcp.pop %v805
    %v846 = vrcp.pop %v808
    %v847 = vrcp.pop %v811
    %v848 = vrcp.pop %v814
    %v849 = vrcp.pop %v817
    %v850 = vrcp.pop %v820
    %v851 = vrcp.pop %v823
    %v852 = vrcp.pop %v826
    %v853 = vrcp.pop %v829
    %v854 = vrcp.pop %v832
    %v855 = vrcp.pop %v835
    %v856 = vrcp.pop %v838
    %v857 = vrcp.pop %v841
    %v858 = vmul.f32 %v763, %v842
    %v859 = vmul.f32 %v765, %v843
    %v860 = vmul.f32 %v767, %v844
    %v861 = vmul.f32 %v769, %v845
    %v862 = vmul.f32 %v771, %v846
    %v863 = vmul.f32 %v773, %v847
    %v864 = vmul.f32 %v775, %v848
    %v865 = vmul.f32 %v777, %v849
    %v866 = vmul.f32 %v779, %v850
    %v867 = vmul.f32 %v781, %v851
    %v868 = vmul.f32 %v783, %v852
    %v869 = vmul.f32 %v785, %v853
    %v870 = vmul.f32 %v787, %v854
    %v871 = vmul.f32 %v789, %v855
    %v872 = vmul.f32 %v791, %v856
    %v873 = vmul.f32 %v793, %v857
    %v874 = vpack.c.bf16 %v859, %v858
    %v875 = vpack.c.bf16 %v861, %v860
    %v876 = vpack.c.bf16 %v863, %v862
    %v877 = vpack.c.bf16 %v865, %v864
    %v878 = vpack.c.bf16 %v867, %v866
    %v879 = vpack.c.bf16 %v869, %v868
    %v880 = vpack.c.bf16 %v871, %v870
    %v881 = vpack.c.bf16 %v873, %v872
    %v883 = vsel %vm307, %v874, 0
    %885 = vmatprep.subr.bf16.mxu0 0
    %886 = vmatpush1.bf16.msra.mxu0 %v268
    %887 = vmatprep.subr.bf16.mxu0 0
    %888 = vmatpush1.bf16.msra.mxu0 0
    %889 = vmatprep.subr.bf16.mxu0 0
    %890 = vmatpush1.bf16.msra.mxu0 0
    %891 = vmatprep.subr.bf16.mxu0 0
    %892 = vmatpush1.bf16.msra.mxu0 0
    %893 = vmatprep.subr.bf16.mxu0 0
    %894 = vmatpush1.bf16.msra.mxu0 0
    %895 = vmatprep.subr.bf16.mxu0 0
    %896 = vmatpush1.bf16.msra.mxu0 0
    %897 = vmatprep.subr.bf16.mxu0 0
    %898 = vmatpush1.bf16.msra.mxu0 0
    %899 = vmatprep.subr.bf16.mxu0 0
    %900 = vmatpush1.bf16.msra.mxu0 0
    %901 = vmatprep.subr.bf16.mxu0 0
    %902 = vmatpush1.bf16.msra.mxu0 0
    %903 = vmatprep.subr.bf16.mxu0 0
    %904 = vmatpush1.bf16.msra.mxu0 0
    %905 = vmatprep.subr.bf16.mxu0 0
    %906 = vmatpush1.bf16.msra.mxu0 0
    %907 = vmatprep.subr.bf16.mxu0 0
    %908 = vmatpush1.bf16.msra.mxu0 0
    %909 = vmatprep.subr.bf16.mxu0 0
    %910 = vmatpush1.bf16.msra.mxu0 0
    %911 = vmatprep.subr.bf16.mxu0 0
    %912 = vmatpush1.bf16.msra.mxu0 0
    %913 = vmatprep.subr.bf16.mxu0 0
    %914 = vmatpush1.bf16.msra.mxu0 0
    %915 = vmatprep.subr.bf16.mxu0 0
    %916 = vmatpush1.bf16.msra.mxu0 0
    %917 = vmatprep.mubr.bf16.mxu0 0
    %918 = vmatmul.mubr.bf16.gmra.mrb[0].mxu0 %v883
    %v919 = vpop.f32.mrb[0].mxu0
    %v920 = vadd.f32 0.0, %v919
    %v921 = vpop.f32.mrb[0].mxu0
    %v922 = vpop.f32.mrb[0].mxu0
    %v923 = vadd.f32 0.0, %v922
    %v924 = vpop.f32.mrb[0].mxu0
    %925 = vdwg.mxu0
    %v927 = vsel %vm307, %v875, 0
    %929 = vmatprep.subr.bf16.mxu0 0
    %930 = vmatpush1.bf16.msra.mxu0 %v287
    %931 = vmatprep.subr.bf16.mxu0 0
    %932 = vmatpush1.bf16.msra.mxu0 0
    %933 = vmatprep.subr.bf16.mxu0 0
    %934 = vmatpush1.bf16.msra.mxu0 0
    %935 = vmatprep.subr.bf16.mxu0 0
    %936 = vmatpush1.bf16.msra.mxu0 0
    %937 = vmatprep.subr.bf16.mxu0 0
    %938 = vmatpush1.bf16.msra.mxu0 0
    %939 = vmatprep.subr.bf16.mxu0 0
    %940 = vmatpush1.bf16.msra.mxu0 0
    %941 = vmatprep.subr.bf16.mxu0 0
    %942 = vmatpush1.bf16.msra.mxu0 0
    %943 = vmatprep.subr.bf16.mxu0 0
    %944 = vmatpush1.bf16.msra.mxu0 0
    %945 = vmatprep.subr.bf16.mxu0 0
    %946 = vmatpush1.bf16.msra.mxu0 0
    %947 = vmatprep.subr.bf16.mxu0 0
    %948 = vmatpush1.bf16.msra.mxu0 0
    %949 = vmatprep.subr.bf16.mxu0 0
    %950 = vmatpush1.bf16.msra.mxu0 0
    %951 = vmatprep.subr.bf16.mxu0 0
    %952 = vmatpush1.bf16.msra.mxu0 0
    %953 = vmatprep.subr.bf16.mxu0 0
    %954 = vmatpush1.bf16.msra.mxu0 0
    %955 = vmatprep.subr.bf16.mxu0 0
    %956 = vmatpush1.bf16.msra.mxu0 0
    %957 = vmatprep.subr.bf16.mxu0 0
    %958 = vmatpush1.bf16.msra.mxu0 0
    %959 = vmatprep.subr.bf16.mxu0 0
    %960 = vmatpush1.bf16.msra.mxu0 0
    %961 = vmatprep.mubr.bf16.mxu0 0
    %962 = vmatmul.mubr.bf16.gmra.mrb[0].mxu0 %v927
    %v963 = vpop.f32.mrb[0].mxu0
    %v964 = vadd.f32 0.0, %v963
    %v965 = vpop.f32.mrb[0].mxu0
    %v966 = vpop.f32.mrb[0].mxu0
    %v967 = vadd.f32 0.0, %v966
    %v968 = vpop.f32.mrb[0].mxu0
    %969 = vdwg.mxu0
    %v971 = vsel %vm307, %v876, 0
    %973 = vmatprep.subr.bf16.mxu0 0
    %974 = vmatpush1.bf16.msra.mxu0 %v290
    %975 = vmatprep.subr.bf16.mxu0 0
    %976 = vmatpush1.bf16.msra.mxu0 0
    %977 = vmatprep.subr.bf16.mxu0 0
    %978 = vmatpush1.bf16.msra.mxu0 0
    %979 = vmatprep.subr.bf16.mxu0 0
    %980 = vmatpush1.bf16.msra.mxu0 0
    %981 = vmatprep.subr.bf16.mxu0 0
    %982 = vmatpush1.bf16.msra.mxu0 0
    %983 = vmatprep.subr.bf16.mxu0 0
    %984 = vmatpush1.bf16.msra.mxu0 0
    %985 = vmatprep.subr.bf16.mxu0 0
    %986 = vmatpush1.bf16.msra.mxu0 0
    %987 = vmatprep.subr.bf16.mxu0 0
    %988 = vmatpush1.bf16.msra.mxu0 0
    %989 = vmatprep.subr.bf16.mxu0 0
    %990 = vmatpush1.bf16.msra.mxu0 0
    %991 = vmatprep.subr.bf16.mxu0 0
    %992 = vmatpush1.bf16.msra.mxu0 0
    %993 = vmatprep.subr.bf16.mxu0 0
    %994 = vmatpush1.bf16.msra.mxu0 0
    %995 = vmatprep.subr.bf16.mxu0 0
    %996 = vmatpush1.bf16.msra.mxu0 0
    %997 = vmatprep.subr.bf16.mxu0 0
    %998 = vmatpush1.bf16.msra.mxu0 0
    %999 = vmatprep.subr.bf16.mxu0 0
    %1000 = vmatpush1.bf16.msra.mxu0 0
    %1001 = vmatprep.subr.bf16.mxu0 0
    %1002 = vmatpush1.bf16.msra.mxu0 0
    %1003 = vmatprep.subr.bf16.mxu0 0
    %1004 = vmatpush1.bf16.msra.mxu0 0
    %1005 = vmatprep.mubr.bf16.mxu0 0
    %1006 = vmatmul.mubr.bf16.gmra.mrb[0].mxu0 %v971
    %v1007 = vpop.f32.mrb[0].mxu0
    %v1008 = vadd.f32 0.0, %v1007
    %v1009 = vpop.f32.mrb[0].mxu0
    %v1010 = vpop.f32.mrb[0].mxu0
    %v1011 = vadd.f32 0.0, %v1010
    %v1012 = vpop.f32.mrb[0].mxu0
    %1013 = vdwg.mxu0
    %v1015 = vsel %vm307, %v877, 0
    %1017 = vmatprep.subr.bf16.mxu0 0
    %1018 = vmatpush1.bf16.msra.mxu0 %v293
    %1019 = vmatprep.subr.bf16.mxu0 0
    %1020 = vmatpush1.bf16.msra.mxu0 0
    %1021 = vmatprep.subr.bf16.mxu0 0
    %1022 = vmatpush1.bf16.msra.mxu0 0
    %1023 = vmatprep.subr.bf16.mxu0 0
    %1024 = vmatpush1.bf16.msra.mxu0 0
    %1025 = vmatprep.subr.bf16.mxu0 0
    %1026 = vmatpush1.bf16.msra.mxu0 0
    %1027 = vmatprep.subr.bf16.mxu0 0
    %1028 = vmatpush1.bf16.msra.mxu0 0
    %1029 = vmatprep.subr.bf16.mxu0 0
    %1030 = vmatpush1.bf16.msra.mxu0 0
    %1031 = vmatprep.subr.bf16.mxu0 0
    %1032 = vmatpush1.bf16.msra.mxu0 0
    %1033 = vmatprep.subr.bf16.mxu0 0
    %1034 = vmatpush1.bf16.msra.mxu0 0
    %1035 = vmatprep.subr.bf16.mxu0 0
    %1036 = vmatpush1.bf16.msra.mxu0 0
    %1037 = vmatprep.subr.bf16.mxu0 0
    %1038 = vmatpush1.bf16.msra.mxu0 0
    %1039 = vmatprep.subr.bf16.mxu0 0
    %1040 = vmatpush1.bf16.msra.mxu0 0
    %1041 = vmatprep.subr.bf16.mxu0 0
    %1042 = vmatpush1.bf16.msra.mxu0 0
    %1043 = vmatprep.subr.bf16.mxu0 0
    %1044 = vmatpush1.bf16.msra.mxu0 0
    %1045 = vmatprep.subr.bf16.mxu0 0
    %1046 = vmatpush1.bf16.msra.mxu0 0
    %1047 = vmatprep.subr.bf16.mxu0 0
    %1048 = vmatpush1.bf16.msra.mxu0 0
    %1049 = vmatprep.mubr.bf16.mxu0 0
    %1050 = vmatmul.mubr.bf16.gmra.mrb[0].mxu0 %v1015
    %v1051 = vpop.f32.mrb[0].mxu0
    %v1052 = vadd.f32 0.0, %v1051
    %v1053 = vpop.f32.mrb[0].mxu0
    %v1054 = vpop.f32.mrb[0].mxu0
    %v1055 = vadd.f32 0.0, %v1054
    %v1056 = vpop.f32.mrb[0].mxu0
    %1057 = vdwg.mxu0
    %v1059 = vsel %vm307, %v878, 0
    %1061 = vmatprep.subr.bf16.mxu0 0
    %1062 = vmatpush1.bf16.msra.mxu0 %v270
    %1063 = vmatprep.subr.bf16.mxu0 0
    %1064 = vmatpush1.bf16.msra.mxu0 0
    %1065 = vmatprep.subr.bf16.mxu0 0
    %1066 = vmatpush1.bf16.msra.mxu0 0
    %1067 = vmatprep.subr.bf16.mxu0 0
    %1068 = vmatpush1.bf16.msra.mxu0 0
    %1069 = vmatprep.subr.bf16.mxu0 0
    %1070 = vmatpush1.bf16.msra.mxu0 0
    %1071 = vmatprep.subr.bf16.mxu0 0
    %1072 = vmatpush1.bf16.msra.mxu0 0
    %1073 = vmatprep.subr.bf16.mxu0 0
    %1074 = vmatpush1.bf16.msra.mxu0 0
    %1075 = vmatprep.subr.bf16.mxu0 0
    %1076 = vmatpush1.bf16.msra.mxu0 0
    %1077 = vmatprep.subr.bf16.mxu0 0
    %1078 = vmatpush1.bf16.msra.mxu0 0
    %1079 = vmatprep.subr.bf16.mxu0 0
    %1080 = vmatpush1.bf16.msra.mxu0 0
    %1081 = vmatprep.subr.bf16.mxu0 0
    %1082 = vmatpush1.bf16.msra.mxu0 0
    %1083 = vmatprep.subr.bf16.mxu0 0
    %1084 = vmatpush1.bf16.msra.mxu0 0
    %1085 = vmatprep.subr.bf16.mxu0 0
    %1086 = vmatpush1.bf16.msra.mxu0 0
    %1087 = vmatprep.subr.bf16.mxu0 0
    %1088 = vmatpush1.bf16.msra.mxu0 0
    %1089 = vmatprep.subr.bf16.mxu0 0
    %1090 = vmatpush1.bf16.msra.mxu0 0
    %1091 = vmatprep.subr.bf16.mxu0 0
    %1092 = vmatpush1.bf16.msra.mxu0 0
    %1093 = vmatprep.mubr.bf16.mxu0 0
    %1094 = vmatmul.mubr.bf16.gmra.mrb[0].mxu0 %v1059
    %v1095 = vpop.f32.mrb[0].mxu0
    %v1096 = vadd.f32 0.0, %v1095
    %v1097 = vpop.f32.mrb[0].mxu0
    %v1098 = vpop.f32.mrb[0].mxu0
    %v1099 = vadd.f32 0.0, %v1098
    %v1100 = vpop.f32.mrb[0].mxu0
    %1101 = vdwg.mxu0
    %v1103 = vsel %vm307, %v879, 0
    %1105 = vmatprep.subr.bf16.mxu0 0
    %1106 = vmatpush1.bf16.msra.mxu0 %v297
    %1107 = vmatprep.subr.bf16.mxu0 0
    %1108 = vmatpush1.bf16.msra.mxu0 0
    %1109 = vmatprep.subr.bf16.mxu0 0
    %1110 = vmatpush1.bf16.msra.mxu0 0
    %1111 = vmatprep.subr.bf16.mxu0 0
    %1112 = vmatpush1.bf16.msra.mxu0 0
    %1113 = vmatprep.subr.bf16.mxu0 0
    %1114 = vmatpush1.bf16.msra.mxu0 0
    %1115 = vmatprep.subr.bf16.mxu0 0
    %1116 = vmatpush1.bf16.msra.mxu0 0
    %1117 = vmatprep.subr.bf16.mxu0 0
    %1118 = vmatpush1.bf16.msra.mxu0 0
    %1119 = vmatprep.subr.bf16.mxu0 0
    %1120 = vmatpush1.bf16.msra.mxu0 0
    %1121 = vmatprep.subr.bf16.mxu0 0
    %1122 = vmatpush1.bf16.msra.mxu0 0
    %1123 = vmatprep.subr.bf16.mxu0 0
    %1124 = vmatpush1.bf16.msra.mxu0 0
    %1125 = vmatprep.subr.bf16.mxu0 0
    %1126 = vmatpush1.bf16.msra.mxu0 0
    %1127 = vmatprep.subr.bf16.mxu0 0
    %1128 = vmatpush1.bf16.msra.mxu0 0
    %1129 = vmatprep.subr.bf16.mxu0 0
    %1130 = vmatpush1.bf16.msra.mxu0 0
    %1131 = vmatprep.subr.bf16.mxu0 0
    %1132 = vmatpush1.bf16.msra.mxu0 0
    %1133 = vmatprep.subr.bf16.mxu0 0
    %1134 = vmatpush1.bf16.msra.mxu0 0
    %1135 = vmatprep.subr.bf16.mxu0 0
    %1136 = vmatpush1.bf16.msra.mxu0 0
    %1137 = vmatprep.mubr.bf16.mxu0 0
    %1138 = vmatmul.mubr.bf16.gmra.mrb[0].mxu0 %v1103
    %v1139 = vpop.f32.mrb[0].mxu0
    %v1140 = vadd.f32 0.0, %v1139
    %v1141 = vpop.f32.mrb[0].mxu0
    %v1142 = vpop.f32.mrb[0].mxu0
    %v1143 = vadd.f32 0.0, %v1142
    %v1144 = vpop.f32.mrb[0].mxu0
    %1145 = vdwg.mxu0
    %v1147 = vsel %vm307, %v880, 0
    %1149 = vmatprep.subr.bf16.mxu0 0
    %1150 = vmatpush1.bf16.msra.mxu0 %v300
    %1151 = vmatprep.subr.bf16.mxu0 0
    %1152 = vmatpush1.bf16.msra.mxu0 0
    %1153 = vmatprep.subr.bf16.mxu0 0
    %1154 = vmatpush1.bf16.msra.mxu0 0
    %1155 = vmatprep.subr.bf16.mxu0 0
    %1156 = vmatpush1.bf16.msra.mxu0 0
    %1157 = vmatprep.subr.bf16.mxu0 0
    %1158 = vmatpush1.bf16.msra.mxu0 0
    %1159 = vmatprep.subr.bf16.mxu0 0
    %1160 = vmatpush1.bf16.msra.mxu0 0
    %1161 = vmatprep.subr.bf16.mxu0 0
    %1162 = vmatpush1.bf16.msra.mxu0 0
    %1163 = vmatprep.subr.bf16.mxu0 0
    %1164 = vmatpush1.bf16.msra.mxu0 0
    %1165 = vmatprep.subr.bf16.mxu0 0
    %1166 = vmatpush1.bf16.msra.mxu0 0
    %1167 = vmatprep.subr.bf16.mxu0 0
    %1168 = vmatpush1.bf16.msra.mxu0 0
    %1169 = vmatprep.subr.bf16.mxu0 0
    %1170 = vmatpush1.bf16.msra.mxu0 0
    %1171 = vmatprep.subr.bf16.mxu0 0
    %1172 = vmatpush1.bf16.msra.mxu0 0
    %1173 = vmatprep.subr.bf16.mxu0 0
    %1174 = vmatpush1.bf16.msra.mxu0 0
    %1175 = vmatprep.subr.bf16.mxu0 0
    %1176 = vmatpush1.bf16.msra.mxu0 0
    %1177 = vmatprep.subr.bf16.mxu0 0
    %1178 = vmatpush1.bf16.msra.mxu0 0
    %1179 = vmatprep.subr.bf16.mxu0 0
    %1180 = vmatpush1.bf16.msra.mxu0 0
    %1181 = vmatprep.mubr.bf16.mxu0 0
    %1182 = vmatmul.mubr.bf16.gmra.mrb[0].mxu0 %v1147
    %v1183 = vpop.f32.mrb[0].mxu0
    %v1184 = vadd.f32 0.0, %v1183
    %v1185 = vpop.f32.mrb[0].mxu0
    %v1186 = vpop.f32.mrb[0].mxu0
    %v1187 = vadd.f32 0.0, %v1186
    %v1188 = vpop.f32.mrb[0].mxu0
    %1189 = vdwg.mxu0
    %v1191 = vsel %vm307, %v881, 0
    %1193 = vmatprep.subr.bf16.mxu0 0
    %1194 = vmatpush1.bf16.msra.mxu0 %v303
    %1195 = vmatprep.subr.bf16.mxu0 0
    %1196 = vmatpush1.bf16.msra.mxu0 0
    %1197 = vmatprep.subr.bf16.mxu0 0
    %1198 = vmatpush1.bf16.msra.mxu0 0
    %1199 = vmatprep.subr.bf16.mxu0 0
    %1200 = vmatpush1.bf16.msra.mxu0 0
    %1201 = vmatprep.subr.bf16.mxu0 0
    %1202 = vmatpush1.bf16.msra.mxu0 0
    %1203 = vmatprep.subr.bf16.mxu0 0
    %1204 = vmatpush1.bf16.msra.mxu0 0
    %1205 = vmatprep.subr.bf16.mxu0 0
    %1206 = vmatpush1.bf16.msra.mxu0 0
    %1207 = vmatprep.subr.bf16.mxu0 0
    %1208 = vmatpush1.bf16.msra.mxu0 0
    %1209 = vmatprep.subr.bf16.mxu0 0
    %1210 = vmatpush1.bf16.msra.mxu0 0
    %1211 = vmatprep.subr.bf16.mxu0 0
    %1212 = vmatpush1.bf16.msra.mxu0 0
    %1213 = vmatprep.subr.bf16.mxu0 0
    %1214 = vmatpush1.bf16.msra.mxu0 0
    %1215 = vmatprep.subr.bf16.mxu0 0
    %1216 = vmatpush1.bf16.msra.mxu0 0
    %1217 = vmatprep.subr.bf16.mxu0 0
    %1218 = vmatpush1.bf16.msra.mxu0 0
    %1219 = vmatprep.subr.bf16.mxu0 0
    %1220 = vmatpush1.bf16.msra.mxu0 0
    %1221 = vmatprep.subr.bf16.mxu0 0
    %1222 = vmatpush1.bf16.msra.mxu0 0
    %1223 = vmatprep.subr.bf16.mxu0 0
    %1224 = vmatpush1.bf16.msra.mxu0 0
    %1225 = vmatprep.mubr.bf16.mxu0 0
    %1226 = vmatmul.mubr.bf16.gmra.mrb[0].mxu0 %v1191
    %v1227 = vpop.f32.mrb[0].mxu0
    %v1228 = vadd.f32 0.0, %v1227
    %v1229 = vpop.f32.mrb[0].mxu0
    %v1230 = vpop.f32.mrb[0].mxu0
    %v1231 = vadd.f32 0.0, %v1230
    %v1232 = vpop.f32.mrb[0].mxu0
    %1233 = vdwg.mxu0
    %1236 = vrot.lane.b32.xlu0 %v964, 16
    %v1237 = vpop.permute.xlu0 %1236
    %1238 = vrot.lane.b32.xlu0 %v967, 16
    %v1239 = vpop.permute.xlu0 %1238
    %1244 = vrot.lane.b32.xlu0 %v1008, 32
    %v1245 = vpop.permute.xlu0 %1244
    %1246 = vrot.lane.b32.xlu0 %v1011, 32
    %v1247 = vpop.permute.xlu0 %1246
    %1252 = vrot.lane.b32.xlu0 %v1052, 48
    %v1253 = vpop.permute.xlu0 %1252
    %1254 = vrot.lane.b32.xlu0 %v1055, 48
    %v1255 = vpop.permute.xlu0 %1254
    %v1258 = vsel %vm307, %v920, %v1237
    %v1259 = vsel %vm307, %v923, %v1239
    %vm1260 = vcmask 261120
    %v1261 = vsel %vm1260, %v1258, %v1245
    %v1262 = vsel %vm1260, %v1259, %v1247
    %vm1263 = vcmask 392192
    %v1264 = vsel %vm1263, %v1261, %v1253
    %v1265 = vsel %vm1263, %v1262, %v1255
    %1268 = vrot.lane.b32.xlu0 %v1140, 16
    %v1269 = vpop.permute.xlu0 %1268
    %1270 = vrot.lane.b32.xlu0 %v1143, 16
    %v1271 = vpop.permute.xlu0 %1270
    %1276 = vrot.lane.b32.xlu0 %v1184, 32
    %v1277 = vpop.permute.xlu0 %1276
    %1278 = vrot.lane.b32.xlu0 %v1187, 32
    %v1279 = vpop.permute.xlu0 %1278
    %1284 = vrot.lane.b32.xlu0 %v1228, 48
    %v1285 = vpop.permute.xlu0 %1284
    %1286 = vrot.lane.b32.xlu0 %v1231, 48
    %v1287 = vpop.permute.xlu0 %1286
    %v1290 = vsel %vm307, %v1096, %v1269
    %v1291 = vsel %vm307, %v1099, %v1271
    %v1292 = vsel %vm1260, %v1290, %v1277
    %v1293 = vsel %vm1260, %v1291, %v1279
    %v1294 = vsel %vm1263, %v1292, %v1285
    %v1295 = vsel %vm1263, %v1293, %v1287
    %v1296 = vpack.c.bf16 %v1265, %v1264
    %v1297 = vpack.c.bf16 %v1295, %v1294
    %v1298 = vld [vmem:[%s4] sm:$0xf]
    %v1299 = vld [vmem:[%s4 + $0x4] sm:$0xf]
    %v1300 = vld [vmem:[%s4 + $0x8] sm:$0xf]
    %v1301 = vld [vmem:[%s4 + $0xc] sm:$0xf]
    %v1302 = vld [vmem:[%s4 + $0x10] sm:$0xf]
    %v1303 = vld [vmem:[%s4 + $0x14] sm:$0xf]
    %v1304 = vld [vmem:[%s4 + $0x18] sm:$0xf]
    %v1305 = vld [vmem:[%s4 + $0x1c] sm:$0xf]
    %v1306 = vld [vmem:[%s5] sm:$0x1]
    %v1308 = vlaneseq
    %v1309 = vshrl.u32 %v1308, 7
    %v1310 = vsub.s32 0, %v1309
    %v1311 = vrot.slane %v1306, %v1310
    %v1321 = vunpack.c.l.b16 %v1298
    %v1322 = vunpack.c.l.b16 %v1299
    %v1323 = vunpack.c.l.b16 %v1300
    %v1324 = vunpack.c.l.b16 %v1301
    %v1325 = vunpack.c.l.b16 %v1302
    %v1326 = vunpack.c.l.b16 %v1303
    %v1327 = vunpack.c.l.b16 %v1304
    %v1328 = vunpack.c.l.b16 %v1305
    %v1329 = vpack.c.b16 %v1322, %v1321
    %v1330 = vpack.c.b16 %v1324, %v1323
    %v1331 = vpack.c.b16 %v1326, %v1325
    %v1332 = vpack.c.b16 %v1328, %v1327
    %v1338 = vsel %vm84, %v1296, 0
    %v1341 = vsel %vm84, %v1297, 0
    %1343 = vmatprep.subr.bf16.mxu0 0
    %1344 = vmatpush1.bf16.msra.mxu0 %v1329
    %1345 = vmatprep.subr.bf16.mxu0 0
    %1346 = vmatpush1.bf16.msra.mxu0 %v1330
    %1347 = vmatprep.subr.bf16.mxu0 0
    %1348 = vmatpush1.bf16.msra.mxu0 %v1331
    %1349 = vmatprep.subr.bf16.mxu0 0
    %1350 = vmatpush1.bf16.msra.mxu0 %v1332
    %1351 = vmatprep.subr.bf16.mxu0 0
    %1352 = vmatpush1.bf16.msra.mxu0 0
    %1353 = vmatprep.subr.bf16.mxu0 0
    %1354 = vmatpush1.bf16.msra.mxu0 0
    %1355 = vmatprep.subr.bf16.mxu0 0
    %1356 = vmatpush1.bf16.msra.mxu0 0
    %1357 = vmatprep.subr.bf16.mxu0 0
    %1358 = vmatpush1.bf16.msra.mxu0 0
    %1359 = vmatprep.subr.bf16.mxu0 0
    %1360 = vmatpush1.bf16.msra.mxu0 0
    %1361 = vmatprep.subr.bf16.mxu0 0
    %1362 = vmatpush1.bf16.msra.mxu0 0
    %1363 = vmatprep.subr.bf16.mxu0 0
    %1364 = vmatpush1.bf16.msra.mxu0 0
    %1365 = vmatprep.subr.bf16.mxu0 0
    %1366 = vmatpush1.bf16.msra.mxu0 0
    %1367 = vmatprep.subr.bf16.mxu0 0
    %1368 = vmatpush1.bf16.msra.mxu0 0
    %1369 = vmatprep.subr.bf16.mxu0 0
    %1370 = vmatpush1.bf16.msra.mxu0 0
    %1371 = vmatprep.subr.bf16.mxu0 0
    %1372 = vmatpush1.bf16.msra.mxu0 0
    %1373 = vmatprep.subr.bf16.mxu0 0
    %1374 = vmatpush1.bf16.msra.mxu0 0
    %1375 = vmatprep.mubr.bf16.mxu0 0
    %1376 = vmatmul.mubr.bf16.gmra.mrb[0].mxu0 %v1338
    %v1377 = vpop.f32.mrb[0].mxu0
    %v1378 = vadd.f32 %v1311, %v1377
    %v1379 = vpop.f32.mrb[0].mxu0
    %v1380 = vpop.f32.mrb[0].mxu0
    %v1381 = vadd.f32 %v1311, %v1380
    %v1382 = vpop.f32.mrb[0].mxu0
    %1383 = vmatprep.mubr.bf16.mxu0 0
    %1384 = vmatmul.mubr.bf16.gmra.mrb[0].mxu0 %v1341
    %v1385 = vpop.f32.mrb[0].mxu0
    %v1386 = vadd.f32 %v1311, %v1385
    %v1387 = vpop.f32.mrb[0].mxu0
    %v1388 = vpop.f32.mrb[0].mxu0
    %v1389 = vadd.f32 %v1311, %v1388
    %v1390 = vpop.f32.mrb[0].mxu0
    %1391 = vdwg.mxu0
    %v1392 = vadd.f32 %v69, %v1378
    %v1393 = vadd.f32 %v70, %v1381
    %v1394 = vadd.f32 %v71, %v1386
    %v1395 = vadd.f32 %v72, %v1389
    %v1396 = vld [vmem:[%s6] sm:$0x1]
    %v1397 = vld [vmem:[%s7] sm:$0x1]
    %v1398 = vsel %vm84, %v1392, 0.0
    %1399 = vadd.xlane.f32.xlu0 %v1398
    %v1400 = vpop.xlane.xlu0 %1399
    %v1401 = vsel %vm84, %v1393, 0.0
    %1402 = vadd.xlane.f32.xlu0 %v1401
    %v1403 = vpop.xlane.xlu0 %1402
    %v1404 = vsel %vm84, %v1394, 0.0
    %1405 = vadd.xlane.f32.xlu0 %v1404
    %v1406 = vpop.xlane.xlu0 %1405
    %v1407 = vsel %vm84, %v1395, 0.0
    %1408 = vadd.xlane.f32.xlu0 %v1407
    %v1409 = vpop.xlane.xlu0 %1408
    %v1410 = vmul.f32 %v1400, %v97
    %v1411 = vmul.f32 %v1403, %v97
    %v1412 = vmul.f32 %v1406, %v97
    %v1413 = vmul.f32 %v1409, %v97
    %v1414 = vsub.f32 %v1392, %v1410
    %v1415 = vsub.f32 %v1393, %v1411
    %v1416 = vsub.f32 %v1394, %v1412
    %v1417 = vsub.f32 %v1395, %v1413
    %v1418 = vmul.f32 %v1414, %v1414
    %v1419 = vmul.f32 %v1415, %v1415
    %v1420 = vmul.f32 %v1416, %v1416
    %v1421 = vmul.f32 %v1417, %v1417
    %v1422 = vsel %vm84, %v1418, 0.0
    %1423 = vadd.xlane.f32.xlu0 %v1422
    %v1424 = vpop.xlane.xlu0 %1423
    %v1425 = vsel %vm84, %v1419, 0.0
    %1426 = vadd.xlane.f32.xlu0 %v1425
    %v1427 = vpop.xlane.xlu0 %1426
    %v1428 = vsel %vm84, %v1420, 0.0
    %1429 = vadd.xlane.f32.xlu0 %v1428
    %v1430 = vpop.xlane.xlu0 %1429
    %v1431 = vsel %vm84, %v1421, 0.0
    %1432 = vadd.xlane.f32.xlu0 %v1431
    %v1433 = vpop.xlane.xlu0 %1432
    %v1434 = vmul.f32 %v1424, %v97
    %v1435 = vmul.f32 %v1427, %v97
    %v1436 = vmul.f32 %v1430, %v97
    %v1437 = vmul.f32 %v1433, %v97
    %v1438 = vadd.f32 %v1434, 1e-05
    %v1439 = vadd.f32 %v1435, 1e-05
    %v1440 = vadd.f32 %v1436, 1e-05
    %v1441 = vadd.f32 %v1437, 1e-05
    %v1442 = vrsqrt.pop %v1438
    %v1443 = vrsqrt.pop %v1439
    %v1444 = vrsqrt.pop %v1440
    %v1445 = vrsqrt.pop %v1441
    %v1446 = vmul.f32 %v1414, %v1442
    %v1447 = vmul.f32 %v1415, %v1443
    %v1448 = vmul.f32 %v1416, %v1444
    %v1449 = vmul.f32 %v1417, %v1445
    %v1451 = vlaneseq
    %v1452 = vshrl.u32 %v1451, 7
    %v1453 = vsub.s32 0, %v1452
    %v1454 = vrot.slane %v1396, %v1453
    %v1456 = vmul.f32 %v1446, %v1454
    %v1457 = vmul.f32 %v1447, %v1454
    %v1458 = vmul.f32 %v1448, %v1454
    %v1459 = vmul.f32 %v1449, %v1454
    %v1461 = vlaneseq
    %v1462 = vshrl.u32 %v1461, 7
    %v1463 = vsub.s32 0, %v1462
    %v1464 = vrot.slane %v1397, %v1463
    %v1466 = vadd.f32 %v1456, %v1464
    %v1467 = vadd.f32 %v1457, %v1464
    %v1468 = vadd.f32 %v1458, %v1464
    %v1469 = vadd.f32 %v1459, %v1464
    %v1470 = vpack.c.bf16 %v1467, %v1466
    %v1471 = vpack.c.bf16 %v1469, %v1468
    %v1472 = vld [vmem:[%s8] sm:$0xff]
    %v1473 = vld [vmem:[%s8 + $0x8] sm:$0xff]
    %v1474 = vld [vmem:[%s8 + $0x10] sm:$0xff]
    %v1475 = vld [vmem:[%s8 + $0x18] sm:$0xff]
    %v1476 = vld [vmem:[%s8 + $0x20] sm:$0xff]
    %v1477 = vld [vmem:[%s8 + $0x28] sm:$0xff]
    %v1478 = vld [vmem:[%s8 + $0x30] sm:$0xff]
    %v1479 = vld [vmem:[%s8 + $0x38] sm:$0xff]
    %v1480 = vld [vmem:[%s9] sm:$0x3]
    %v1482 = vlaneseq
    %v1483 = vshrl.u32 %v1482, 7
    %v1484 = vsub.s32 0, %v1483
    %v1485 = vrot.slane %v1480, %v1484
    %v1486 = vlaneseq
    %v1487 = vshrl.u32 %v1486, 7
    %v1488 = vsub.s32 1, %v1487
    %v1489 = vrot.slane %v1480, %v1488
    %v1500 = vunpack.c.l.b16 %v1472
    %v1501 = vunpack.c.h.b16 %v1472
    %v1502 = vunpack.c.l.b16 %v1473
    %v1503 = vunpack.c.h.b16 %v1473
    %v1504 = vunpack.c.l.b16 %v1474
    %v1505 = vunpack.c.h.b16 %v1474
    %v1506 = vunpack.c.l.b16 %v1475
    %v1507 = vunpack.c.h.b16 %v1475
    %v1508 = vunpack.c.l.b16 %v1476
    %v1509 = vunpack.c.h.b16 %v1476
    %v1510 = vunpack.c.l.b16 %v1477
    %v1511 = vunpack.c.h.b16 %v1477
    %v1512 = vunpack.c.l.b16 %v1478
    %v1513 = vunpack.c.h.b16 %v1478
    %v1514 = vunpack.c.l.b16 %v1479
    %v1515 = vunpack.c.h.b16 %v1479
    %v1516 = vpack.c.b16 %v1502, %v1500
    %v1517 = vpack.c.b16 %v1503, %v1501
    %v1518 = vpack.c.b16 %v1506, %v1504
    %v1519 = vpack.c.b16 %v1507, %v1505
    %v1520 = vpack.c.b16 %v1510, %v1508
    %v1521 = vpack.c.b16 %v1511, %v1509
    %v1522 = vpack.c.b16 %v1514, %v1512
    %v1523 = vpack.c.b16 %v1515, %v1513
    %v1533 = vsel %vm84, %v1470, 0
    %v1536 = vsel %vm84, %v1471, 0
    %1538 = vmatprep.subr.bf16.mxu0 %v1517
    %1539 = vmatpush1.bf16.msra.mxu0 %v1516
    %1540 = vmatprep.subr.bf16.mxu0 %v1519
    %1541 = vmatpush1.bf16.msra.mxu0 %v1518
    %1542 = vmatprep.subr.bf16.mxu0 %v1521
    %1543 = vmatpush1.bf16.msra.mxu0 %v1520
    %1544 = vmatprep.subr.bf16.mxu0 %v1523
    %1545 = vmatpush1.bf16.msra.mxu0 %v1522
    %1546 = vmatprep.subr.bf16.mxu0 0
    %1547 = vmatpush1.bf16.msra.mxu0 0
    %1548 = vmatprep.subr.bf16.mxu0 0
    %1549 = vmatpush1.bf16.msra.mxu0 0
    %1550 = vmatprep.subr.bf16.mxu0 0
    %1551 = vmatpush1.bf16.msra.mxu0 0
    %1552 = vmatprep.subr.bf16.mxu0 0
    %1553 = vmatpush1.bf16.msra.mxu0 0
    %1554 = vmatprep.subr.bf16.mxu0 0
    %1555 = vmatpush1.bf16.msra.mxu0 0
    %1556 = vmatprep.subr.bf16.mxu0 0
    %1557 = vmatpush1.bf16.msra.mxu0 0
    %1558 = vmatprep.subr.bf16.mxu0 0
    %1559 = vmatpush1.bf16.msra.mxu0 0
    %1560 = vmatprep.subr.bf16.mxu0 0
    %1561 = vmatpush1.bf16.msra.mxu0 0
    %1562 = vmatprep.subr.bf16.mxu0 0
    %1563 = vmatpush1.bf16.msra.mxu0 0
    %1564 = vmatprep.subr.bf16.mxu0 0
    %1565 = vmatpush1.bf16.msra.mxu0 0
    %1566 = vmatprep.subr.bf16.mxu0 0
    %1567 = vmatpush1.bf16.msra.mxu0 0
    %1568 = vmatprep.subr.bf16.mxu0 0
    %1569 = vmatpush1.bf16.msra.mxu0 0
    %1570 = vmatprep.mubr.bf16.mxu0 0
    %1571 = vmatmul.mubr.bf16.gmra.mrb[0].mxu0 %v1533
    %v1572 = vpop.f32.mrb[0].mxu0
    %v1573 = vadd.f32 %v1485, %v1572
    %v1574 = vpop.f32.mrb[0].mxu0
    %v1575 = vadd.f32 %v1489, %v1574
    %v1576 = vpop.f32.mrb[0].mxu0
    %v1577 = vadd.f32 %v1485, %v1576
    %v1578 = vpop.f32.mrb[0].mxu0
    %v1579 = vadd.f32 %v1489, %v1578
    %1580 = vmatprep.mubr.bf16.mxu0 0
    %1581 = vmatmul.mubr.bf16.gmra.mrb[0].mxu0 %v1536
    %v1582 = vpop.f32.mrb[0].mxu0
    %v1583 = vadd.f32 %v1485, %v1582
    %v1584 = vpop.f32.mrb[0].mxu0
    %v1585 = vadd.f32 %v1489, %v1584
    %v1586 = vpop.f32.mrb[0].mxu0
    %v1587 = vadd.f32 %v1485, %v1586
    %v1588 = vpop.f32.mrb[0].mxu0
    %v1589 = vadd.f32 %v1489, %v1588
    %1590 = vdwg.mxu0
    %v1591 = vmax.f32 %v1573, 0.0
    %v1592 = vmax.f32 %v1575, 0.0
    %v1593 = vmax.f32 %v1577, 0.0
    %v1594 = vmax.f32 %v1579, 0.0
    %v1595 = vmax.f32 %v1583, 0.0
    %v1596 = vmax.f32 %v1585, 0.0
    %v1597 = vmax.f32 %v1587, 0.0
    %v1598 = vmax.f32 %v1589, 0.0
    %v1599 = vpack.c.bf16 %v1593, %v1591
    %v1600 = vpack.c.bf16 %v1594, %v1592
    %v1601 = vpack.c.bf16 %v1597, %v1595
    %v1602 = vpack.c.bf16 %v1598, %v1596
    %v1603 = vld [vmem:[%s10] sm:$0xf]
    %v1604 = vld [vmem:[%s10 + $0x4] sm:$0xf]
    %v1605 = vld [vmem:[%s10 + $0x8] sm:$0xf]
    %v1606 = vld [vmem:[%s10 + $0xc] sm:$0xf]
    %v1607 = vld [vmem:[%s10 + $0x10] sm:$0xf]
    %v1608 = vld [vmem:[%s10 + $0x14] sm:$0xf]
    %v1609 = vld [vmem:[%s10 + $0x18] sm:$0xf]
    %v1610 = vld [vmem:[%s10 + $0x1c] sm:$0xf]
    %v1611 = vld [vmem:[%s10 + $0x20] sm:$0xf]
    %v1612 = vld [vmem:[%s10 + $0x24] sm:$0xf]
    %v1613 = vld [vmem:[%s10 + $0x28] sm:$0xf]
    %v1614 = vld [vmem:[%s10 + $0x2c] sm:$0xf]
    %v1615 = vld [vmem:[%s10 + $0x30] sm:$0xf]
    %v1616 = vld [vmem:[%s10 + $0x34] sm:$0xf]
    %v1617 = vld [vmem:[%s10 + $0x38] sm:$0xf]
    %v1618 = vld [vmem:[%s10 + $0x3c] sm:$0xf]
    %v1619 = vld [vmem:[%s10 + $0x40] sm:$0xf]
    %v1620 = vld [vmem:[%s10 + $0x44] sm:$0xf]
    %v1621 = vld [vmem:[%s10 + $0x48] sm:$0xf]
    %v1622 = vld [vmem:[%s10 + $0x4c] sm:$0xf]
    %v1623 = vld [vmem:[%s10 + $0x50] sm:$0xf]
    %v1624 = vld [vmem:[%s10 + $0x54] sm:$0xf]
    %v1625 = vld [vmem:[%s10 + $0x58] sm:$0xf]
    %v1626 = vld [vmem:[%s10 + $0x5c] sm:$0xf]
    %v1627 = vld [vmem:[%s10 + $0x60] sm:$0xf]
    %v1628 = vld [vmem:[%s10 + $0x64] sm:$0xf]
    %v1629 = vld [vmem:[%s10 + $0x68] sm:$0xf]
    %v1630 = vld [vmem:[%s10 + $0x6c] sm:$0xf]
    %v1631 = vld [vmem:[%s10 + $0x70] sm:$0xf]
    %v1632 = vld [vmem:[%s10 + $0x74] sm:$0xf]
    %v1633 = vld [vmem:[%s10 + $0x78] sm:$0xf]
    %v1634 = vld [vmem:[%s10 + $0x7c] sm:$0xf]
    %v1635 = vld [vmem:[%s11] sm:$0x1]
    %v1637 = vlaneseq
    %v1638 = vshrl.u32 %v1637, 7
    %v1639 = vsub.s32 0, %v1638
    %v1640 = vrot.slane %v1635, %v1639
    %v1674 = vunpack.c.l.b16 %v1603
    %v1675 = vunpack.c.l.b16 %v1604
    %v1676 = vunpack.c.l.b16 %v1605
    %v1677 = vunpack.c.l.b16 %v1606
    %v1678 = vunpack.c.l.b16 %v1607
    %v1679 = vunpack.c.l.b16 %v1608
    %v1680 = vunpack.c.l.b16 %v1609
    %v1681 = vunpack.c.l.b16 %v1610
    %v1682 = vunpack.c.l.b16 %v1611
    %v1683 = vunpack.c.l.b16 %v1612
    %v1684 = vunpack.c.l.b16 %v1613
    %v1685 = vunpack.c.l.b16 %v1614
    %v1686 = vunpack.c.l.b16 %v1615
    %v1687 = vunpack.c.l.b16 %v1616
    %v1688 = vunpack.c.l.b16 %v1617
    %v1689 = vunpack.c.l.b16 %v1618
    %v1690 = vunpack.c.l.b16 %v1619
    %v1691 = vunpack.c.l.b16 %v1620
    %v1692 = vunpack.c.l.b16 %v1621
    %v1693 = vunpack.c.l.b16 %v1622
    %v1694 = vunpack.c.l.b16 %v1623
    %v1695 = vunpack.c.l.b16 %v1624
    %v1696 = vunpack.c.l.b16 %v1625
    %v1697 = vunpack.c.l.b16 %v1626
    %v1698 = vunpack.c.l.b16 %v1627
    %v1699 = vunpack.c.l.b16 %v1628
    %v1700 = vunpack.c.l.b16 %v1629
    %v1701 = vunpack.c.l.b16 %v1630
    %v1702 = vunpack.c.l.b16 %v1631
    %v1703 = vunpack.c.l.b16 %v1632
    %v1704 = vunpack.c.l.b16 %v1633
    %v1705 = vunpack.c.l.b16 %v1634
    %v1706 = vpack.c.b16 %v1675, %v1674
    %v1707 = vpack.c.b16 %v1677, %v1676
    %v1708 = vpack.c.b16 %v1679, %v1678
    %v1709 = vpack.c.b16 %v1681, %v1680
    %v1710 = vpack.c.b16 %v1683, %v1682
    %v1711 = vpack.c.b16 %v1685, %v1684
    %v1712 = vpack.c.b16 %v1687, %v1686
    %v1713 = vpack.c.b16 %v1689, %v1688
    %v1714 = vpack.c.b16 %v1691, %v1690
    %v1715 = vpack.c.b16 %v1693, %v1692
    %v1716 = vpack.c.b16 %v1695, %v1694
    %v1717 = vpack.c.b16 %v1697, %v1696
    %v1718 = vpack.c.b16 %v1699, %v1698
    %v1719 = vpack.c.b16 %v1701, %v1700
    %v1720 = vpack.c.b16 %v1703, %v1702
    %v1721 = vpack.c.b16 %v1705, %v1704
    %1738 = vmatprep.subr.bf16.mxu0 0
    %1739 = vmatpush1.bf16.msra.mxu0 %v1706
    %1740 = vmatprep.subr.bf16.mxu0 0
    %1741 = vmatpush1.bf16.msra.mxu0 %v1707
    %1742 = vmatprep.subr.bf16.mxu0 0
    %1743 = vmatpush1.bf16.msra.mxu0 %v1708
    %1744 = vmatprep.subr.bf16.mxu0 0
    %1745 = vmatpush1.bf16.msra.mxu0 %v1709
    %1746 = vmatprep.subr.bf16.mxu0 0
    %1747 = vmatpush1.bf16.msra.mxu0 %v1710
    %1748 = vmatprep.subr.bf16.mxu0 0
    %1749 = vmatpush1.bf16.msra.mxu0 %v1711
    %1750 = vmatprep.subr.bf16.mxu0 0
    %1751 = vmatpush1.bf16.msra.mxu0 %v1712
    %1752 = vmatprep.subr.bf16.mxu0 0
    %1753 = vmatpush1.bf16.msra.mxu0 %v1713
    %1754 = vmatprep.subr.bf16.mxu0 0
    %1755 = vmatpush1.bf16.msra.mxu0 %v1714
    %1756 = vmatprep.subr.bf16.mxu0 0
    %1757 = vmatpush1.bf16.msra.mxu0 %v1715
    %1758 = vmatprep.subr.bf16.mxu0 0
    %1759 = vmatpush1.bf16.msra.mxu0 %v1716
    %1760 = vmatprep.subr.bf16.mxu0 0
    %1761 = vmatpush1.bf16.msra.mxu0 %v1717
    %1762 = vmatprep.subr.bf16.mxu0 0
    %1763 = vmatpush1.bf16.msra.mxu0 %v1718
    %1764 = vmatprep.subr.bf16.mxu0 0
    %1765 = vmatpush1.bf16.msra.mxu0 %v1719
    %1766 = vmatprep.subr.bf16.mxu0 0
    %1767 = vmatpush1.bf16.msra.mxu0 %v1720
    %1768 = vmatprep.subr.bf16.mxu0 0
    %1769 = vmatpush1.bf16.msra.mxu0 %v1721
    %1770 = vmatprep.mubr.bf16.mxu0 %v1600
    %1771 = vmatmul.mubr.bf16.gmra.mrb[0].mxu0 %v1599
    %v1772 = vpop.f32.mrb[0].mxu0
    %v1773 = vadd.f32 %v1640, %v1772
    %v1774 = vpop.f32.mrb[0].mxu0
    %v1775 = vpop.f32.mrb[0].mxu0
    %v1776 = vadd.f32 %v1640, %v1775
    %v1777 = vpop.f32.mrb[0].mxu0
    %1778 = vmatprep.mubr.bf16.mxu0 %v1602
    %1779 = vmatmul.mubr.bf16.gmra.mrb[0].mxu0 %v1601
    %v1780 = vpop.f32.mrb[0].mxu0
    %v1781 = vadd.f32 %v1640, %v1780
    %v1782 = vpop.f32.mrb[0].mxu0
    %v1783 = vpop.f32.mrb[0].mxu0
    %v1784 = vadd.f32 %v1640, %v1783
    %v1785 = vpop.f32.mrb[0].mxu0
    %1786 = vdwg.mxu0
    %v1787 = vadd.f32 %v1392, %v1773
    %v1788 = vadd.f32 %v1393, %v1776
    %v1789 = vadd.f32 %v1394, %v1781
    %v1790 = vadd.f32 %v1395, %v1784
    %s1791 = scalar_lea.vmem [#allocation2], 1
    %v1792 = vld [vmem:[%s1791] sm:$0x1]
    %s1793 = scalar_lea.vmem %s2, 1
    %v1794 = vld [vmem:[%s1793] sm:$0x1]
    %v1795 = vsel %vm84, %v1787, 0.0
    %1796 = vadd.xlane.f32.xlu0 %v1795
    %v1797 = vpop.xlane.xlu0 %1796
    %v1798 = vsel %vm84, %v1788, 0.0
    %1799 = vadd.xlane.f32.xlu0 %v1798
    %v1800 = vpop.xlane.xlu0 %1799
    %v1801 = vsel %vm84, %v1789, 0.0
    %1802 = vadd.xlane.f32.xlu0 %v1801
    %v1803 = vpop.xlane.xlu0 %1802
    %v1804 = vsel %vm84, %v1790, 0.0
    %1805 = vadd.xlane.f32.xlu0 %v1804
    %v1806 = vpop.xlane.xlu0 %1805
    %v1807 = vmul.f32 %v1797, %v97
    %v1808 = vmul.f32 %v1800, %v97
    %v1809 = vmul.f32 %v1803, %v97
    %v1810 = vmul.f32 %v1806, %v97
    %v1811 = vsub.f32 %v1787, %v1807
    %v1812 = vsub.f32 %v1788, %v1808
    %v1813 = vsub.f32 %v1789, %v1809
    %v1814 = vsub.f32 %v1790, %v1810
    %v1815 = vmul.f32 %v1811, %v1811
    %v1816 = vmul.f32 %v1812, %v1812
    %v1817 = vmul.f32 %v1813, %v1813
    %v1818 = vmul.f32 %v1814, %v1814
    %v1819 = vsel %vm84, %v1815, 0.0
    %1820 = vadd.xlane.f32.xlu0 %v1819
    %v1821 = vpop.xlane.xlu0 %1820
    %v1822 = vsel %vm84, %v1816, 0.0
    %1823 = vadd.xlane.f32.xlu0 %v1822
    %v1824 = vpop.xlane.xlu0 %1823
    %v1825 = vsel %vm84, %v1817, 0.0
    %1826 = vadd.xlane.f32.xlu0 %v1825
    %v1827 = vpop.xlane.xlu0 %1826
    %v1828 = vsel %vm84, %v1818, 0.0
    %1829 = vadd.xlane.f32.xlu0 %v1828
    %v1830 = vpop.xlane.xlu0 %1829
    %v1831 = vmul.f32 %v1821, %v97
    %v1832 = vmul.f32 %v1824, %v97
    %v1833 = vmul.f32 %v1827, %v97
    %v1834 = vmul.f32 %v1830, %v97
    %v1835 = vadd.f32 %v1831, 1e-05
    %v1836 = vadd.f32 %v1832, 1e-05
    %v1837 = vadd.f32 %v1833, 1e-05
    %v1838 = vadd.f32 %v1834, 1e-05
    %v1839 = vrsqrt.pop %v1835
    %v1840 = vrsqrt.pop %v1836
    %v1841 = vrsqrt.pop %v1837
    %v1842 = vrsqrt.pop %v1838
    %v1843 = vmul.f32 %v1811, %v1839
    %v1844 = vmul.f32 %v1812, %v1840
    %v1845 = vmul.f32 %v1813, %v1841
    %v1846 = vmul.f32 %v1814, %v1842
    %v1848 = vlaneseq
    %v1849 = vshrl.u32 %v1848, 7
    %v1850 = vsub.s32 0, %v1849
    %v1851 = vrot.slane %v1792, %v1850
    %v1853 = vmul.f32 %v1843, %v1851
    %v1854 = vmul.f32 %v1844, %v1851
    %v1855 = vmul.f32 %v1845, %v1851
    %v1856 = vmul.f32 %v1846, %v1851
    %v1858 = vlaneseq
    %v1859 = vshrl.u32 %v1858, 7
    %v1860 = vsub.s32 0, %v1859
    %v1861 = vrot.slane %v1794, %v1860
    %v1863 = vadd.f32 %v1853, %v1861
    %v1864 = vadd.f32 %v1854, %v1861
    %v1865 = vadd.f32 %v1855, %v1861
    %v1866 = vadd.f32 %v1856, %v1861
    %v1867 = vpack.c.bf16 %v1864, %v1863
    %v1868 = vpack.c.bf16 %v1866, %v1865
    %s1869 = scalar_lea.vmem %s3, 64
    %v1870 = vld [vmem:[%s1869] sm:$0xff]
    %v1871 = vld [vmem:[%s1869 + $0x8] sm:$0xff]
    %v1872 = vld [vmem:[%s1869 + $0x10] sm:$0xff]
    %v1873 = vld [vmem:[%s1869 + $0x18] sm:$0xff]
    %v1874 = vld [vmem:[%s1869 + $0x20] sm:$0xff]
    %v1875 = vld [vmem:[%s1869 + $0x28] sm:$0xff]
    %v1876 = vld [vmem:[%s1869 + $0x30] sm:$0xff]
    %v1877 = vld [vmem:[%s1869 + $0x38] sm:$0xff]
    %v1886 = vunpack.c.l.b16 %v1870
    %v1887 = vunpack.c.h.b16 %v1870
    %v1888 = vunpack.c.l.b16 %v1871
    %v1889 = vunpack.c.h.b16 %v1871
    %v1890 = vunpack.c.l.b16 %v1872
    %v1891 = vunpack.c.h.b16 %v1872
    %v1892 = vunpack.c.l.b16 %v1873
    %v1893 = vunpack.c.h.b16 %v1873
    %v1894 = vunpack.c.l.b16 %v1874
    %v1895 = vunpack.c.h.b16 %v1874
    %v1896 = vunpack.c.l.b16 %v1875
    %v1897 = vunpack.c.h.b16 %v1875
    %v1898 = vunpack.c.l.b16 %v1876
    %v1899 = vunpack.c.h.b16 %v1876
    %v1900 = vunpack.c.l.b16 %v1877
    %v1901 = vunpack.c.h.b16 %v1877
    %v1902 = vpack.c.b16 %v1888, %v1886
    %v1903 = vpack.c.b16 %v1889, %v1887
    %v1904 = vpack.c.b16 %v1892, %v1890
    %v1905 = vpack.c.b16 %v1893, %v1891
    %v1906 = vpack.c.b16 %v1896, %v1894
    %v1907 = vpack.c.b16 %v1897, %v1895
    %v1908 = vpack.c.b16 %v1900, %v1898
    %v1909 = vpack.c.b16 %v1901, %v1899
    %v1919 = vsel %vm84, %v1867, 0
    %v1922 = vsel %vm84, %v1868, 0
    %1924 = vmatprep.subr.bf16.mxu0 %v1903
    %1925 = vmatpush1.bf16.msra.mxu0 %v1902
    %1926 = vmatprep.subr.bf16.mxu0 %v1905
    %1927 = vmatpush1.bf16.msra.mxu0 %v1904
    %1928 = vmatprep.subr.bf16.mxu0 %v1907
    %1929 = vmatpush1.bf16.msra.mxu0 %v1906
    %1930 = vmatprep.subr.bf16.mxu0 %v1909
    %1931 = vmatpush1.bf16.msra.mxu0 %v1908
    %1932 = vmatprep.subr.bf16.mxu0 0
    %1933 = vmatpush1.bf16.msra.mxu0 0
    %1934 = vmatprep.subr.bf16.mxu0 0
    %1935 = vmatpush1.bf16.msra.mxu0 0
    %1936 = vmatprep.subr.bf16.mxu0 0
    %1937 = vmatpush1.bf16.msra.mxu0 0
    %1938 = vmatprep.subr.bf16.mxu0 0
    %1939 = vmatpush1.bf16.msra.mxu0 0
    %1940 = vmatprep.subr.bf16.mxu0 0
    %1941 = vmatpush1.bf16.msra.mxu0 0
    %1942 = vmatprep.subr.bf16.mxu0 0
    %1943 = vmatpush1.bf16.msra.mxu0 0
    %1944 = vmatprep.subr.bf16.mxu0 0
    %1945 = vmatpush1.bf16.msra.mxu0 0
    %1946 = vmatprep.subr.bf16.mxu0 0
    %1947 = vmatpush1.bf16.msra.mxu0 0
    %1948 = vmatprep.subr.bf16.mxu0 0
    %1949 = vmatpush1.bf16.msra.mxu0 0
    %1950 = vmatprep.subr.bf16.mxu0 0
    %1951 = vmatpush1.bf16.msra.mxu0 0
    %1952 = vmatprep.subr.bf16.mxu0 0
    %1953 = vmatpush1.bf16.msra.mxu0 0
    %1954 = vmatprep.subr.bf16.mxu0 0
    %1955 = vmatpush1.bf16.msra.mxu0 0
    %1956 = vmatprep.mubr.bf16.mxu0 0
    %1957 = vmatmul.mubr.bf16.gmra.mrb[0].mxu0 %v1919
    %v1958 = vpop.f32.mrb[0].mxu0
    %v1959 = vadd.f32 0.0, %v1958
    %v1960 = vpop.f32.mrb[0].mxu0
    %v1961 = vadd.f32 0.0, %v1960
    %v1962 = vpop.f32.mrb[0].mxu0
    %v1963 = vadd.f32 0.0, %v1962
    %v1964 = vpop.f32.mrb[0].mxu0
    %v1965 = vadd.f32 0.0, %v1964
    %1966 = vmatprep.mubr.bf16.mxu0 0
    %1967 = vmatmul.mubr.bf16.gmra.mrb[0].mxu0 %v1922
    %v1968 = vpop.f32.mrb[0].mxu0
    %v1969 = vadd.f32 0.0, %v1968
    %v1970 = vpop.f32.mrb[0].mxu0
    %v1971 = vadd.f32 0.0, %v1970
    %v1972 = vpop.f32.mrb[0].mxu0
    %v1973 = vadd.f32 0.0, %v1972
    %v1974 = vpop.f32.mrb[0].mxu0
    %v1975 = vadd.f32 0.0, %v1974
    %1976 = vdwg.mxu0
    %v1977 = vpack.c.bf16 %v1963, %v1959
    %v1978 = vpack.c.bf16 %v1965, %v1961
    %v1979 = vpack.c.bf16 %v1973, %v1969
    %v1980 = vpack.c.bf16 %v1975, %v1971
    %1982 = vrot.lane.b32.xlu0 %v1977, 112
    %v1983 = vpop.permute.xlu0 %1982
    %1984 = vrot.lane.b32.xlu0 %v1977, 96
    %v1985 = vpop.permute.xlu0 %1984
    %1986 = vrot.lane.b32.xlu0 %v1977, 80
    %v1987 = vpop.permute.xlu0 %1986
    %1989 = vrot.lane.b32.xlu0 %v1979, 112
    %v1990 = vpop.permute.xlu0 %1989
    %1991 = vrot.lane.b32.xlu0 %v1979, 96
    %v1992 = vpop.permute.xlu0 %1991
    %1993 = vrot.lane.b32.xlu0 %v1979, 80
    %v1994 = vpop.permute.xlu0 %1993
    %1996 = vrot.lane.b32.xlu0 %v1978, 112
    %v1997 = vpop.permute.xlu0 %1996
    %1999 = vrot.lane.b32.xlu0 %v1978, 96
    %v2000 = vpop.permute.xlu0 %1999
    %2002 = vrot.lane.b32.xlu0 %v1978, 80
    %v2003 = vpop.permute.xlu0 %2002
    %2006 = vrot.lane.b32.xlu0 %v1980, 112
    %v2007 = vpop.permute.xlu0 %2006
    %2009 = vrot.lane.b32.xlu0 %v1980, 96
    %v2010 = vpop.permute.xlu0 %2009
    %2012 = vrot.lane.b32.xlu0 %v1980, 80
    %v2013 = vpop.permute.xlu0 %2012
    %2015 = vrot.lane.b32.xlu0 %v1977, 64
    %v2016 = vpop.permute.xlu0 %2015
    %v2018 = vsel %vm307, %v1977, 0
    %v2021 = vsel %vm307, %v2016, 0
    %2023 = vmatprep.subr.bf16.mxu0 0
    %2024 = vmatpush1.bf16.xpose.msra.mxu0 %v2021
    %2025 = vmatprep.subr.bf16.mxu0 0
    %2026 = vmatpush1.bf16.xpose.msra.mxu0 0
    %2027 = vmatprep.subr.bf16.mxu0 0
    %2028 = vmatpush1.bf16.xpose.msra.mxu0 0
    %2029 = vmatprep.subr.bf16.mxu0 0
    %2030 = vmatpush1.bf16.xpose.msra.mxu0 0
    %2031 = vmatprep.subr.bf16.mxu0 0
    %2032 = vmatpush1.bf16.xpose.msra.mxu0 0
    %2033 = vmatprep.subr.bf16.mxu0 0
    %2034 = vmatpush1.bf16.xpose.msra.mxu0 0
    %2035 = vmatprep.subr.bf16.mxu0 0
    %2036 = vmatpush1.bf16.xpose.msra.mxu0 0
    %2037 = vmatprep.subr.bf16.mxu0 0
    %2038 = vmatpush1.bf16.xpose.msra.mxu0 0
    %2039 = vmatprep.subr.bf16.mxu0 0
    %2040 = vmatpush1.bf16.xpose.msra.mxu0 0
    %2041 = vmatprep.subr.bf16.mxu0 0
    %2042 = vmatpush1.bf16.xpose.msra.mxu0 0
    %2043 = vmatprep.subr.bf16.mxu0 0
    %2044 = vmatpush1.bf16.xpose.msra.mxu0 0
    %2045 = vmatprep.subr.bf16.mxu0 0
    %2046 = vmatpush1.bf16.xpose.msra.mxu0 0
    %2047 = vmatprep.subr.bf16.mxu0 0
    %2048 = vmatpush1.bf16.xpose.msra.mxu0 0
    %2049 = vmatprep.subr.bf16.mxu0 0
    %2050 = vmatpush1.bf16.xpose.msra.mxu0 0
    %2051 = vmatprep.subr.bf16.mxu0 0
    %2052 = vmatpush1.bf16.xpose.msra.mxu0 0
    %2053 = vmatprep.subr.bf16.mxu0 0
    %2054 = vmatpush1.bf16.xpose.msra.mxu0 0
    %2055 = vmatprep.mubr.bf16.mxu0 0
    %2056 = vmatmul.mubr.bf16.gmra.mrb[0].mxu0 %v2018
    %v2057 = vpop.f32.mrb[0].mxu0
    %v2058 = vadd.f32 %v80, %v2057
    %v2059 = vpop.f32.mrb[0].mxu0
    %v2060 = vpop.f32.mrb[0].mxu0
    %v2061 = vadd.f32 %v81, %v2060
    %v2062 = vpop.f32.mrb[0].mxu0
    %2063 = vdwg.mxu0
    %2064 = vrot.lane.b32.xlu0 %v1983, 64
    %v2065 = vpop.permute.xlu0 %2064
    %v2067 = vsel %vm307, %v1983, 0
    %v2070 = vsel %vm307, %v2065, 0
    %2072 = vmatprep.subr.bf16.mxu0 0
    %2073 = vmatpush1.bf16.xpose.msra.mxu0 %v2070
    %2074 = vmatprep.subr.bf16.mxu0 0
    %2075 = vmatpush1.bf16.xpose.msra.mxu0 0
    %2076 = vmatprep.subr.bf16.mxu0 0
    %2077 = vmatpush1.bf16.xpose.msra.mxu0 0
    %2078 = vmatprep.subr.bf16.mxu0 0
    %2079 = vmatpush1.bf16.xpose.msra.mxu0 0
    %2080 = vmatprep.subr.bf16.mxu0 0
    %2081 = vmatpush1.bf16.xpose.msra.mxu0 0
    %2082 = vmatprep.subr.bf16.mxu0 0
    %2083 = vmatpush1.bf16.xpose.msra.mxu0 0
    %2084 = vmatprep.subr.bf16.mxu0 0
    %2085 = vmatpush1.bf16.xpose.msra.mxu0 0
    %2086 = vmatprep.subr.bf16.mxu0 0
    %2087 = vmatpush1.bf16.xpose.msra.mxu0 0
    %2088 = vmatprep.subr.bf16.mxu0 0
    %2089 = vmatpush1.bf16.xpose.msra.mxu0 0
    %2090 = vmatprep.subr.bf16.mxu0 0
    %2091 = vmatpush1.bf16.xpose.msra.mxu0 0
    %2092 = vmatprep.subr.bf16.mxu0 0
    %2093 = vmatpush1.bf16.xpose.msra.mxu0 0
    %2094 = vmatprep.subr.bf16.mxu0 0
    %2095 = vmatpush1.bf16.xpose.msra.mxu0 0
    %2096 = vmatprep.subr.bf16.mxu0 0
    %2097 = vmatpush1.bf16.xpose.msra.mxu0 0
    %2098 = vmatprep.subr.bf16.mxu0 0
    %2099 = vmatpush1.bf16.xpose.msra.mxu0 0
    %2100 = vmatprep.subr.bf16.mxu0 0
    %2101 = vmatpush1.bf16.xpose.msra.mxu0 0
    %2102 = vmatprep.subr.bf16.mxu0 0
    %2103 = vmatpush1.bf16.xpose.msra.mxu0 0
    %2104 = vmatprep.mubr.bf16.mxu0 0
    %2105 = vmatmul.mubr.bf16.gmra.mrb[0].mxu0 %v2067
    %v2106 = vpop.f32.mrb[0].mxu0
    %v2107 = vadd.f32 %v80, %v2106
    %v2108 = vpop.f32.mrb[0].mxu0
    %v2109 = vpop.f32.mrb[0].mxu0
    %v2110 = vadd.f32 %v81, %v2109
    %v2111 = vpop.f32.mrb[0].mxu0
    %2112 = vdwg.mxu0
    %2113 = vrot.lane.b32.xlu0 %v1985, 64
    %v2114 = vpop.permute.xlu0 %2113
    %v2116 = vsel %vm307, %v1985, 0
    %v2119 = vsel %vm307, %v2114, 0
    %2121 = vmatprep.subr.bf16.mxu0 0
    %2122 = vmatpush1.bf16.xpose.msra.mxu0 %v2119
    %2123 = vmatprep.subr.bf16.mxu0 0
    %2124 = vmatpush1.bf16.xpose.msra.mxu0 0
    %2125 = vmatprep.subr.bf16.mxu0 0
    %2126 = vmatpush1.bf16.xpose.msra.mxu0 0
    %2127 = vmatprep.subr.bf16.mxu0 0
    %2128 = vmatpush1.bf16.xpose.msra.mxu0 0
    %2129 = vmatprep.subr.bf16.mxu0 0
    %2130 = vmatpush1.bf16.xpose.msra.mxu0 0
    %2131 = vmatprep.subr.bf16.mxu0 0
    %2132 = vmatpush1.bf16.xpose.msra.mxu0 0
    %2133 = vmatprep.subr.bf16.mxu0 0
    %2134 = vmatpush1.bf16.xpose.msra.mxu0 0
    %2135 = vmatprep.subr.bf16.mxu0 0
    %2136 = vmatpush1.bf16.xpose.msra.mxu0 0
    %2137 = vmatprep.subr.bf16.mxu0 0
    %2138 = vmatpush1.bf16.xpose.msra.mxu0 0
    %2139 = vmatprep.subr.bf16.mxu0 0
    %2140 = vmatpush1.bf16.xpose.msra.mxu0 0
    %2141 = vmatprep.subr.bf16.mxu0 0
    %2142 = vmatpush1.bf16.xpose.msra.mxu0 0
    %2143 = vmatprep.subr.bf16.mxu0 0
    %2144 = vmatpush1.bf16.xpose.msra.mxu0 0
    %2145 = vmatprep.subr.bf16.mxu0 0
    %2146 = vmatpush1.bf16.xpose.msra.mxu0 0
    %2147 = vmatprep.subr.bf16.mxu0 0
    %2148 = vmatpush1.bf16.xpose.msra.mxu0 0
    %2149 = vmatprep.subr.bf16.mxu0 0
    %2150 = vmatpush1.bf16.xpose.msra.mxu0 0
    %2151 = vmatprep.subr.bf16.mxu0 0
    %2152 = vmatpush1.bf16.xpose.msra.mxu0 0
    %2153 = vmatprep.mubr.bf16.mxu0 0
    %2154 = vmatmul.mubr.bf16.gmra.mrb[0].mxu0 %v2116
    %v2155 = vpop.f32.mrb[0].mxu0
    %v2156 = vadd.f32 %v80, %v2155
    %v2157 = vpop.f32.mrb[0].mxu0
    %v2158 = vpop.f32.mrb[0].mxu0
    %v2159 = vadd.f32 %v81, %v2158
    %v2160 = vpop.f32.mrb[0].mxu0
    %2161 = vdwg.mxu0
    %2162 = vrot.lane.b32.xlu0 %v1987, 64
    %v2163 = vpop.permute.xlu0 %2162
    %v2165 = vsel %vm307, %v1987, 0
    %v2168 = vsel %vm307, %v2163, 0
    %2170 = vmatprep.subr.bf16.mxu0 0
    %2171 = vmatpush1.bf16.xpose.msra.mxu0 %v2168
    %2172 = vmatprep.subr.bf16.mxu0 0
    %2173 = vmatpush1.bf16.xpose.msra.mxu0 0
    %2174 = vmatprep.subr.bf16.mxu0 0
    %2175 = vmatpush1.bf16.xpose.msra.mxu0 0
    %2176 = vmatprep.subr.bf16.mxu0 0
    %2177 = vmatpush1.bf16.xpose.msra.mxu0 0
    %2178 = vmatprep.subr.bf16.mxu0 0
    %2179 = vmatpush1.bf16.xpose.msra.mxu0 0
    %2180 = vmatprep.subr.bf16.mxu0 0
    %2181 = vmatpush1.bf16.xpose.msra.mxu0 0
    %2182 = vmatprep.subr.bf16.mxu0 0
    %2183 = vmatpush1.bf16.xpose.msra.mxu0 0
    %2184 = vmatprep.subr.bf16.mxu0 0
    %2185 = vmatpush1.bf16.xpose.msra.mxu0 0
    %2186 = vmatprep.subr.bf16.mxu0 0
    %2187 = vmatpush1.bf16.xpose.msra.mxu0 0
    %2188 = vmatprep.subr.bf16.mxu0 0
    %2189 = vmatpush1.bf16.xpose.msra.mxu0 0
    %2190 = vmatprep.subr.bf16.mxu0 0
    %2191 = vmatpush1.bf16.xpose.msra.mxu0 0
    %2192 = vmatprep.subr.bf16.mxu0 0
    %2193 = vmatpush1.bf16.xpose.msra.mxu0 0
    %2194 = vmatprep.subr.bf16.mxu0 0
    %2195 = vmatpush1.bf16.xpose.msra.mxu0 0
    %2196 = vmatprep.subr.bf16.mxu0 0
    %2197 = vmatpush1.bf16.xpose.msra.mxu0 0
    %2198 = vmatprep.subr.bf16.mxu0 0
    %2199 = vmatpush1.bf16.xpose.msra.mxu0 0
    %2200 = vmatprep.subr.bf16.mxu0 0
    %2201 = vmatpush1.bf16.xpose.msra.mxu0 0
    %2202 = vmatprep.mubr.bf16.mxu0 0
    %2203 = vmatmul.mubr.bf16.gmra.mrb[0].mxu0 %v2165
    %v2204 = vpop.f32.mrb[0].mxu0
    %v2205 = vadd.f32 %v80, %v2204
    %v2206 = vpop.f32.mrb[0].mxu0
    %v2207 = vpop.f32.mrb[0].mxu0
    %v2208 = vadd.f32 %v81, %v2207
    %v2209 = vpop.f32.mrb[0].mxu0
    %2210 = vdwg.mxu0
    %2211 = vrot.lane.b32.xlu0 %v1979, 64
    %v2212 = vpop.permute.xlu0 %2211
    %v2214 = vsel %vm307, %v1979, 0
    %v2217 = vsel %vm307, %v2212, 0
    %2219 = vmatprep.subr.bf16.mxu0 0
    %2220 = vmatpush1.bf16.xpose.msra.mxu0 %v2217
    %2221 = vmatprep.subr.bf16.mxu0 0
    %2222 = vmatpush1.bf16.xpose.msra.mxu0 0
    %2223 = vmatprep.subr.bf16.mxu0 0
    %2224 = vmatpush1.bf16.xpose.msra.mxu0 0
    %2225 = vmatprep.subr.bf16.mxu0 0
    %2226 = vmatpush1.bf16.xpose.msra.mxu0 0
    %2227 = vmatprep.subr.bf16.mxu0 0
    %2228 = vmatpush1.bf16.xpose.msra.mxu0 0
    %2229 = vmatprep.subr.bf16.mxu0 0
    %2230 = vmatpush1.bf16.xpose.msra.mxu0 0
    %2231 = vmatprep.subr.bf16.mxu0 0
    %2232 = vmatpush1.bf16.xpose.msra.mxu0 0
    %2233 = vmatprep.subr.bf16.mxu0 0
    %2234 = vmatpush1.bf16.xpose.msra.mxu0 0
    %2235 = vmatprep.subr.bf16.mxu0 0
    %2236 = vmatpush1.bf16.xpose.msra.mxu0 0
    %2237 = vmatprep.subr.bf16.mxu0 0
    %2238 = vmatpush1.bf16.xpose.msra.mxu0 0
    %2239 = vmatprep.subr.bf16.mxu0 0
    %2240 = vmatpush1.bf16.xpose.msra.mxu0 0
    %2241 = vmatprep.subr.bf16.mxu0 0
    %2242 = vmatpush1.bf16.xpose.msra.mxu0 0
    %2243 = vmatprep.subr.bf16.mxu0 0
    %2244 = vmatpush1.bf16.xpose.msra.mxu0 0
    %2245 = vmatprep.subr.bf16.mxu0 0
    %2246 = vmatpush1.bf16.xpose.msra.mxu0 0
    %2247 = vmatprep.subr.bf16.mxu0 0
    %2248 = vmatpush1.bf16.xpose.msra.mxu0 0
    %2249 = vmatprep.subr.bf16.mxu0 0
    %2250 = vmatpush1.bf16.xpose.msra.mxu0 0
    %2251 = vmatprep.mubr.bf16.mxu0 0
    %2252 = vmatmul.mubr.bf16.gmra.mrb[0].mxu0 %v2214
    %v2253 = vpop.f32.mrb[0].mxu0
    %v2254 = vadd.f32 %v80, %v2253
    %v2255 = vpop.f32.mrb[0].mxu0
    %v2256 = vpop.f32.mrb[0].mxu0
    %v2257 = vadd.f32 %v81, %v2256
    %v2258 = vpop.f32.mrb[0].mxu0
    %2259 = vdwg.mxu0
    %2260 = vrot.lane.b32.xlu0 %v1990, 64
    %v2261 = vpop.permute.xlu0 %2260
    %v2263 = vsel %vm307, %v1990, 0
    %v2266 = vsel %vm307, %v2261, 0
    %2268 = vmatprep.subr.bf16.mxu0 0
    %2269 = vmatpush1.bf16.xpose.msra.mxu0 %v2266
    %2270 = vmatprep.subr.bf16.mxu0 0
    %2271 = vmatpush1.bf16.xpose.msra.mxu0 0
    %2272 = vmatprep.subr.bf16.mxu0 0
    %2273 = vmatpush1.bf16.xpose.msra.mxu0 0
    %2274 = vmatprep.subr.bf16.mxu0 0
    %2275 = vmatpush1.bf16.xpose.msra.mxu0 0
    %2276 = vmatprep.subr.bf16.mxu0 0
    %2277 = vmatpush1.bf16.xpose.msra.mxu0 0
    %2278 = vmatprep.subr.bf16.mxu0 0
    %2279 = vmatpush1.bf16.xpose.msra.mxu0 0
    %2280 = vmatprep.subr.bf16.mxu0 0
    %2281 = vmatpush1.bf16.xpose.msra.mxu0 0
    %2282 = vmatprep.subr.bf16.mxu0 0
    %2283 = vmatpush1.bf16.xpose.msra.mxu0 0
    %2284 = vmatprep.subr.bf16.mxu0 0
    %2285 = vmatpush1.bf16.xpose.msra.mxu0 0
    %2286 = vmatprep.subr.bf16.mxu0 0
    %2287 = vmatpush1.bf16.xpose.msra.mxu0 0
    %2288 = vmatprep.subr.bf16.mxu0 0
    %2289 = vmatpush1.bf16.xpose.msra.mxu0 0
    %2290 = vmatprep.subr.bf16.mxu0 0
    %2291 = vmatpush1.bf16.xpose.msra.mxu0 0
    %2292 = vmatprep.subr.bf16.mxu0 0
    %2293 = vmatpush1.bf16.xpose.msra.mxu0 0
    %2294 = vmatprep.subr.bf16.mxu0 0
    %2295 = vmatpush1.bf16.xpose.msra.mxu0 0
    %2296 = vmatprep.subr.bf16.mxu0 0
    %2297 = vmatpush1.bf16.xpose.msra.mxu0 0
    %2298 = vmatprep.subr.bf16.mxu0 0
    %2299 = vmatpush1.bf16.xpose.msra.mxu0 0
    %2300 = vmatprep.mubr.bf16.mxu0 0
    %2301 = vmatmul.mubr.bf16.gmra.mrb[0].mxu0 %v2263
    %v2302 = vpop.f32.mrb[0].mxu0
    %v2303 = vadd.f32 %v80, %v2302
    %v2304 = vpop.f32.mrb[0].mxu0
    %v2305 = vpop.f32.mrb[0].mxu0
    %v2306 = vadd.f32 %v81, %v2305
    %v2307 = vpop.f32.mrb[0].mxu0
    %2308 = vdwg.mxu0
    %2309 = vrot.lane.b32.xlu0 %v1992, 64
    %v2310 = vpop.permute.xlu0 %2309
    %v2312 = vsel %vm307, %v1992, 0
    %v2315 = vsel %vm307, %v2310, 0
    %2317 = vmatprep.subr.bf16.mxu0 0
    %2318 = vmatpush1.bf16.xpose.msra.mxu0 %v2315
    %2319 = vmatprep.subr.bf16.mxu0 0
    %2320 = vmatpush1.bf16.xpose.msra.mxu0 0
    %2321 = vmatprep.subr.bf16.mxu0 0
    %2322 = vmatpush1.bf16.xpose.msra.mxu0 0
    %2323 = vmatprep.subr.bf16.mxu0 0
    %2324 = vmatpush1.bf16.xpose.msra.mxu0 0
    %2325 = vmatprep.subr.bf16.mxu0 0
    %2326 = vmatpush1.bf16.xpose.msra.mxu0 0
    %2327 = vmatprep.subr.bf16.mxu0 0
    %2328 = vmatpush1.bf16.xpose.msra.mxu0 0
    %2329 = vmatprep.subr.bf16.mxu0 0
    %2330 = vmatpush1.bf16.xpose.msra.mxu0 0
    %2331 = vmatprep.subr.bf16.mxu0 0
    %2332 = vmatpush1.bf16.xpose.msra.mxu0 0
    %2333 = vmatprep.subr.bf16.mxu0 0
    %2334 = vmatpush1.bf16.xpose.msra.mxu0 0
    %2335 = vmatprep.subr.bf16.mxu0 0
    %2336 = vmatpush1.bf16.xpose.msra.mxu0 0
    %2337 = vmatprep.subr.bf16.mxu0 0
    %2338 = vmatpush1.bf16.xpose.msra.mxu0 0
    %2339 = vmatprep.subr.bf16.mxu0 0
    %2340 = vmatpush1.bf16.xpose.msra.mxu0 0
    %2341 = vmatprep.subr.bf16.mxu0 0
    %2342 = vmatpush1.bf16.xpose.msra.mxu0 0
    %2343 = vmatprep.subr.bf16.mxu0 0
    %2344 = vmatpush1.bf16.xpose.msra.mxu0 0
    %2345 = vmatprep.subr.bf16.mxu0 0
    %2346 = vmatpush1.bf16.xpose.msra.mxu0 0
    %2347 = vmatprep.subr.bf16.mxu0 0
    %2348 = vmatpush1.bf16.xpose.msra.mxu0 0
    %2349 = vmatprep.mubr.bf16.mxu0 0
    %2350 = vmatmul.mubr.bf16.gmra.mrb[0].mxu0 %v2312
    %v2351 = vpop.f32.mrb[0].mxu0
    %v2352 = vadd.f32 %v80, %v2351
    %v2353 = vpop.f32.mrb[0].mxu0
    %v2354 = vpop.f32.mrb[0].mxu0
    %v2355 = vadd.f32 %v81, %v2354
    %v2356 = vpop.f32.mrb[0].mxu0
    %2357 = vdwg.mxu0
    %2358 = vrot.lane.b32.xlu0 %v1994, 64
    %v2359 = vpop.permute.xlu0 %2358
    %v2361 = vsel %vm307, %v1994, 0
    %v2364 = vsel %vm307, %v2359, 0
    %2366 = vmatprep.subr.bf16.mxu0 0
    %2367 = vmatpush1.bf16.xpose.msra.mxu0 %v2364
    %2368 = vmatprep.subr.bf16.mxu0 0
    %2369 = vmatpush1.bf16.xpose.msra.mxu0 0
    %2370 = vmatprep.subr.bf16.mxu0 0
    %2371 = vmatpush1.bf16.xpose.msra.mxu0 0
    %2372 = vmatprep.subr.bf16.mxu0 0
    %2373 = vmatpush1.bf16.xpose.msra.mxu0 0
    %2374 = vmatprep.subr.bf16.mxu0 0
    %2375 = vmatpush1.bf16.xpose.msra.mxu0 0
    %2376 = vmatprep.subr.bf16.mxu0 0
    %2377 = vmatpush1.bf16.xpose.msra.mxu0 0
    %2378 = vmatprep.subr.bf16.mxu0 0
    %2379 = vmatpush1.bf16.xpose.msra.mxu0 0
    %2380 = vmatprep.subr.bf16.mxu0 0
    %2381 = vmatpush1.bf16.xpose.msra.mxu0 0
    %2382 = vmatprep.subr.bf16.mxu0 0
    %2383 = vmatpush1.bf16.xpose.msra.mxu0 0
    %2384 = vmatprep.subr.bf16.mxu0 0
    %2385 = vmatpush1.bf16.xpose.msra.mxu0 0
    %2386 = vmatprep.subr.bf16.mxu0 0
    %2387 = vmatpush1.bf16.xpose.msra.mxu0 0
    %2388 = vmatprep.subr.bf16.mxu0 0
    %2389 = vmatpush1.bf16.xpose.msra.mxu0 0
    %2390 = vmatprep.subr.bf16.mxu0 0
    %2391 = vmatpush1.bf16.xpose.msra.mxu0 0
    %2392 = vmatprep.subr.bf16.mxu0 0
    %2393 = vmatpush1.bf16.xpose.msra.mxu0 0
    %2394 = vmatprep.subr.bf16.mxu0 0
    %2395 = vmatpush1.bf16.xpose.msra.mxu0 0
    %2396 = vmatprep.subr.bf16.mxu0 0
    %2397 = vmatpush1.bf16.xpose.msra.mxu0 0
    %2398 = vmatprep.mubr.bf16.mxu0 0
    %2399 = vmatmul.mubr.bf16.gmra.mrb[0].mxu0 %v2361
    %v2400 = vpop.f32.mrb[0].mxu0
    %v2401 = vadd.f32 %v80, %v2400
    %v2402 = vpop.f32.mrb[0].mxu0
    %v2403 = vpop.f32.mrb[0].mxu0
    %v2404 = vadd.f32 %v81, %v2403
    %v2405 = vpop.f32.mrb[0].mxu0
    %2406 = vdwg.mxu0
    %v2407 = vsel %vm307, %v2058, -inf
    %2408 = vmax.xlane.f32.xlu0 %v2407
    %v2409 = vpop.xlane.xlu0 %2408
    %v2410 = vsel %vm307, %v2061, -inf
    %2411 = vmax.xlane.f32.xlu0 %v2410
    %v2412 = vpop.xlane.xlu0 %2411
    %v2413 = vsel %vm307, %v2107, -inf
    %2414 = vmax.xlane.f32.xlu0 %v2413
    %v2415 = vpop.xlane.xlu0 %2414
    %v2416 = vsel %vm307, %v2110, -inf
    %2417 = vmax.xlane.f32.xlu0 %v2416
    %v2418 = vpop.xlane.xlu0 %2417
    %v2419 = vsel %vm307, %v2156, -inf
    %2420 = vmax.xlane.f32.xlu0 %v2419
    %v2421 = vpop.xlane.xlu0 %2420
    %v2422 = vsel %vm307, %v2159, -inf
    %2423 = vmax.xlane.f32.xlu0 %v2422
    %v2424 = vpop.xlane.xlu0 %2423
    %v2425 = vsel %vm307, %v2205, -inf
    %2426 = vmax.xlane.f32.xlu0 %v2425
    %v2427 = vpop.xlane.xlu0 %2426
    %v2428 = vsel %vm307, %v2208, -inf
    %2429 = vmax.xlane.f32.xlu0 %v2428
    %v2430 = vpop.xlane.xlu0 %2429
    %v2431 = vsel %vm307, %v2254, -inf
    %2432 = vmax.xlane.f32.xlu0 %v2431
    %v2433 = vpop.xlane.xlu0 %2432
    %v2434 = vsel %vm307, %v2257, -inf
    %2435 = vmax.xlane.f32.xlu0 %v2434
    %v2436 = vpop.xlane.xlu0 %2435
    %v2437 = vsel %vm307, %v2303, -inf
    %2438 = vmax.xlane.f32.xlu0 %v2437
    %v2439 = vpop.xlane.xlu0 %2438
    %v2440 = vsel %vm307, %v2306, -inf
    %2441 = vmax.xlane.f32.xlu0 %v2440
    %v2442 = vpop.xlane.xlu0 %2441
    %v2443 = vsel %vm307, %v2352, -inf
    %2444 = vmax.xlane.f32.xlu0 %v2443
    %v2445 = vpop.xlane.xlu0 %2444
    %v2446 = vsel %vm307, %v2355, -inf
    %2447 = vmax.xlane.f32.xlu0 %v2446
    %v2448 = vpop.xlane.xlu0 %2447
    %v2449 = vsel %vm307, %v2401, -inf
    %2450 = vmax.xlane.f32.xlu0 %v2449
    %v2451 = vpop.xlane.xlu0 %2450
    %v2452 = vsel %vm307, %v2404, -inf
    %2453 = vmax.xlane.f32.xlu0 %v2452
    %v2454 = vpop.xlane.xlu0 %2453
    %v2455 = vsub.f32 %v2058, %v2409
    %v2456 = vsub.f32 %v2061, %v2412
    %v2457 = vsub.f32 %v2107, %v2415
    %v2458 = vsub.f32 %v2110, %v2418
    %v2459 = vsub.f32 %v2156, %v2421
    %v2460 = vsub.f32 %v2159, %v2424
    %v2461 = vsub.f32 %v2205, %v2427
    %v2462 = vsub.f32 %v2208, %v2430
    %v2463 = vsub.f32 %v2254, %v2433
    %v2464 = vsub.f32 %v2257, %v2436
    %v2465 = vsub.f32 %v2303, %v2439
    %v2466 = vsub.f32 %v2306, %v2442
    %v2467 = vsub.f32 %v2352, %v2445
    %v2468 = vsub.f32 %v2355, %v2448
    %v2469 = vsub.f32 %v2401, %v2451
    %v2470 = vsub.f32 %v2404, %v2454
    %v2471 = vmul.f32 %v2455, 1.442695
    %v2472 = vpow.pop %v2471
    %v2473 = vmul.f32 %v2456, 1.442695
    %v2474 = vpow.pop %v2473
    %v2475 = vmul.f32 %v2457, 1.442695
    %v2476 = vpow.pop %v2475
    %v2477 = vmul.f32 %v2458, 1.442695
    %v2478 = vpow.pop %v2477
    %v2479 = vmul.f32 %v2459, 1.442695
    %v2480 = vpow.pop %v2479
    %v2481 = vmul.f32 %v2460, 1.442695
    %v2482 = vpow.pop %v2481
    %v2483 = vmul.f32 %v2461, 1.442695
    %v2484 = vpow.pop %v2483
    %v2485 = vmul.f32 %v2462, 1.442695
    %v2486 = vpow.pop %v2485
    %v2487 = vmul.f32 %v2463, 1.442695
    %v2488 = vpow.pop %v2487
    %v2489 = vmul.f32 %v2464, 1.442695
    %v2490 = vpow.pop %v2489
    %v2491 = vmul.f32 %v2465, 1.442695
    %v2492 = vpow.pop %v2491
    %v2493 = vmul.f32 %v2466, 1.442695
    %v2494 = vpow.pop %v2493
    %v2495 = vmul.f32 %v2467, 1.442695
    %v2496 = vpow.pop %v2495
    %v2497 = vmul.f32 %v2468, 1.442695
    %v2498 = vpow.pop %v2497
    %v2499 = vmul.f32 %v2469, 1.442695
    %v2500 = vpow.pop %v2499
    %v2501 = vmul.f32 %v2470, 1.442695
    %v2502 = vpow.pop %v2501
    %v2503 = vsel %vm307, %v2472, 0.0
    %2504 = vadd.xlane.f32.xlu0 %v2503
    %v2505 = vpop.xlane.xlu0 %2504
    %v2506 = vsel %vm307, %v2474, 0.0
    %2507 = vadd.xlane.f32.xlu0 %v2506
    %v2508 = vpop.xlane.xlu0 %2507
    %v2509 = vsel %vm307, %v2476, 0.0
    %2510 = vadd.xlane.f32.xlu0 %v2509
    %v2511 = vpop.xlane.xlu0 %2510
    %v2512 = vsel %vm307, %v2478, 0.0
    %2513 = vadd.xlane.f32.xlu0 %v2512
    %v2514 = vpop.xlane.xlu0 %2513
    %v2515 = vsel %vm307, %v2480, 0.0
    %2516 = vadd.xlane.f32.xlu0 %v2515
    %v2517 = vpop.xlane.xlu0 %2516
    %v2518 = vsel %vm307, %v2482, 0.0
    %2519 = vadd.xlane.f32.xlu0 %v2518
    %v2520 = vpop.xlane.xlu0 %2519
    %v2521 = vsel %vm307, %v2484, 0.0
    %2522 = vadd.xlane.f32.xlu0 %v2521
    %v2523 = vpop.xlane.xlu0 %2522
    %v2524 = vsel %vm307, %v2486, 0.0
    %2525 = vadd.xlane.f32.xlu0 %v2524
    %v2526 = vpop.xlane.xlu0 %2525
    %v2527 = vsel %vm307, %v2488, 0.0
    %2528 = vadd.xlane.f32.xlu0 %v2527
    %v2529 = vpop.xlane.xlu0 %2528
    %v2530 = vsel %vm307, %v2490, 0.0
    %2531 = vadd.xlane.f32.xlu0 %v2530
    %v2532 = vpop.xlane.xlu0 %2531
    %v2533 = vsel %vm307, %v2492, 0.0
    %2534 = vadd.xlane.f32.xlu0 %v2533
    %v2535 = vpop.xlane.xlu0 %2534
    %v2536 = vsel %vm307, %v2494, 0.0
    %2537 = vadd.xlane.f32.xlu0 %v2536
    %v2538 = vpop.xlane.xlu0 %2537
    %v2539 = vsel %vm307, %v2496, 0.0
    %2540 = vadd.xlane.f32.xlu0 %v2539
    %v2541 = vpop.xlane.xlu0 %2540
    %v2542 = vsel %vm307, %v2498, 0.0
    %2543 = vadd.xlane.f32.xlu0 %v2542
    %v2544 = vpop.xlane.xlu0 %2543
    %v2545 = vsel %vm307, %v2500, 0.0
    %2546 = vadd.xlane.f32.xlu0 %v2545
    %v2547 = vpop.xlane.xlu0 %2546
    %v2548 = vsel %vm307, %v2502, 0.0
    %2549 = vadd.xlane.f32.xlu0 %v2548
    %v2550 = vpop.xlane.xlu0 %2549
    %v2551 = vrcp.pop %v2505
    %v2552 = vrcp.pop %v2508
    %v2553 = vrcp.pop %v2511
    %v2554 = vrcp.pop %v2514
    %v2555 = vrcp.pop %v2517
    %v2556 = vrcp.pop %v2520
    %v2557 = vrcp.pop %v2523
    %v2558 = vrcp.pop %v2526
    %v2559 = vrcp.pop %v2529
    %v2560 = vrcp.pop %v2532
    %v2561 = vrcp.pop %v2535
    %v2562 = vrcp.pop %v2538
    %v2563 = vrcp.pop %v2541
    %v2564 = vrcp.pop %v2544
    %v2565 = vrcp.pop %v2547
    %v2566 = vrcp.pop %v2550
    %v2567 = vmul.f32 %v2472, %v2551
    %v2568 = vmul.f32 %v2474, %v2552
    %v2569 = vmul.f32 %v2476, %v2553
    %v2570 = vmul.f32 %v2478, %v2554
    %v2571 = vmul.f32 %v2480, %v2555
    %v2572 = vmul.f32 %v2482, %v2556
    %v2573 = vmul.f32 %v2484, %v2557
    %v2574 = vmul.f32 %v2486, %v2558
    %v2575 = vmul.f32 %v2488, %v2559
    %v2576 = vmul.f32 %v2490, %v2560
    %v2577 = vmul.f32 %v2492, %v2561
    %v2578 = vmul.f32 %v2494, %v2562
    %v2579 = vmul.f32 %v2496, %v2563
    %v2580 = vmul.f32 %v2498, %v2564
    %v2581 = vmul.f32 %v2500, %v2565
    %v2582 = vmul.f32 %v2502, %v2566
    %v2583 = vpack.c.bf16 %v2568, %v2567
    %v2584 = vpack.c.bf16 %v2570, %v2569
    %v2585 = vpack.c.bf16 %v2572, %v2571
    %v2586 = vpack.c.bf16 %v2574, %v2573
    %v2587 = vpack.c.bf16 %v2576, %v2575
    %v2588 = vpack.c.bf16 %v2578, %v2577
    %v2589 = vpack.c.bf16 %v2580, %v2579
    %v2590 = vpack.c.bf16 %v2582, %v2581
    %v2592 = vsel %vm307, %v2583, 0
    %2594 = vmatprep.subr.bf16.mxu0 0
    %2595 = vmatpush1.bf16.msra.mxu0 %v1978
    %2596 = vmatprep.subr.bf16.mxu0 0
    %2597 = vmatpush1.bf16.msra.mxu0 0
    %2598 = vmatprep.subr.bf16.mxu0 0
    %2599 = vmatpush1.bf16.msra.mxu0 0
    %2600 = vmatprep.subr.bf16.mxu0 0
    %2601 = vmatpush1.bf16.msra.mxu0 0
    %2602 = vmatprep.subr.bf16.mxu0 0
    %2603 = vmatpush1.bf16.msra.mxu0 0
    %2604 = vmatprep.subr.bf16.mxu0 0
    %2605 = vmatpush1.bf16.msra.mxu0 0
    %2606 = vmatprep.subr.bf16.mxu0 0
    %2607 = vmatpush1.bf16.msra.mxu0 0
    %2608 = vmatprep.subr.bf16.mxu0 0
    %2609 = vmatpush1.bf16.msra.mxu0 0
    %2610 = vmatprep.subr.bf16.mxu0 0
    %2611 = vmatpush1.bf16.msra.mxu0 0
    %2612 = vmatprep.subr.bf16.mxu0 0
    %2613 = vmatpush1.bf16.msra.mxu0 0
    %2614 = vmatprep.subr.bf16.mxu0 0
    %2615 = vmatpush1.bf16.msra.mxu0 0
    %2616 = vmatprep.subr.bf16.mxu0 0
    %2617 = vmatpush1.bf16.msra.mxu0 0
    %2618 = vmatprep.subr.bf16.mxu0 0
    %2619 = vmatpush1.bf16.msra.mxu0 0
    %2620 = vmatprep.subr.bf16.mxu0 0
    %2621 = vmatpush1.bf16.msra.mxu0 0
    %2622 = vmatprep.subr.bf16.mxu0 0
    %2623 = vmatpush1.bf16.msra.mxu0 0
    %2624 = vmatprep.subr.bf16.mxu0 0
    %2625 = vmatpush1.bf16.msra.mxu0 0
    %2626 = vmatprep.mubr.bf16.mxu0 0
    %2627 = vmatmul.mubr.bf16.gmra.mrb[0].mxu0 %v2592
    %v2628 = vpop.f32.mrb[0].mxu0
    %v2629 = vadd.f32 0.0, %v2628
    %v2630 = vpop.f32.mrb[0].mxu0
    %v2631 = vpop.f32.mrb[0].mxu0
    %v2632 = vadd.f32 0.0, %v2631
    %v2633 = vpop.f32.mrb[0].mxu0
    %2634 = vdwg.mxu0
    %v2636 = vsel %vm307, %v2584, 0
    %2638 = vmatprep.subr.bf16.mxu0 0
    %2639 = vmatpush1.bf16.msra.mxu0 %v1997
    %2640 = vmatprep.subr.bf16.mxu0 0
    %2641 = vmatpush1.bf16.msra.mxu0 0
    %2642 = vmatprep.subr.bf16.mxu0 0
    %2643 = vmatpush1.bf16.msra.mxu0 0
    %2644 = vmatprep.subr.bf16.mxu0 0
    %2645 = vmatpush1.bf16.msra.mxu0 0
    %2646 = vmatprep.subr.bf16.mxu0 0
    %2647 = vmatpush1.bf16.msra.mxu0 0
    %2648 = vmatprep.subr.bf16.mxu0 0
    %2649 = vmatpush1.bf16.msra.mxu0 0
    %2650 = vmatprep.subr.bf16.mxu0 0
    %2651 = vmatpush1.bf16.msra.mxu0 0
    %2652 = vmatprep.subr.bf16.mxu0 0
    %2653 = vmatpush1.bf16.msra.mxu0 0
    %2654 = vmatprep.subr.bf16.mxu0 0
    %2655 = vmatpush1.bf16.msra.mxu0 0
    %2656 = vmatprep.subr.bf16.mxu0 0
    %2657 = vmatpush1.bf16.msra.mxu0 0
    %2658 = vmatprep.subr.bf16.mxu0 0
    %2659 = vmatpush1.bf16.msra.mxu0 0
    %2660 = vmatprep.subr.bf16.mxu0 0
    %2661 = vmatpush1.bf16.msra.mxu0 0
    %2662 = vmatprep.subr.bf16.mxu0 0
    %2663 = vmatpush1.bf16.msra.mxu0 0
    %2664 = vmatprep.subr.bf16.mxu0 0
    %2665 = vmatpush1.bf16.msra.mxu0 0
    %2666 = vmatprep.subr.bf16.mxu0 0
    %2667 = vmatpush1.bf16.msra.mxu0 0
    %2668 = vmatprep.subr.bf16.mxu0 0
    %2669 = vmatpush1.bf16.msra.mxu0 0
    %2670 = vmatprep.mubr.bf16.mxu0 0
    %2671 = vmatmul.mubr.bf16.gmra.mrb[0].mxu0 %v2636
    %v2672 = vpop.f32.mrb[0].mxu0
    %v2673 = vadd.f32 0.0, %v2672
    %v2674 = vpop.f32.mrb[0].mxu0
    %v2675 = vpop.f32.mrb[0].mxu0
    %v2676 = vadd.f32 0.0, %v2675
    %v2677 = vpop.f32.mrb[0].mxu0
    %2678 = vdwg.mxu0
    %v2680 = vsel %vm307, %v2585, 0
    %2682 = vmatprep.subr.bf16.mxu0 0
    %2683 = vmatpush1.bf16.msra.mxu0 %v2000
    %2684 = vmatprep.subr.bf16.mxu0 0
    %2685 = vmatpush1.bf16.msra.mxu0 0
    %2686 = vmatprep.subr.bf16.mxu0 0
    %2687 = vmatpush1.bf16.msra.mxu0 0
    %2688 = vmatprep.subr.bf16.mxu0 0
    %2689 = vmatpush1.bf16.msra.mxu0 0
    %2690 = vmatprep.subr.bf16.mxu0 0
    %2691 = vmatpush1.bf16.msra.mxu0 0
    %2692 = vmatprep.subr.bf16.mxu0 0
    %2693 = vmatpush1.bf16.msra.mxu0 0
    %2694 = vmatprep.subr.bf16.mxu0 0
    %2695 = vmatpush1.bf16.msra.mxu0 0
    %2696 = vmatprep.subr.bf16.mxu0 0
    %2697 = vmatpush1.bf16.msra.mxu0 0
    %2698 = vmatprep.subr.bf16.mxu0 0
    %2699 = vmatpush1.bf16.msra.mxu0 0
    %2700 = vmatprep.subr.bf16.mxu0 0
    %2701 = vmatpush1.bf16.msra.mxu0 0
    %2702 = vmatprep.subr.bf16.mxu0 0
    %2703 = vmatpush1.bf16.msra.mxu0 0
    %2704 = vmatprep.subr.bf16.mxu0 0
    %2705 = vmatpush1.bf16.msra.mxu0 0
    %2706 = vmatprep.subr.bf16.mxu0 0
    %2707 = vmatpush1.bf16.msra.mxu0 0
    %2708 = vmatprep.subr.bf16.mxu0 0
    %2709 = vmatpush1.bf16.msra.mxu0 0
    %2710 = vmatprep.subr.bf16.mxu0 0
    %2711 = vmatpush1.bf16.msra.mxu0 0
    %2712 = vmatprep.subr.bf16.mxu0 0
    %2713 = vmatpush1.bf16.msra.mxu0 0
    %2714 = vmatprep.mubr.bf16.mxu0 0
    %2715 = vmatmul.mubr.bf16.gmra.mrb[0].mxu0 %v2680
    %v2716 = vpop.f32.mrb[0].mxu0
    %v2717 = vadd.f32 0.0, %v2716
    %v2718 = vpop.f32.mrb[0].mxu0
    %v2719 = vpop.f32.mrb[0].mxu0
    %v2720 = vadd.f32 0.0, %v2719
    %v2721 = vpop.f32.mrb[0].mxu0
    %2722 = vdwg.mxu0
    %v2724 = vsel %vm307, %v2586, 0
    %2726 = vmatprep.subr.bf16.mxu0 0
    %2727 = vmatpush1.bf16.msra.mxu0 %v2003
    %2728 = vmatprep.subr.bf16.mxu0 0
    %2729 = vmatpush1.bf16.msra.mxu0 0
    %2730 = vmatprep.subr.bf16.mxu0 0
    %2731 = vmatpush1.bf16.msra.mxu0 0
    %2732 = vmatprep.subr.bf16.mxu0 0
    %2733 = vmatpush1.bf16.msra.mxu0 0
    %2734 = vmatprep.subr.bf16.mxu0 0
    %2735 = vmatpush1.bf16.msra.mxu0 0
    %2736 = vmatprep.subr.bf16.mxu0 0
    %2737 = vmatpush1.bf16.msra.mxu0 0
    %2738 = vmatprep.subr.bf16.mxu0 0
    %2739 = vmatpush1.bf16.msra.mxu0 0
    %2740 = vmatprep.subr.bf16.mxu0 0
    %2741 = vmatpush1.bf16.msra.mxu0 0
    %2742 = vmatprep.subr.bf16.mxu0 0
    %2743 = vmatpush1.bf16.msra.mxu0 0
    %2744 = vmatprep.subr.bf16.mxu0 0
    %2745 = vmatpush1.bf16.msra.mxu0 0
    %2746 = vmatprep.subr.bf16.mxu0 0
    %2747 = vmatpush1.bf16.msra.mxu0 0
    %2748 = vmatprep.subr.bf16.mxu0 0
    %2749 = vmatpush1.bf16.msra.mxu0 0
    %2750 = vmatprep.subr.bf16.mxu0 0
    %2751 = vmatpush1.bf16.msra.mxu0 0
    %2752 = vmatprep.subr.bf16.mxu0 0
    %2753 = vmatpush1.bf16.msra.mxu0 0
    %2754 = vmatprep.subr.bf16.mxu0 0
    %2755 = vmatpush1.bf16.msra.mxu0 0
    %2756 = vmatprep.subr.bf16.mxu0 0
    %2757 = vmatpush1.bf16.msra.mxu0 0
    %2758 = vmatprep.mubr.bf16.mxu0 0
    %2759 = vmatmul.mubr.bf16.gmra.mrb[0].mxu0 %v2724
    %v2760 = vpop.f32.mrb[0].mxu0
    %v2761 = vadd.f32 0.0, %v2760
    %v2762 = vpop.f32.mrb[0].mxu0
    %v2763 = vpop.f32.mrb[0].mxu0
    %v2764 = vadd.f32 0.0, %v2763
    %v2765 = vpop.f32.mrb[0].mxu0
    %2766 = vdwg.mxu0
    %v2768 = vsel %vm307, %v2587, 0
    %2770 = vmatprep.subr.bf16.mxu0 0
    %2771 = vmatpush1.bf16.msra.mxu0 %v1980
    %2772 = vmatprep.subr.bf16.mxu0 0
    %2773 = vmatpush1.bf16.msra.mxu0 0
    %2774 = vmatprep.subr.bf16.mxu0 0
    %2775 = vmatpush1.bf16.msra.mxu0 0
    %2776 = vmatprep.subr.bf16.mxu0 0
    %2777 = vmatpush1.bf16.msra.mxu0 0
    %2778 = vmatprep.subr.bf16.mxu0 0
    %2779 = vmatpush1.bf16.msra.mxu0 0
    %2780 = vmatprep.subr.bf16.mxu0 0
    %2781 = vmatpush1.bf16.msra.mxu0 0
    %2782 = vmatprep.subr.bf16.mxu0 0
    %2783 = vmatpush1.bf16.msra.mxu0 0
    %2784 = vmatprep.subr.bf16.mxu0 0
    %2785 = vmatpush1.bf16.msra.mxu0 0
    %2786 = vmatprep.subr.bf16.mxu0 0
    %2787 = vmatpush1.bf16.msra.mxu0 0
    %2788 = vmatprep.subr.bf16.mxu0 0
    %2789 = vmatpush1.bf16.msra.mxu0 0
    %2790 = vmatprep.subr.bf16.mxu0 0
    %2791 = vmatpush1.bf16.msra.mxu0 0
    %2792 = vmatprep.subr.bf16.mxu0 0
    %2793 = vmatpush1.bf16.msra.mxu0 0
    %2794 = vmatprep.subr.bf16.mxu0 0
    %2795 = vmatpush1.bf16.msra.mxu0 0
    %2796 = vmatprep.subr.bf16.mxu0 0
    %2797 = vmatpush1.bf16.msra.mxu0 0
    %2798 = vmatprep.subr.bf16.mxu0 0
    %2799 = vmatpush1.bf16.msra.mxu0 0
    %2800 = vmatprep.subr.bf16.mxu0 0
    %2801 = vmatpush1.bf16.msra.mxu0 0
    %2802 = vmatprep.mubr.bf16.mxu0 0
    %2803 = vmatmul.mubr.bf16.gmra.mrb[0].mxu0 %v2768
    %v2804 = vpop.f32.mrb[0].mxu0
    %v2805 = vadd.f32 0.0, %v2804
    %v2806 = vpop.f32.mrb[0].mxu0
    %v2807 = vpop.f32.mrb[0].mxu0
    %v2808 = vadd.f32 0.0, %v2807
    %v2809 = vpop.f32.mrb[0].mxu0
    %2810 = vdwg.mxu0
    %v2812 = vsel %vm307, %v2588, 0
    %2814 = vmatprep.subr.bf16.mxu0 0
    %2815 = vmatpush1.bf16.msra.mxu0 %v2007
    %2816 = vmatprep.subr.bf16.mxu0 0
    %2817 = vmatpush1.bf16.msra.mxu0 0
    %2818 = vmatprep.subr.bf16.mxu0 0
    %2819 = vmatpush1.bf16.msra.mxu0 0
    %2820 = vmatprep.subr.bf16.mxu0 0
    %2821 = vmatpush1.bf16.msra.mxu0 0
    %2822 = vmatprep.subr.bf16.mxu0 0
    %2823 = vmatpush1.bf16.msra.mxu0 0
    %2824 = vmatprep.subr.bf16.mxu0 0
    %2825 = vmatpush1.bf16.msra.mxu0 0
    %2826 = vmatprep.subr.bf16.mxu0 0
    %2827 = vmatpush1.bf16.msra.mxu0 0
    %2828 = vmatprep.subr.bf16.mxu0 0
    %2829 = vmatpush1.bf16.msra.mxu0 0
    %2830 = vmatprep.subr.bf16.mxu0 0
    %2831 = vmatpush1.bf16.msra.mxu0 0
    %2832 = vmatprep.subr.bf16.mxu0 0
    %2833 = vmatpush1.bf16.msra.mxu0 0
    %2834 = vmatprep.subr.bf16.mxu0 0
    %2835 = vmatpush1.bf16.msra.mxu0 0
    %2836 = vmatprep.subr.bf16.mxu0 0
    %2837 = vmatpush1.bf16.msra.mxu0 0
    %2838 = vmatprep.subr.bf16.mxu0 0
    %2839 = vmatpush1.bf16.msra.mxu0 0
    %2840 = vmatprep.subr.bf16.mxu0 0
    %2841 = vmatpush1.bf16.msra.mxu0 0
    %2842 = vmatprep.subr.bf16.mxu0 0
    %2843 = vmatpush1.bf16.msra.mxu0 0
    %2844 = vmatprep.subr.bf16.mxu0 0
    %2845 = vmatpush1.bf16.msra.mxu0 0
    %2846 = vmatprep.mubr.bf16.mxu0 0
    %2847 = vmatmul.mubr.bf16.gmra.mrb[0].mxu0 %v2812
    %v2848 = vpop.f32.mrb[0].mxu0
    %v2849 = vadd.f32 0.0, %v2848
    %v2850 = vpop.f32.mrb[0].mxu0
    %v2851 = vpop.f32.mrb[0].mxu0
    %v2852 = vadd.f32 0.0, %v2851
    %v2853 = vpop.f32.mrb[0].mxu0
    %2854 = vdwg.mxu0
    %v2856 = vsel %vm307, %v2589, 0
    %2858 = vmatprep.subr.bf16.mxu0 0
    %2859 = vmatpush1.bf16.msra.mxu0 %v2010
    %2860 = vmatprep.subr.bf16.mxu0 0
    %2861 = vmatpush1.bf16.msra.mxu0 0
    %2862 = vmatprep.subr.bf16.mxu0 0
    %2863 = vmatpush1.bf16.msra.mxu0 0
    %2864 = vmatprep.subr.bf16.mxu0 0
    %2865 = vmatpush1.bf16.msra.mxu0 0
    %2866 = vmatprep.subr.bf16.mxu0 0
    %2867 = vmatpush1.bf16.msra.mxu0 0
    %2868 = vmatprep.subr.bf16.mxu0 0
    %2869 = vmatpush1.bf16.msra.mxu0 0
    %2870 = vmatprep.subr.bf16.mxu0 0
    %2871 = vmatpush1.bf16.msra.mxu0 0
    %2872 = vmatprep.subr.bf16.mxu0 0
    %2873 = vmatpush1.bf16.msra.mxu0 0
    %2874 = vmatprep.subr.bf16.mxu0 0
    %2875 = vmatpush1.bf16.msra.mxu0 0
    %2876 = vmatprep.subr.bf16.mxu0 0
    %2877 = vmatpush1.bf16.msra.mxu0 0
    %2878 = vmatprep.subr.bf16.mxu0 0
    %2879 = vmatpush1.bf16.msra.mxu0 0
    %2880 = vmatprep.subr.bf16.mxu0 0
    %2881 = vmatpush1.bf16.msra.mxu0 0
    %2882 = vmatprep.subr.bf16.mxu0 0
    %2883 = vmatpush1.bf16.msra.mxu0 0
    %2884 = vmatprep.subr.bf16.mxu0 0
    %2885 = vmatpush1.bf16.msra.mxu0 0
    %2886 = vmatprep.subr.bf16.mxu0 0
    %2887 = vmatpush1.bf16.msra.mxu0 0
    %2888 = vmatprep.subr.bf16.mxu0 0
    %2889 = vmatpush1.bf16.msra.mxu0 0
    %2890 = vmatprep.mubr.bf16.mxu0 0
    %2891 = vmatmul.mubr.bf16.gmra.mrb[0].mxu0 %v2856
    %v2892 = vpop.f32.mrb[0].mxu0
    %v2893 = vadd.f32 0.0, %v2892
    %v2894 = vpop.f32.mrb[0].mxu0
    %v2895 = vpop.f32.mrb[0].mxu0
    %v2896 = vadd.f32 0.0, %v2895
    %v2897 = vpop.f32.mrb[0].mxu0
    %2898 = vdwg.mxu0
    %v2900 = vsel %vm307, %v2590, 0
    %2902 = vmatprep.subr.bf16.mxu0 0
    %2903 = vmatpush1.bf16.msra.mxu0 %v2013
    %2904 = vmatprep.subr.bf16.mxu0 0
    %2905 = vmatpush1.bf16.msra.mxu0 0
    %2906 = vmatprep.subr.bf16.mxu0 0
    %2907 = vmatpush1.bf16.msra.mxu0 0
    %2908 = vmatprep.subr.bf16.mxu0 0
    %2909 = vmatpush1.bf16.msra.mxu0 0
    %2910 = vmatprep.subr.bf16.mxu0 0
    %2911 = vmatpush1.bf16.msra.mxu0 0
    %2912 = vmatprep.subr.bf16.mxu0 0
    %2913 = vmatpush1.bf16.msra.mxu0 0
    %2914 = vmatprep.subr.bf16.mxu0 0
    %2915 = vmatpush1.bf16.msra.mxu0 0
    %2916 = vmatprep.subr.bf16.mxu0 0
    %2917 = vmatpush1.bf16.msra.mxu0 0
    %2918 = vmatprep.subr.bf16.mxu0 0
    %2919 = vmatpush1.bf16.msra.mxu0 0
    %2920 = vmatprep.subr.bf16.mxu0 0
    %2921 = vmatpush1.bf16.msra.mxu0 0
    %2922 = vmatprep.subr.bf16.mxu0 0
    %2923 = vmatpush1.bf16.msra.mxu0 0
    %2924 = vmatprep.subr.bf16.mxu0 0
    %2925 = vmatpush1.bf16.msra.mxu0 0
    %2926 = vmatprep.subr.bf16.mxu0 0
    %2927 = vmatpush1.bf16.msra.mxu0 0
    %2928 = vmatprep.subr.bf16.mxu0 0
    %2929 = vmatpush1.bf16.msra.mxu0 0
    %2930 = vmatprep.subr.bf16.mxu0 0
    %2931 = vmatpush1.bf16.msra.mxu0 0
    %2932 = vmatprep.subr.bf16.mxu0 0
    %2933 = vmatpush1.bf16.msra.mxu0 0
    %2934 = vmatprep.mubr.bf16.mxu0 0
    %2935 = vmatmul.mubr.bf16.gmra.mrb[0].mxu0 %v2900
    %v2936 = vpop.f32.mrb[0].mxu0
    %v2937 = vadd.f32 0.0, %v2936
    %v2938 = vpop.f32.mrb[0].mxu0
    %v2939 = vpop.f32.mrb[0].mxu0
    %v2940 = vadd.f32 0.0, %v2939
    %v2941 = vpop.f32.mrb[0].mxu0
    %2942 = vdwg.mxu0
    %2945 = vrot.lane.b32.xlu0 %v2673, 16
    %v2946 = vpop.permute.xlu0 %2945
    %2947 = vrot.lane.b32.xlu0 %v2676, 16
    %v2948 = vpop.permute.xlu0 %2947
    %2953 = vrot.lane.b32.xlu0 %v2717, 32
    %v2954 = vpop.permute.xlu0 %2953
    %2955 = vrot.lane.b32.xlu0 %v2720, 32
    %v2956 = vpop.permute.xlu0 %2955
    %2961 = vrot.lane.b32.xlu0 %v2761, 48
    %v2962 = vpop.permute.xlu0 %2961
    %2963 = vrot.lane.b32.xlu0 %v2764, 48
    %v2964 = vpop.permute.xlu0 %2963
    %v2967 = vsel %vm307, %v2629, %v2946
    %v2968 = vsel %vm307, %v2632, %v2948
    %v2969 = vsel %vm1260, %v2967, %v2954
    %v2970 = vsel %vm1260, %v2968, %v2956
    %v2971 = vsel %vm1263, %v2969, %v2962
    %v2972 = vsel %vm1263, %v2970, %v2964
    %2975 = vrot.lane.b32.xlu0 %v2849, 16
    %v2976 = vpop.permute.xlu0 %2975
    %2977 = vrot.lane.b32.xlu0 %v2852, 16
    %v2978 = vpop.permute.xlu0 %2977
    %2983 = vrot.lane.b32.xlu0 %v2893, 32
    %v2984 = vpop.permute.xlu0 %2983
    %2985 = vrot.lane.b32.xlu0 %v2896, 32
    %v2986 = vpop.permute.xlu0 %2985
    %2991 = vrot.lane.b32.xlu0 %v2937, 48
    %v2992 = vpop.permute.xlu0 %2991
    %2993 = vrot.lane.b32.xlu0 %v2940, 48
    %v2994 = vpop.permute.xlu0 %2993
    %v2997 = vsel %vm307, %v2805, %v2976
    %v2998 = vsel %vm307, %v2808, %v2978
    %v2999 = vsel %vm1260, %v2997, %v2984
    %v3000 = vsel %vm1260, %v2998, %v2986
    %v3001 = vsel %vm1263, %v2999, %v2992
    %v3002 = vsel %vm1263, %v3000, %v2994
    %v3003 = vpack.c.bf16 %v2972, %v2971
    %v3004 = vpack.c.bf16 %v3002, %v3001
    %s3005 = scalar_lea.vmem %s4, 32
    %v3006 = vld [vmem:[%s3005] sm:$0xf]
    %v3007 = vld [vmem:[%s3005 + $0x4] sm:$0xf]
    %v3008 = vld [vmem:[%s3005 + $0x8] sm:$0xf]
    %v3009 = vld [vmem:[%s3005 + $0xc] sm:$0xf]
    %v3010 = vld [vmem:[%s3005 + $0x10] sm:$0xf]
    %v3011 = vld [vmem:[%s3005 + $0x14] sm:$0xf]
    %v3012 = vld [vmem:[%s3005 + $0x18] sm:$0xf]
    %v3013 = vld [vmem:[%s3005 + $0x1c] sm:$0xf]
    %s3014 = scalar_lea.vmem %s5, 1
    %v3015 = vld [vmem:[%s3014] sm:$0x1]
    %v3017 = vlaneseq
    %v3018 = vshrl.u32 %v3017, 7
    %v3019 = vsub.s32 0, %v3018
    %v3020 = vrot.slane %v3015, %v3019
    %v3030 = vunpack.c.l.b16 %v3006
    %v3031 = vunpack.c.l.b16 %v3007
    %v3032 = vunpack.c.l.b16 %v3008
    %v3033 = vunpack.c.l.b16 %v3009
    %v3034 = vunpack.c.l.b16 %v3010
    %v3035 = vunpack.c.l.b16 %v3011
    %v3036 = vunpack.c.l.b16 %v3012
    %v3037 = vunpack.c.l.b16 %v3013
    %v3038 = vpack.c.b16 %v3031, %v3030
    %v3039 = vpack.c.b16 %v3033, %v3032
    %v3040 = vpack.c.b16 %v3035, %v3034
    %v3041 = vpack.c.b16 %v3037, %v3036
    %v3047 = vsel %vm84, %v3003, 0
    %v3050 = vsel %vm84, %v3004, 0
    %3052 = vmatprep.subr.bf16.mxu0 0
    %3053 = vmatpush1.bf16.msra.mxu0 %v3038
    %3054 = vmatprep.subr.bf16.mxu0 0
    %3055 = vmatpush1.bf16.msra.mxu0 %v3039
    %3056 = vmatprep.subr.bf16.mxu0 0
    %3057 = vmatpush1.bf16.msra.mxu0 %v3040
    %3058 = vmatprep.subr.bf16.mxu0 0
    %3059 = vmatpush1.bf16.msra.mxu0 %v3041
    %3060 = vmatprep.subr.bf16.mxu0 0
    %3061 = vmatpush1.bf16.msra.mxu0 0
    %3062 = vmatprep.subr.bf16.mxu0 0
    %3063 = vmatpush1.bf16.msra.mxu0 0
    %3064 = vmatprep.subr.bf16.mxu0 0
    %3065 = vmatpush1.bf16.msra.mxu0 0
    %3066 = vmatprep.subr.bf16.mxu0 0
    %3067 = vmatpush1.bf16.msra.mxu0 0
    %3068 = vmatprep.subr.bf16.mxu0 0
    %3069 = vmatpush1.bf16.msra.mxu0 0
    %3070 = vmatprep.subr.bf16.mxu0 0
    %3071 = vmatpush1.bf16.msra.mxu0 0
    %3072 = vmatprep.subr.bf16.mxu0 0
    %3073 = vmatpush1.bf16.msra.mxu0 0
    %3074 = vmatprep.subr.bf16.mxu0 0
    %3075 = vmatpush1.bf16.msra.mxu0 0
    %3076 = vmatprep.subr.bf16.mxu0 0
    %3077 = vmatpush1.bf16.msra.mxu0 0
    %3078 = vmatprep.subr.bf16.mxu0 0
    %3079 = vmatpush1.bf16.msra.mxu0 0
    %3080 = vmatprep.subr.bf16.mxu0 0
    %3081 = vmatpush1.bf16.msra.mxu0 0
    %3082 = vmatprep.subr.bf16.mxu0 0
    %3083 = vmatpush1.bf16.msra.mxu0 0
    %3084 = vmatprep.mubr.bf16.mxu0 0
    %3085 = vmatmul.mubr.bf16.gmra.mrb[0].mxu0 %v3047
    %v3086 = vpop.f32.mrb[0].mxu0
    %v3087 = vadd.f32 %v3020, %v3086
    %v3088 = vpop.f32.mrb[0].mxu0
    %v3089 = vpop.f32.mrb[0].mxu0
    %v3090 = vadd.f32 %v3020, %v3089
    %v3091 = vpop.f32.mrb[0].mxu0
    %3092 = vmatprep.mubr.bf16.mxu0 0
    %3093 = vmatmul.mubr.bf16.gmra.mrb[0].mxu0 %v3050
    %v3094 = vpop.f32.mrb[0].mxu0
    %v3095 = vadd.f32 %v3020, %v3094
    %v3096 = vpop.f32.mrb[0].mxu0
    %v3097 = vpop.f32.mrb[0].mxu0
    %v3098 = vadd.f32 %v3020, %v3097
    %v3099 = vpop.f32.mrb[0].mxu0
    %3100 = vdwg.mxu0
    %v3101 = vadd.f32 %v1787, %v3087
    %v3102 = vadd.f32 %v1788, %v3090
    %v3103 = vadd.f32 %v1789, %v3095
    %v3104 = vadd.f32 %v1790, %v3098
    %s3105 = scalar_lea.vmem %s6, 1
    %v3106 = vld [vmem:[%s3105] sm:$0x1]
    %s3107 = scalar_lea.vmem %s7, 1
    %v3108 = vld [vmem:[%s3107] sm:$0x1]
    %v3109 = vsel %vm84, %v3101, 0.0
    %3110 = vadd.xlane.f32.xlu0 %v3109
    %v3111 = vpop.xlane.xlu0 %3110
    %v3112 = vsel %vm84, %v3102, 0.0
    %3113 = vadd.xlane.f32.xlu0 %v3112
    %v3114 = vpop.xlane.xlu0 %3113
    %v3115 = vsel %vm84, %v3103, 0.0
    %3116 = vadd.xlane.f32.xlu0 %v3115
    %v3117 = vpop.xlane.xlu0 %3116
    %v3118 = vsel %vm84, %v3104, 0.0
    %3119 = vadd.xlane.f32.xlu0 %v3118
    %v3120 = vpop.xlane.xlu0 %3119
    %v3121 = vmul.f32 %v3111, %v97
    %v3122 = vmul.f32 %v3114, %v97
    %v3123 = vmul.f32 %v3117, %v97
    %v3124 = vmul.f32 %v3120, %v97
    %v3125 = vsub.f32 %v3101, %v3121
    %v3126 = vsub.f32 %v3102, %v3122
    %v3127 = vsub.f32 %v3103, %v3123
    %v3128 = vsub.f32 %v3104, %v3124
    %v3129 = vmul.f32 %v3125, %v3125
    %v3130 = vmul.f32 %v3126, %v3126
    %v3131 = vmul.f32 %v3127, %v3127
    %v3132 = vmul.f32 %v3128, %v3128
    %v3133 = vsel %vm84, %v3129, 0.0
    %3134 = vadd.xlane.f32.xlu0 %v3133
    %v3135 = vpop.xlane.xlu0 %3134
    %v3136 = vsel %vm84, %v3130, 0.0
    %3137 = vadd.xlane.f32.xlu0 %v3136
    %v3138 = vpop.xlane.xlu0 %3137
    %v3139 = vsel %vm84, %v3131, 0.0
    %3140 = vadd.xlane.f32.xlu0 %v3139
    %v3141 = vpop.xlane.xlu0 %3140
    %v3142 = vsel %vm84, %v3132, 0.0
    %3143 = vadd.xlane.f32.xlu0 %v3142
    %v3144 = vpop.xlane.xlu0 %3143
    %v3145 = vmul.f32 %v3135, %v97
    %v3146 = vmul.f32 %v3138, %v97
    %v3147 = vmul.f32 %v3141, %v97
    %v3148 = vmul.f32 %v3144, %v97
    %v3149 = vadd.f32 %v3145, 1e-05
    %v3150 = vadd.f32 %v3146, 1e-05
    %v3151 = vadd.f32 %v3147, 1e-05
    %v3152 = vadd.f32 %v3148, 1e-05
    %v3153 = vrsqrt.pop %v3149
    %v3154 = vrsqrt.pop %v3150
    %v3155 = vrsqrt.pop %v3151
    %v3156 = vrsqrt.pop %v3152
    %v3157 = vmul.f32 %v3125, %v3153
    %v3158 = vmul.f32 %v3126, %v3154
    %v3159 = vmul.f32 %v3127, %v3155
    %v3160 = vmul.f32 %v3128, %v3156
    %v3162 = vlaneseq
    %v3163 = vshrl.u32 %v3162, 7
    %v3164 = vsub.s32 0, %v3163
    %v3165 = vrot.slane %v3106, %v3164
    %v3167 = vmul.f32 %v3157, %v3165
    %v3168 = vmul.f32 %v3158, %v3165
    %v3169 = vmul.f32 %v3159, %v3165
    %v3170 = vmul.f32 %v3160, %v3165
    %v3172 = vlaneseq
    %v3173 = vshrl.u32 %v3172, 7
    %v3174 = vsub.s32 0, %v3173
    %v3175 = vrot.slane %v3108, %v3174
    %v3177 = vadd.f32 %v3167, %v3175
    %v3178 = vadd.f32 %v3168, %v3175
    %v3179 = vadd.f32 %v3169, %v3175
    %v3180 = vadd.f32 %v3170, %v3175
    %v3181 = vpack.c.bf16 %v3178, %v3177
    %v3182 = vpack.c.bf16 %v3180, %v3179
    %s3183 = scalar_lea.vmem %s8, 64
    %v3184 = vld [vmem:[%s3183] sm:$0xff]
    %v3185 = vld [vmem:[%s3183 + $0x8] sm:$0xff]
    %v3186 = vld [vmem:[%s3183 + $0x10] sm:$0xff]
    %v3187 = vld [vmem:[%s3183 + $0x18] sm:$0xff]
    %v3188 = vld [vmem:[%s3183 + $0x20] sm:$0xff]
    %v3189 = vld [vmem:[%s3183 + $0x28] sm:$0xff]
    %v3190 = vld [vmem:[%s3183 + $0x30] sm:$0xff]
    %v3191 = vld [vmem:[%s3183 + $0x38] sm:$0xff]
    %s3192 = scalar_lea.vmem %s9, 2
    %v3193 = vld [vmem:[%s3192] sm:$0x3]
    %v3195 = vlaneseq
    %v3196 = vshrl.u32 %v3195, 7
    %v3197 = vsub.s32 0, %v3196
    %v3198 = vrot.slane %v3193, %v3197
    %v3199 = vlaneseq
    %v3200 = vshrl.u32 %v3199, 7
    %v3201 = vsub.s32 1, %v3200
    %v3202 = vrot.slane %v3193, %v3201
    %v3213 = vunpack.c.l.b16 %v3184
    %v3214 = vunpack.c.h.b16 %v3184
    %v3215 = vunpack.c.l.b16 %v3185
    %v3216 = vunpack.c.h.b16 %v3185
    %v3217 = vunpack.c.l.b16 %v3186
    %v3218 = vunpack.c.h.b16 %v3186
    %v3219 = vunpack.c.l.b16 %v3187
    %v3220 = vunpack.c.h.b16 %v3187
    %v3221 = vunpack.c.l.b16 %v3188
    %v3222 = vunpack.c.h.b16 %v3188
    %v3223 = vunpack.c.l.b16 %v3189
    %v3224 = vunpack.c.h.b16 %v3189
    %v3225 = vunpack.c.l.b16 %v3190
    %v3226 = vunpack.c.h.b16 %v3190
    %v3227 = vunpack.c.l.b16 %v3191
    %v3228 = vunpack.c.h.b16 %v3191
    %v3229 = vpack.c.b16 %v3215, %v3213
    %v3230 = vpack.c.b16 %v3216, %v3214
    %v3231 = vpack.c.b16 %v3219, %v3217
    %v3232 = vpack.c.b16 %v3220, %v3218
    %v3233 = vpack.c.b16 %v3223, %v3221
    %v3234 = vpack.c.b16 %v3224, %v3222
    %v3235 = vpack.c.b16 %v3227, %v3225
    %v3236 = vpack.c.b16 %v3228, %v3226
    %v3246 = vsel %vm84, %v3181, 0
    %v3249 = vsel %vm84, %v3182, 0
    %3251 = vmatprep.subr.bf16.mxu0 %v3230
    %3252 = vmatpush1.bf16.msra.mxu0 %v3229
    %3253 = vmatprep.subr.bf16.mxu0 %v3232
    %3254 = vmatpush1.bf16.msra.mxu0 %v3231
    %3255 = vmatprep.subr.bf16.mxu0 %v3234
    %3256 = vmatpush1.bf16.msra.mxu0 %v3233
    %3257 = vmatprep.subr.bf16.mxu0 %v3236
    %3258 = vmatpush1.bf16.msra.mxu0 %v3235
    %3259 = vmatprep.subr.bf16.mxu0 0
    %3260 = vmatpush1.bf16.msra.mxu0 0
    %3261 = vmatprep.subr.bf16.mxu0 0
    %3262 = vmatpush1.bf16.msra.mxu0 0
    %3263 = vmatprep.subr.bf16.mxu0 0
    %3264 = vmatpush1.bf16.msra.mxu0 0
    %3265 = vmatprep.subr.bf16.mxu0 0
    %3266 = vmatpush1.bf16.msra.mxu0 0
    %3267 = vmatprep.subr.bf16.mxu0 0
    %3268 = vmatpush1.bf16.msra.mxu0 0
    %3269 = vmatprep.subr.bf16.mxu0 0
    %3270 = vmatpush1.bf16.msra.mxu0 0
    %3271 = vmatprep.subr.bf16.mxu0 0
    %3272 = vmatpush1.bf16.msra.mxu0 0
    %3273 = vmatprep.subr.bf16.mxu0 0
    %3274 = vmatpush1.bf16.msra.mxu0 0
    %3275 = vmatprep.subr.bf16.mxu0 0
    %3276 = vmatpush1.bf16.msra.mxu0 0
    %3277 = vmatprep.subr.bf16.mxu0 0
    %3278 = vmatpush1.bf16.msra.mxu0 0
    %3279 = vmatprep.subr.bf16.mxu0 0
    %3280 = vmatpush1.bf16.msra.mxu0 0
    %3281 = vmatprep.subr.bf16.mxu0 0
    %3282 = vmatpush1.bf16.msra.mxu0 0
    %3283 = vmatprep.mubr.bf16.mxu0 0
    %3284 = vmatmul.mubr.bf16.gmra.mrb[0].mxu0 %v3246
    %v3285 = vpop.f32.mrb[0].mxu0
    %v3286 = vadd.f32 %v3198, %v3285
    %v3287 = vpop.f32.mrb[0].mxu0
    %v3288 = vadd.f32 %v3202, %v3287
    %v3289 = vpop.f32.mrb[0].mxu0
    %v3290 = vadd.f32 %v3198, %v3289
    %v3291 = vpop.f32.mrb[0].mxu0
    %v3292 = vadd.f32 %v3202, %v3291
    %3293 = vmatprep.mubr.bf16.mxu0 0
    %3294 = vmatmul.mubr.bf16.gmra.mrb[0].mxu0 %v3249
    %v3295 = vpop.f32.mrb[0].mxu0
    %v3296 = vadd.f32 %v3198, %v3295
    %v3297 = vpop.f32.mrb[0].mxu0
    %v3298 = vadd.f32 %v3202, %v3297
    %v3299 = vpop.f32.mrb[0].mxu0
    %v3300 = vadd.f32 %v3198, %v3299
    %v3301 = vpop.f32.mrb[0].mxu0
    %v3302 = vadd.f32 %v3202, %v3301
    %3303 = vdwg.mxu0
    %v3304 = vmax.f32 %v3286, 0.0
    %v3305 = vmax.f32 %v3288, 0.0
    %v3306 = vmax.f32 %v3290, 0.0
    %v3307 = vmax.f32 %v3292, 0.0
    %v3308 = vmax.f32 %v3296, 0.0
    %v3309 = vmax.f32 %v3298, 0.0
    %v3310 = vmax.f32 %v3300, 0.0
    %v3311 = vmax.f32 %v3302, 0.0
    %v3312 = vpack.c.bf16 %v3306, %v3304
    %v3313 = vpack.c.bf16 %v3307, %v3305
    %v3314 = vpack.c.bf16 %v3310, %v3308
    %v3315 = vpack.c.bf16 %v3311, %v3309
    %s3316 = scalar_lea.vmem %s10, 128
    %v3317 = vld [vmem:[%s3316] sm:$0xf]
    %v3318 = vld [vmem:[%s3316 + $0x4] sm:$0xf]
    %v3319 = vld [vmem:[%s3316 + $0x8] sm:$0xf]
    %v3320 = vld [vmem:[%s3316 + $0xc] sm:$0xf]
    %v3321 = vld [vmem:[%s3316 + $0x10] sm:$0xf]
    %v3322 = vld [vmem:[%s3316 + $0x14] sm:$0xf]
    %v3323 = vld [vmem:[%s3316 + $0x18] sm:$0xf]
    %v3324 = vld [vmem:[%s3316 + $0x1c] sm:$0xf]
    %v3325 = vld [vmem:[%s3316 + $0x20] sm:$0xf]
    %v3326 = vld [vmem:[%s3316 + $0x24] sm:$0xf]
    %v3327 = vld [vmem:[%s3316 + $0x28] sm:$0xf]
    %v3328 = vld [vmem:[%s3316 + $0x2c] sm:$0xf]
    %v3329 = vld [vmem:[%s3316 + $0x30] sm:$0xf]
    %v3330 = vld [vmem:[%s3316 + $0x34] sm:$0xf]
    %v3331 = vld [vmem:[%s3316 + $0x38] sm:$0xf]
    %v3332 = vld [vmem:[%s3316 + $0x3c] sm:$0xf]
    %v3333 = vld [vmem:[%s3316 + $0x40] sm:$0xf]
    %v3334 = vld [vmem:[%s3316 + $0x44] sm:$0xf]
    %v3335 = vld [vmem:[%s3316 + $0x48] sm:$0xf]
    %v3336 = vld [vmem:[%s3316 + $0x4c] sm:$0xf]
    %v3337 = vld [vmem:[%s3316 + $0x50] sm:$0xf]
    %v3338 = vld [vmem:[%s3316 + $0x54] sm:$0xf]
    %v3339 = vld [vmem:[%s3316 + $0x58] sm:$0xf]
    %v3340 = vld [vmem:[%s3316 + $0x5c] sm:$0xf]
    %v3341 = vld [vmem:[%s3316 + $0x60] sm:$0xf]
    %v3342 = vld [vmem:[%s3316 + $0x64] sm:$0xf]
    %v3343 = vld [vmem:[%s3316 + $0x68] sm:$0xf]
    %v3344 = vld [vmem:[%s3316 + $0x6c] sm:$0xf]
    %v3345 = vld [vmem:[%s3316 + $0x70] sm:$0xf]
    %v3346 = vld [vmem:[%s3316 + $0x74] sm:$0xf]
    %v3347 = vld [vmem:[%s3316 + $0x78] sm:$0xf]
    %v3348 = vld [vmem:[%s3316 + $0x7c] sm:$0xf]
    %s3349 = scalar_lea.vmem %s11, 1
    %v3350 = vld [vmem:[%s3349] sm:$0x1]
    %v3352 = vlaneseq
    %v3353 = vshrl.u32 %v3352, 7
    %v3354 = vsub.s32 0, %v3353
    %v3355 = vrot.slane %v3350, %v3354
    %v3389 = vunpack.c.l.b16 %v3317
    %v3390 = vunpack.c.l.b16 %v3318
    %v3391 = vunpack.c.l.b16 %v3319
    %v3392 = vunpack.c.l.b16 %v3320
    %v3393 = vunpack.c.l.b16 %v3321
    %v3394 = vunpack.c.l.b16 %v3322
    %v3395 = vunpack.c.l.b16 %v3323
    %v3396 = vunpack.c.l.b16 %v3324
    %v3397 = vunpack.c.l.b16 %v3325
    %v3398 = vunpack.c.l.b16 %v3326
    %v3399 = vunpack.c.l.b16 %v3327
    %v3400 = vunpack.c.l.b16 %v3328
    %v3401 = vunpack.c.l.b16 %v3329
    %v3402 = vunpack.c.l.b16 %v3330
    %v3403 = vunpack.c.l.b16 %v3331
    %v3404 = vunpack.c.l.b16 %v3332
    %v3405 = vunpack.c.l.b16 %v3333
    %v3406 = vunpack.c.l.b16 %v3334
    %v3407 = vunpack.c.l.b16 %v3335
    %v3408 = vunpack.c.l.b16 %v3336
    %v3409 = vunpack.c.l.b16 %v3337
    %v3410 = vunpack.c.l.b16 %v3338
    %v3411 = vunpack.c.l.b16 %v3339
    %v3412 = vunpack.c.l.b16 %v3340
    %v3413 = vunpack.c.l.b16 %v3341
    %v3414 = vunpack.c.l.b16 %v3342
    %v3415 = vunpack.c.l.b16 %v3343
    %v3416 = vunpack.c.l.b16 %v3344
    %v3417 = vunpack.c.l.b16 %v3345
    %v3418 = vunpack.c.l.b16 %v3346
    %v3419 = vunpack.c.l.b16 %v3347
    %v3420 = vunpack.c.l.b16 %v3348
    %v3421 = vpack.c.b16 %v3390, %v3389
    %v3422 = vpack.c.b16 %v3392, %v3391
    %v3423 = vpack.c.b16 %v3394, %v3393
    %v3424 = vpack.c.b16 %v3396, %v3395
    %v3425 = vpack.c.b16 %v3398, %v3397
    %v3426 = vpack.c.b16 %v3400, %v3399
    %v3427 = vpack.c.b16 %v3402, %v3401
    %v3428 = vpack.c.b16 %v3404, %v3403
    %v3429 = vpack.c.b16 %v3406, %v3405
    %v3430 = vpack.c.b16 %v3408, %v3407
    %v3431 = vpack.c.b16 %v3410, %v3409
    %v3432 = vpack.c.b16 %v3412, %v3411
    %v3433 = vpack.c.b16 %v3414, %v3413
    %v3434 = vpack.c.b16 %v3416, %v3415
    %v3435 = vpack.c.b16 %v3418, %v3417
    %v3436 = vpack.c.b16 %v3420, %v3419
    %3453 = vmatprep.subr.bf16.mxu0 0
    %3454 = vmatpush1.bf16.msra.mxu0 %v3421
    %3455 = vmatprep.subr.bf16.mxu0 0
    %3456 = vmatpush1.bf16.msra.mxu0 %v3422
    %3457 = vmatprep.subr.bf16.mxu0 0
    %3458 = vmatpush1.bf16.msra.mxu0 %v3423
    %3459 = vmatprep.subr.bf16.mxu0 0
    %3460 = vmatpush1.bf16.msra.mxu0 %v3424
    %3461 = vmatprep.subr.bf16.mxu0 0
    %3462 = vmatpush1.bf16.msra.mxu0 %v3425
    %3463 = vmatprep.subr.bf16.mxu0 0
    %3464 = vmatpush1.bf16.msra.mxu0 %v3426
    %3465 = vmatprep.subr.bf16.mxu0 0
    %3466 = vmatpush1.bf16.msra.mxu0 %v3427
    %3467 = vmatprep.subr.bf16.mxu0 0
    %3468 = vmatpush1.bf16.msra.mxu0 %v3428
    %3469 = vmatprep.subr.bf16.mxu0 0
    %3470 = vmatpush1.bf16.msra.mxu0 %v3429
    %3471 = vmatprep.subr.bf16.mxu0 0
    %3472 = vmatpush1.bf16.msra.mxu0 %v3430
    %3473 = vmatprep.subr.bf16.mxu0 0
    %3474 = vmatpush1.bf16.msra.mxu0 %v3431
    %3475 = vmatprep.subr.bf16.mxu0 0
    %3476 = vmatpush1.bf16.msra.mxu0 %v3432
    %3477 = vmatprep.subr.bf16.mxu0 0
    %3478 = vmatpush1.bf16.msra.mxu0 %v3433
    %3479 = vmatprep.subr.bf16.mxu0 0
    %3480 = vmatpush1.bf16.msra.mxu0 %v3434
    %3481 = vmatprep.subr.bf16.mxu0 0
    %3482 = vmatpush1.bf16.msra.mxu0 %v3435
    %3483 = vmatprep.subr.bf16.mxu0 0
    %3484 = vmatpush1.bf16.msra.mxu0 %v3436
    %3485 = vmatprep.mubr.bf16.mxu0 %v3313
    %3486 = vmatmul.mubr.bf16.gmra.mrb[0].mxu0 %v3312
    %v3487 = vpop.f32.mrb[0].mxu0
    %v3488 = vadd.f32 %v3355, %v3487
    %v3489 = vpop.f32.mrb[0].mxu0
    %v3490 = vpop.f32.mrb[0].mxu0
    %v3491 = vadd.f32 %v3355, %v3490
    %v3492 = vpop.f32.mrb[0].mxu0
    %3493 = vmatprep.mubr.bf16.mxu0 %v3315
    %3494 = vmatmul.mubr.bf16.gmra.mrb[0].mxu0 %v3314
    %v3495 = vpop.f32.mrb[0].mxu0
    %v3496 = vadd.f32 %v3355, %v3495
    %v3497 = vpop.f32.mrb[0].mxu0
    %v3498 = vpop.f32.mrb[0].mxu0
    %v3499 = vadd.f32 %v3355, %v3498
    %v3500 = vpop.f32.mrb[0].mxu0
    %3501 = vdwg.mxu0
    %v3502 = vadd.f32 %v3101, %v3488
    %v3503 = vadd.f32 %v3102, %v3491
    %v3504 = vadd.f32 %v3103, %v3496
    %v3505 = vadd.f32 %v3104, %v3499
    %v3506 = vld [vmem:[%s12] sm:$0x1]
    %v3507 = vld [vmem:[%s13] sm:$0x1]
    %v3508 = vsel %vm84, %v3502, 0.0
    %3509 = vadd.xlane.f32.xlu0 %v3508
    %v3510 = vpop.xlane.xlu0 %3509
    %v3511 = vsel %vm84, %v3503, 0.0
    %3512 = vadd.xlane.f32.xlu0 %v3511
    %v3513 = vpop.xlane.xlu0 %3512
    %v3514 = vsel %vm84, %v3504, 0.0
    %3515 = vadd.xlane.f32.xlu0 %v3514
    %v3516 = vpop.xlane.xlu0 %3515
    %v3517 = vsel %vm84, %v3505, 0.0
    %3518 = vadd.xlane.f32.xlu0 %v3517
    %v3519 = vpop.xlane.xlu0 %3518
    %v3520 = vmul.f32 %v3510, %v97
    %v3521 = vmul.f32 %v3513, %v97
    %v3522 = vmul.f32 %v3516, %v97
    %v3523 = vmul.f32 %v3519, %v97
    %v3524 = vsub.f32 %v3502, %v3520
    %v3525 = vsub.f32 %v3503, %v3521
    %v3526 = vsub.f32 %v3504, %v3522
    %v3527 = vsub.f32 %v3505, %v3523
    %v3528 = vmul.f32 %v3524, %v3524
    %v3529 = vmul.f32 %v3525, %v3525
    %v3530 = vmul.f32 %v3526, %v3526
    %v3531 = vmul.f32 %v3527, %v3527
    %v3532 = vsel %vm84, %v3528, 0.0
    %3533 = vadd.xlane.f32.xlu0 %v3532
    %v3534 = vpop.xlane.xlu0 %3533
    %v3535 = vsel %vm84, %v3529, 0.0
    %3536 = vadd.xlane.f32.xlu0 %v3535
    %v3537 = vpop.xlane.xlu0 %3536
    %v3538 = vsel %vm84, %v3530, 0.0
    %3539 = vadd.xlane.f32.xlu0 %v3538
    %v3540 = vpop.xlane.xlu0 %3539
    %v3541 = vsel %vm84, %v3531, 0.0
    %3542 = vadd.xlane.f32.xlu0 %v3541
    %v3543 = vpop.xlane.xlu0 %3542
    %v3544 = vmul.f32 %v3534, %v97
    %v3545 = vmul.f32 %v3537, %v97
    %v3546 = vmul.f32 %v3540, %v97
    %v3547 = vmul.f32 %v3543, %v97
    %v3548 = vadd.f32 %v3544, 1e-05
    %v3549 = vadd.f32 %v3545, 1e-05
    %v3550 = vadd.f32 %v3546, 1e-05
    %v3551 = vadd.f32 %v3547, 1e-05
    %v3552 = vrsqrt.pop %v3548
    %v3553 = vrsqrt.pop %v3549
    %v3554 = vrsqrt.pop %v3550
    %v3555 = vrsqrt.pop %v3551
    %v3556 = vmul.f32 %v3524, %v3552
    %v3557 = vmul.f32 %v3525, %v3553
    %v3558 = vmul.f32 %v3526, %v3554
    %v3559 = vmul.f32 %v3527, %v3555
    %v3561 = vlaneseq
    %v3562 = vshrl.u32 %v3561, 7
    %v3563 = vsub.s32 0, %v3562
    %v3564 = vrot.slane %v3506, %v3563
    %v3566 = vmul.f32 %v3556, %v3564
    %v3567 = vmul.f32 %v3557, %v3564
    %v3568 = vmul.f32 %v3558, %v3564
    %v3569 = vmul.f32 %v3559, %v3564
    %v3571 = vlaneseq
    %v3572 = vshrl.u32 %v3571, 7
    %v3573 = vsub.s32 0, %v3572
    %v3574 = vrot.slane %v3507, %v3573
    %v3576 = vadd.f32 %v3566, %v3574
    %v3577 = vadd.f32 %v3567, %v3574
    %v3578 = vadd.f32 %v3568, %v3574
    %v3579 = vadd.f32 %v3569, %v3574
    %v3580 = vpack.c.bf16 %v3577, %v3576
    %v3581 = vpack.c.bf16 %v3579, %v3578
    %v3582 = vld [vmem:[%s14] sm:$0xf]
    %v3583 = vld [vmem:[%s14 + $0x4] sm:$0xf]
    %v3584 = vld [vmem:[%s14 + $0x8] sm:$0xf]
    %v3585 = vld [vmem:[%s14 + $0xc] sm:$0xf]
    %v3586 = vld [vmem:[%s14 + $0x10] sm:$0xf]
    %v3587 = vld [vmem:[%s14 + $0x14] sm:$0xf]
    %v3588 = vld [vmem:[%s14 + $0x18] sm:$0xf]
    %v3589 = vld [vmem:[%s14 + $0x1c] sm:$0xf]
    %v3590 = vld [vmem:[%s15] sm:$0x1]
    %v3592 = vlaneseq
    %v3593 = vshrl.u32 %v3592, 7
    %v3594 = vsub.s32 0, %v3593
    %v3595 = vrot.slane %v3590, %v3594
    %v3605 = vunpack.c.l.b16 %v3582
    %v3606 = vunpack.c.l.b16 %v3583
    %v3607 = vunpack.c.l.b16 %v3584
    %v3608 = vunpack.c.l.b16 %v3585
    %v3609 = vunpack.c.l.b16 %v3586
    %v3610 = vunpack.c.l.b16 %v3587
    %v3611 = vunpack.c.l.b16 %v3588
    %v3612 = vunpack.c.l.b16 %v3589
    %v3613 = vpack.c.b16 %v3606, %v3605
    %v3614 = vpack.c.b16 %v3608, %v3607
    %v3615 = vpack.c.b16 %v3610, %v3609
    %v3616 = vpack.c.b16 %v3612, %v3611
    %v3622 = vsel %vm84, %v3580, 0
    %v3625 = vsel %vm84, %v3581, 0
    %3627 = vmatprep.subr.bf16.mxu0 0
    %3628 = vmatpush1.bf16.msra.mxu0 %v3613
    %3629 = vmatprep.subr.bf16.mxu0 0
    %3630 = vmatpush1.bf16.msra.mxu0 %v3614
    %3631 = vmatprep.subr.bf16.mxu0 0
    %3632 = vmatpush1.bf16.msra.mxu0 %v3615
    %3633 = vmatprep.subr.bf16.mxu0 0
    %3634 = vmatpush1.bf16.msra.mxu0 %v3616
    %3635 = vmatprep.subr.bf16.mxu0 0
    %3636 = vmatpush1.bf16.msra.mxu0 0
    %3637 = vmatprep.subr.bf16.mxu0 0
    %3638 = vmatpush1.bf16.msra.mxu0 0
    %3639 = vmatprep.subr.bf16.mxu0 0
    %3640 = vmatpush1.bf16.msra.mxu0 0
    %3641 = vmatprep.subr.bf16.mxu0 0
    %3642 = vmatpush1.bf16.msra.mxu0 0
    %3643 = vmatprep.subr.bf16.mxu0 0
    %3644 = vmatpush1.bf16.msra.mxu0 0
    %3645 = vmatprep.subr.bf16.mxu0 0
    %3646 = vmatpush1.bf16.msra.mxu0 0
    %3647 = vmatprep.subr.bf16.mxu0 0
    %3648 = vmatpush1.bf16.msra.mxu0 0
    %3649 = vmatprep.subr.bf16.mxu0 0
    %3650 = vmatpush1.bf16.msra.mxu0 0
    %3651 = vmatprep.subr.bf16.mxu0 0
    %3652 = vmatpush1.bf16.msra.mxu0 0
    %3653 = vmatprep.subr.bf16.mxu0 0
    %3654 = vmatpush1.bf16.msra.mxu0 0
    %3655 = vmatprep.subr.bf16.mxu0 0
    %3656 = vmatpush1.bf16.msra.mxu0 0
    %3657 = vmatprep.subr.bf16.mxu0 0
    %3658 = vmatpush1.bf16.msra.mxu0 0
    %3659 = vmatprep.mubr.bf16.mxu0 0
    %3660 = vmatmul.mubr.bf16.gmra.mrb[0].mxu0 %v3622
    %v3661 = vpop.f32.mrb[0].mxu0
    %v3662 = vadd.f32 %v3595, %v3661
    %v3663 = vpop.f32.mrb[0].mxu0
    %v3664 = vpop.f32.mrb[0].mxu0
    %v3665 = vadd.f32 %v3595, %v3664
    %v3666 = vpop.f32.mrb[0].mxu0
    %3667 = vmatprep.mubr.bf16.mxu0 0
    %3668 = vmatmul.mubr.bf16.gmra.mrb[0].mxu0 %v3625
    %v3669 = vpop.f32.mrb[0].mxu0
    %v3670 = vadd.f32 %v3595, %v3669
    %v3671 = vpop.f32.mrb[0].mxu0
    %v3672 = vpop.f32.mrb[0].mxu0
    %v3673 = vadd.f32 %v3595, %v3672
    %v3674 = vpop.f32.mrb[0].mxu0
    %3675 = vdwg.mxu0
    %3676 = vst [vmem:[#allocation5] sm:$0xff] %v3662
    %3677 = vst [vmem:[#allocation5 + $0x8] sm:$0xff] %v3665
    %3678 = vst [vmem:[#allocation5 + $0x10] sm:$0xff] %v3670
    %3679 = vst [vmem:[#allocation5 + $0x18] sm:$0xff] %v3673
    // Predicated region
    $region70: #{tpu_custom_call.1} parent=1 // pred_check
      _
    $region71: #{tpu_custom_call.1} parent=1 // pred_check_branch
      %3681 = sbr.rel (0) target = $region73
    $region72: #{tpu_custom_call.1} parent=1 // pred_region
      %s3683 = ssub.s32 512, 512
      %3684 = vsyncadd [#allocation4], %s3683
      %s3685 = sshll.u32 [#allocation5], 4
      %s3686 = int_to_ptr.vmem [resolvable:$true] %s3685
      %3691 = dma.vmem_to_hbm [thread:$0]  %s3686, 512, %s16, [#allocation4], 128, 128, 8
    $region73: #{tpu_custom_call.1} parent=1 // pred_fallthru
      _
    // Predicated region
    $region74: #{tpu_custom_call.1} parent=1 // pred_check
      _
    $region75: #{tpu_custom_call.1} parent=1 // pred_check_branch
      %3693 = sbr.rel (0) target = $region77
    $region76: #{tpu_custom_call.1} parent=1 // pred_region
      %3694 = dma.done [#allocation4], 512
    $region77: #{tpu_custom_call.1} parent=1 // pred_fallthru
      _
    %3695 = vsyncpa [#allocation3], 1
    %3696 = vsyncpa [#allocation4], 1

</llo_original>
